<compile_context>
chip_gen: v7x
topology: tpu7x:2x2x1
jax: 0.10.0
libtpu: 0.0.40
codegen_flags: <defaults>
</compile_context>

<pallas_src>
import jax
import jax.numpy as jnp
from jax.experimental import pallas as pl
from jax.experimental.pallas import tpu as pltpu

# ---------------- model dims (as in the PyTorch module) ----------------
C, H, W = 512, 4, 4          # backbone output: (N, 512, 4, 4)
K = C * H * W                # 8192  (Flatten)
FEAT_DIM = 512               # Linear(512*4*4, 512)
NUM_CLASSES = 1000           # fc_layer
NUM_CLASSES_PAD = 1024       # padded to a multiple of 128 (lane-dense)
EPS = 1e-5                   # PyTorch BatchNorm default eps

TK = 4096                    # reduction tile over K       -> 2 reduction steps
TF = 256                     # column tile over FEAT_DIM   -> 2 parallel blocks


# ---------------- Pallas kernels ----------------
def feat_kernel(x_ref, w_ref, b_ref, feat_ref):
    """Grid: (FEAT_DIM//TF [parallel], K//TK [reduction, arbitrary]).

    feat[:, jTF:(j+1)TF] = x @ W_eff[:, jTF:(j+1)TF] + b_eff[jTF:(j+1)TF]
    with BN2d / BN1d already folded into (W_eff, b_eff). The feat output
    block is resident across the reduction axis, so we accumulate into it
    directly (init with the bias on the first reduction step).
    """
    k = pl.program_id(1)

    @pl.when(k == 0)
    def _():
        feat_ref[...] = jnp.broadcast_to(b_ref[...], feat_ref.shape)

    feat_ref[...] += jnp.dot(x_ref[...].astype(jnp.bfloat16), w_ref[...],
                             preferred_element_type=jnp.float32)


def fc_kernel(feat_ref, w2_ref, b2_ref, out_ref):
    """fc_layer: out = feat @ W2^T + b2 (class dim padded to 1024)."""
    out_ref[...] = (jnp.dot(feat_ref[...], w2_ref[...],
                            preferred_element_type=jnp.float32)
                    + b2_ref[...])


def ir152_head(x_flat, w_eff, b_eff, w2_pad, b2_pad):
    """x_flat: (N, 8192) f32. Returns (feat (N,512) f32, out (N,1000) f32)."""
    N = x_flat.shape[0]

    feat = pl.pallas_call(
        feat_kernel,
        out_shape=jax.ShapeDtypeStruct((N, FEAT_DIM), jnp.float32),
        grid_spec=pltpu.PrefetchScalarGridSpec(
            num_scalar_prefetch=0,
            grid=(FEAT_DIM // TF, K // TK),
            in_specs=[
                pl.BlockSpec((N, TK),  lambda j, k: (0, k)),   # x chunk
                pl.BlockSpec((TK, TF), lambda j, k: (k, j)),   # W_eff (bf16)
                pl.BlockSpec((1, TF),  lambda j, k: (0, j)),   # b_eff
            ],
            out_specs=pl.BlockSpec((N, TF), lambda j, k: (0, j)),
        ),
        compiler_params=pltpu.CompilerParams(
            dimension_semantics=("parallel", "arbitrary"),
            vmem_limit_bytes=32 << 20,
        ),
    )(x_flat, w_eff, b_eff)

    out_pad = pl.pallas_call(
        fc_kernel,
        out_shape=jax.ShapeDtypeStruct((N, NUM_CLASSES_PAD), jnp.float32),
        grid_spec=pltpu.PrefetchScalarGridSpec(
            num_scalar_prefetch=0,
            grid=(1,),
            in_specs=[
                pl.BlockSpec((N, FEAT_DIM),                lambda i: (0, 0)),
                pl.BlockSpec((FEAT_DIM, NUM_CLASSES_PAD),  lambda i: (0, 0)),
                pl.BlockSpec((1, NUM_CLASSES_PAD),         lambda i: (0, 0)),
            ],
            out_specs=pl.BlockSpec((N, NUM_CLASSES_PAD), lambda i: (0, 0)),
        ),
        compiler_params=pltpu.CompilerParams(
            dimension_semantics=("arbitrary",),
            vmem_limit_bytes=32 << 20,
        ),
    )(feat, w2_pad, b2_pad)

    return feat, out_pad[:, :NUM_CLASSES]


# ---------------- parameter setup (deterministic, in-script) ----------------
def make_params(key):
    ks = jax.random.split(key, 12)
    u = lambda k, shape, lo, hi: jax.random.uniform(k, shape, jnp.float32, lo, hi)

    # BatchNorm2d(512): gamma, beta, running_mean, running_var
    bn2_g = u(ks[0], (C,), 0.9, 1.1)
    bn2_b = u(ks[1], (C,), -0.1, 0.1)
    bn2_m = u(ks[2], (C,), -0.2, 0.2)
    bn2_v = u(ks[3], (C,), 0.5, 1.5)

    # Linear(8192, 512): PyTorch stores weight as (out, in)
    w1 = u(ks[4], (FEAT_DIM, K), -0.02, 0.02)
    b1 = u(ks[5], (FEAT_DIM,), -0.02, 0.02)

    # BatchNorm1d(512)
    bn1_g = u(ks[6], (FEAT_DIM,), 0.9, 1.1)
    bn1_b = u(ks[7], (FEAT_DIM,), -0.1, 0.1)
    bn1_m = u(ks[8], (FEAT_DIM,), -0.2, 0.2)
    bn1_v = u(ks[9], (FEAT_DIM,), 0.5, 1.5)

    # fc_layer Linear(512, 1000)
    w2 = u(ks[10], (NUM_CLASSES, FEAT_DIM), -0.04, 0.04)
    b2 = u(ks[11], (NUM_CLASSES,), -0.04, 0.04)

    # --- fold eval-mode BN into per-feature affine scale/shift ---
    s2c = bn2_g / jnp.sqrt(bn2_v + EPS)            # BN2d, per channel
    t2c = bn2_b - bn2_m * s2c
    s2 = jnp.repeat(s2c, H * W)                    # NCHW flatten order -> (K,)
    t2 = jnp.repeat(t2c, H * W)

    s1 = bn1_g / jnp.sqrt(bn1_v + EPS)             # BN1d
    t1 = bn1_b - bn1_m * s1

    # --- fold both BNs into the big Linear:  feat = x @ W_eff + b_eff ---
    w1t = w1.T                                     # (K, 512)
    w_eff = (s2[:, None] * w1t) * s1[None, :]      # (K, 512)
    b_eff = (t2 @ w1t + b1) * s1 + t1              # (512,)

    # --- pad fc layer class dim 1000 -> 1024 (lane-dense stores) ---
    w2t = w2.T                                     # (512, 1000)
    w2_pad = jnp.zeros((FEAT_DIM, NUM_CLASSES_PAD), jnp.float32)
    w2_pad = w2_pad.at[:, :NUM_CLASSES].set(w2t)
    b2_pad = jnp.zeros((1, NUM_CLASSES_PAD), jnp.float32)
    b2_pad = b2_pad.at[:, :NUM_CLASSES].set(b2)

    unfolded = dict(s2=s2, t2=t2, w1t=w1t, b1=b1, s1=s1, t1=t1, w2t=w2t, b2=b2)
    return dict(
        w_eff=w_eff.astype(jnp.bfloat16),          # streamed in bf16 (halves HBM)
        b_eff=b_eff.reshape(1, FEAT_DIM),
        w2_pad=w2_pad,
        b2_pad=b2_pad,
        _unfolded=unfolded,                        # kept only for the reference
    )


def ir152_forward(x_nchw, p):
    # Dropout is identity in eval; Flatten == PyTorch .view(N, -1) on NCHW.
    # NOTE: per-call cost is dominated by streaming W_eff; real deployments
    # should batch many rows per call to amortize it.
    N = x_nchw.shape[0]
    x_flat = x_nchw.reshape(N, -1).astype(jnp.float32)
    return ir152_head(x_flat, p["w_eff"], p["b_eff"], p["w2_pad"], p["b2_pad"])


def ir152_reference(x_nchw, p):
    """Unfused f32 reference matching the PyTorch module (eval mode)."""
    q = p["_unfolded"]
    N = x_nchw.shape[0]
    x_flat = x_nchw.reshape(N, -1).astype(jnp.float32)
    xh = x_flat * q["s2"][None, :] + q["t2"][None, :]      # BatchNorm2d
    h = xh @ q["w1t"] + q["b1"][None, :]                   # Linear(8192, 512)
    feat = h * q["s1"][None, :] + q["t1"][None, :]         # BatchNorm1d
    out = feat @ q["w2t"] + q["b2"][None, :]               # fc Linear(512, 1000)
    return feat, out


if __name__ == "__main__":
    key = jax.random.PRNGKey(0)
    k_x, k_p = jax.random.split(key)

    N = 2
    # backbone output feature map (stand-in for evolve.IR_152_64(x)): (N, 512, 4, 4)
    x = jax.random.normal(k_x, (N, C, H, W), jnp.float32)
    params = make_params(k_p)

    feat, out = ir152_forward(x, params)
    jax.block_until_ready((feat, out))

    feat_ref, out_ref = ir152_reference(x, params)
    assert feat.shape == (N, FEAT_DIM) and out.shape == (N, NUM_CLASSES)
    # bf16 weights / activations on the MXU -> slightly looser tolerance.
    assert jnp.allclose(feat, feat_ref, atol=2e-2, rtol=2e-2)
    assert jnp.allclose(out, out_ref, atol=2e-2, rtol=2e-2)

    print("KERNEL_OK")
</pallas_src>

<mosaic_0001>
module attributes {stable_mosaic.version = 11 : i64} {
  func.func @feat_kernel(%arg0: i32, %arg1: i32, %arg2: memref<2x4096xf32, #tpu.memory_space<vmem>>, %arg3: memref<4096x256xbf16, #tpu.memory_space<vmem>>, %arg4: memref<1x256xf32, #tpu.memory_space<vmem>>, %arg5: memref<2x256xf32, #tpu.memory_space<vmem>>) attributes {dimension_semantics = [#tpu.dimension_semantics<parallel>, #tpu.dimension_semantics<arbitrary>], iteration_bounds = array<i64: 2, 2>, scalar_prefetch = 0 : i64, scratch_operands = 0 : i64, tpu.core_type = #tpu.core_type<tc>, window_params = [{transform_indices = @transform_0, window_bounds = array<i64: 2, 4096>}, {transform_indices = @transform_1, window_bounds = array<i64: 4096, 256>}, {transform_indices = @transform_2, window_bounds = array<i64: 1, 256>}, {transform_indices = @transform_3, window_bounds = array<i64: 2, 256>}]} {
    %c0_i32 = arith.constant 0 : i32
    %0 = arith.cmpi eq, %arg1, %c0_i32 : i32
    %1 = arith.extui %0 : i1 to i32
    %c0_i32_0 = arith.constant 0 : i32
    %2 = arith.cmpi ne, %1, %c0_i32_0 : i32
    scf.if %2 {
      %c0_8 = arith.constant 0 : index
      %c0_9 = arith.constant 0 : index
      %10 = vector.load %arg4[%c0_8, %c0_9] : memref<1x256xf32, #tpu.memory_space<vmem>>, vector<1x256xf32>
      %11 = vector.shape_cast %10 : vector<1x256xf32> to vector<1x256xf32>
      %12 = vector.broadcast %11 : vector<1x256xf32> to vector<2x256xf32>
      %c0_10 = arith.constant 0 : index
      %c0_11 = arith.constant 0 : index
      %13 = vector.load %arg5[%c0_10, %c0_11] : memref<2x256xf32, #tpu.memory_space<vmem>>, vector<2x256xf32>
      tpu.vector_store %arg5[%c0_10, %c0_11], %12 {strides = array<i32>} : memref<2x256xf32, #tpu.memory_space<vmem>>, vector<2x256xf32>,
    } else {
    }
    %c0 = arith.constant 0 : index
    %c0_1 = arith.constant 0 : index
    %3 = vector.load %arg5[%c0, %c0_1] : memref<2x256xf32, #tpu.memory_space<vmem>>, vector<2x256xf32>
    %c0_2 = arith.constant 0 : index
    %c0_3 = arith.constant 0 : index
    %4 = vector.load %arg2[%c0_2, %c0_3] : memref<2x4096xf32, #tpu.memory_space<vmem>>, vector<2x4096xf32>
    %5 = arith.truncf %4 : vector<2x4096xf32> to vector<2x4096xbf16>
    %c0_4 = arith.constant 0 : index
    %c0_5 = arith.constant 0 : index
    %6 = vector.load %arg3[%c0_4, %c0_5] : memref<4096x256xbf16, #tpu.memory_space<vmem>>, vector<4096x256xbf16>
    %cst = arith.constant dense<0.000000e+00> : vector<2x256xf32>
    %7 = tpu.matmul %5, %6, %cst {dimension_numbers = #tpu.dot_dimension_numbers<[1], [0], [0], [1], [0, 0, 1, 1], [], []>} : vector<2x4096xbf16>, vector<4096x256xbf16>, vector<2x256xf32> -> vector<2x256xf32>
    %8 = arith.addf %3, %7 : vector<2x256xf32>
    %c0_6 = arith.constant 0 : index
    %c0_7 = arith.constant 0 : index
    %9 = vector.load %arg5[%c0_6, %c0_7] : memref<2x256xf32, #tpu.memory_space<vmem>>, vector<2x256xf32>
    tpu.vector_store %arg5[%c0_6, %c0_7], %8 {strides = array<i32>} : memref<2x256xf32, #tpu.memory_space<vmem>>, vector<2x256xf32>,
    return
  }
  func.func @transform_0(%arg0: i32, %arg1: i32) -> (i32, i32) {
    %c0_i32 = arith.constant 0 : i32
    %c0_i32_0 = arith.constant 0 : i32
    return %c0_i32, %arg1 : i32, i32
  }
  func.func @transform_1(%arg0: i32, %arg1: i32) -> (i32, i32) {
    %c0_i32 = arith.constant 0 : i32
    return %arg1, %arg0 : i32, i32
  }
  func.func @transform_2(%arg0: i32, %arg1: i32) -> (i32, i32) {
    %c0_i32 = arith.constant 0 : i32
    %c0_i32_0 = arith.constant 0 : i32
    return %c0_i32, %arg0 : i32, i32
  }
  func.func @transform_3(%arg0: i32, %arg1: i32) -> (i32, i32) {
    %c0_i32 = arith.constant 0 : i32
    %c0_i32_0 = arith.constant 0 : i32
    return %c0_i32, %arg0 : i32, i32
  }
}

</mosaic_0001>

<llo_original>
// kernel: tpu_custom_call.1
$region0: #{tpu_custom_call.1}
  #allocation0 [shape = 'u32[]', space=smem, size = 0x4, offset = 0x4, fixed_abs, tag = 'smem constant byte address 0x4 - core index']
  #allocation1 [shape = 'u32[144,128]{1,0:T(1,128)}', space=vmem, size = 0x12000, scoped, tag = 'internal scratch']
  %s0 = inlined_call_operand.hbm [shape: f32[2,8192], index: 0, kind: input, shape index: {}]
  %s1 = inlined_call_operand.hbm [shape: bf16[8192,512], index: 1, kind: input, shape index: {}]
  %s2 = inlined_call_operand.hbm [shape: f32[1,512], index: 2, kind: input, shape index: {}]
  %s3 = inlined_call_operand.hbm [shape: f32[2,512], index: 3, kind: output, shape index: {}]
  %s4 = sld [smem:[#allocation0]]
  $region61: #{tpu_custom_call.1} parent=0
    _
  %s6 = ssub.s32 1, %s4
  %s7 = scalar_select 0, %s6, %s4
  $region1: #{tpu_custom_call.1} parent=0
    #allocation2 [shape = 'u8[65536]{0}', space=vmem, size = 0x10000, scoped, tag = 'input window, operand 0']
    #allocation3 [shape = 's32[2]{0}', space=sflag, size = 0x8, scoped, tag = 'scoped memory for tpu_custom_call.1']
    #allocation4 [shape = 's32[2]{0}', space=sflag, size = 0x8, scoped, tag = 'scoped memory for tpu_custom_call.1']
    #allocation5 [shape = 'u8[4194304]{0}', space=vmem, size = 0x400000, scoped, tag = 'input window, operand 1']
    #allocation6 [shape = 's32[2]{0}', space=sflag, size = 0x8, scoped, tag = 'scoped memory for tpu_custom_call.1']
    #allocation7 [shape = 'u8[2048]{0}', space=vmem, size = 0x800, scoped, tag = 'input window, operand 2']
    #allocation8 [shape = 'u8[4096]{0}', space=vmem, size = 0x1000, scoped, tag = 'output window, operand 0']
    %8 = vsyncpa [#allocation3], 0
    %s9 = scalar_lea.sflag [#allocation3], 1
    %10 = vsyncpa %s9, 0
    %11 = vsyncpa [#allocation6], 0
    %s12 = scalar_lea.sflag [#allocation6], 1
    %13 = vsyncpa %s12, 0
    %14 = vsyncpa [#allocation4], 0
    %s15 = scalar_lea.sflag [#allocation4], 1
    %16 = vsyncpa %s15, 0
    loop: start=0, step=1, limit=6
    $region2: #{tpu_custom_call.1} parent=1 // loop_pre_header
      _
    $region3: #{tpu_custom_call.1} parent=1 // loop_header
      %s18 = sphi 0, %s22
      %p19 = scmp.ge.s32.totalorder %s18, 6
      %s25 = sphi 0, %s37
      %s26 = sphi 0, %s33
      %s27 = sphi 0, %s25
      %s28 = sphi 0, %s26
      %s29 = sphi 0, %s27
      %s30 = sphi 0, %s28
      %s40 = sphi 0, %s42
      %s43 = sphi 0, %s40
      %s44 = sphi 0, %s43
      %s60 = sphi 0, %s44
      %s68 = sphi 0, %s70
      %s71 = sphi 0, %s68
      %s72 = sphi 0, %s71
      %s88 = sphi 0, %s72
      %s94 = sphi 0, %s96
      %s97 = sphi 0, %s94
      %s98 = sphi 0, %s97
      %s114 = sphi 0, %s98
      %s120 = sphi 0, %s122
      %s123 = sphi 0, %s120
      %s124 = sphi 0, %s123
      %s140 = sphi 0, %s124
    $region4: #{tpu_custom_call.1} parent=1 // loop_header_branch
      %21 = sbr.rel (%p19) target = $region8
    $region5: #{tpu_custom_call.1} parent=1 // loop_body
      %s23 = ssub.s32 %s18, 1
      %s24 = ssub.s32 %s18, 2
      %s31 = sadd.s32 1, %s26
      %p32 = scmp.ge.s32.totalorder %s31, 2
      %s33 = scalar_select %p32, 0, %s31
      %s34 = sadd.s32 1, %s25
      %s35 = scalar_select %p32, %s34, %s25
      %p36 = scmp.ge.s32.totalorder %s35, 2
      %s37 = scalar_select %p36, 0, %s35
      %s38 = ssub.s32 %s26, %s33
      %p39 = scmp.eq.s32.totalorder %s38, 0
      %s41 = sadd.s32 %s40, 1
      %s42 = scalar_select %p39, %s40, %s41
      %p45 = pneg %p39
      %p46 = scmp.eq.s32.totalorder %s18, 3
      %p47 = por %p45, %p46
      %p48 = scmp.ne.s32.totalorder %s40, %s43
      %p49 = scmp.eq.s32.totalorder %s18, 0
      %p50 = por %p48, %p49
      %p51 = scmp.ne.s32.totalorder %s40, %s43
      %p52 = scmp.eq.s32.totalorder %s23, 3
      %p53 = por %p51, %p52
      %p54 = scmp.ne.s32.totalorder %s43, %s44
      %p55 = scmp.eq.s32.totalorder %s23, 0
      %p56 = por %p54, %p55
      %p57 = scmp.ne.s32.totalorder %s43, %s44
      %p58 = scmp.eq.s32.totalorder %s24, 3
      %p59 = por %p57, %p58
      %p61 = scmp.ne.s32.totalorder %s44, %s60
      %p62 = scmp.eq.s32.totalorder %s24, 0
      %p63 = por %p61, %p62
      %s64 = ssub.s32 %s26, %s33
      %s65 = ssub.s32 %s25, %s37
      %s66 = sor.u32 %s64, %s65
      %p67 = scmp.eq.s32.totalorder %s66, 0
      %s69 = sadd.s32 %s68, 1
      %s70 = scalar_select %p67, %s68, %s69
      %p73 = pneg %p67
      %p74 = scmp.eq.s32.totalorder %s18, 3
      %p75 = por %p73, %p74
      %p76 = scmp.ne.s32.totalorder %s68, %s71
      %p77 = scmp.eq.s32.totalorder %s18, 0
      %p78 = por %p76, %p77
      %p79 = scmp.ne.s32.totalorder %s68, %s71
      %p80 = scmp.eq.s32.totalorder %s23, 3
      %p81 = por %p79, %p80
      %p82 = scmp.ne.s32.totalorder %s71, %s72
      %p83 = scmp.eq.s32.totalorder %s23, 0
      %p84 = por %p82, %p83
      %p85 = scmp.ne.s32.totalorder %s71, %s72
      %p86 = scmp.eq.s32.totalorder %s24, 3
      %p87 = por %p85, %p86
      %p89 = scmp.ne.s32.totalorder %s72, %s88
      %p90 = scmp.eq.s32.totalorder %s24, 0
      %p91 = por %p89, %p90
      %s92 = ssub.s32 %s25, %s37
      %p93 = scmp.eq.s32.totalorder %s92, 0
      %s95 = sadd.s32 %s94, 1
      %s96 = scalar_select %p93, %s94, %s95
      %p99 = pneg %p93
      %p100 = scmp.eq.s32.totalorder %s18, 3
      %p101 = por %p99, %p100
      %p102 = scmp.ne.s32.totalorder %s94, %s97
      %p103 = scmp.eq.s32.totalorder %s18, 0
      %p104 = por %p102, %p103
      %p105 = scmp.ne.s32.totalorder %s94, %s97
      %p106 = scmp.eq.s32.totalorder %s23, 3
      %p107 = por %p105, %p106
      %p108 = scmp.ne.s32.totalorder %s97, %s98
      %p109 = scmp.eq.s32.totalorder %s23, 0
      %p110 = por %p108, %p109
      %p111 = scmp.ne.s32.totalorder %s97, %s98
      %p112 = scmp.eq.s32.totalorder %s24, 3
      %p113 = por %p111, %p112
      %p115 = scmp.ne.s32.totalorder %s98, %s114
      %p116 = scmp.eq.s32.totalorder %s24, 0
      %p117 = por %p115, %p116
      %s118 = ssub.s32 %s25, %s37
      %p119 = scmp.eq.s32.totalorder %s118, 0
      %s121 = sadd.s32 %s120, 1
      %s122 = scalar_select %p119, %s120, %s121
      %p125 = pneg %p119
      %p126 = scmp.eq.s32.totalorder %s18, 3
      %p127 = por %p125, %p126
      %p128 = scmp.ne.s32.totalorder %s120, %s123
      %p129 = scmp.eq.s32.totalorder %s18, 0
      %p130 = por %p128, %p129
      %p131 = scmp.ne.s32.totalorder %s120, %s123
      %p132 = scmp.eq.s32.totalorder %s23, 3
      %p133 = por %p131, %p132
      %p134 = scmp.ne.s32.totalorder %s123, %s124
      %p135 = scmp.eq.s32.totalorder %s23, 0
      %p136 = por %p134, %p135
      %p137 = scmp.ne.s32.totalorder %s123, %s124
      %p138 = scmp.eq.s32.totalorder %s24, 3
      %p139 = por %p137, %p138
      %p141 = scmp.ne.s32.totalorder %s124, %s140
      %p142 = scmp.eq.s32.totalorder %s24, 0
      %p143 = por %p141, %p142
      %p144 = scmp.le.s32.totalorder 1, %s18
      %p145 = scmp.lt.s32.totalorder %s18, 5
      %p146 = pnand %p144, %p145
      %p147 = pneg %p146
      // Predicated region
      $region9: #{tpu_custom_call.1} parent=5 // pred_check
        _
      $region10: #{tpu_custom_call.1} parent=5 // pred_check_branch
        %149 = sbr.rel (%p146) target = $region12
      $region11: #{tpu_custom_call.1} parent=5 // pred_region
        %s150 = ssub.s32 %s18, 1
      $region12: #{tpu_custom_call.1} parent=5 // pred_fallthru
        _
      %p151 = scmp.lt.s32.totalorder %s18, 4
      // Predicated region
      $region13: #{tpu_custom_call.1} parent=5 // pred_check
        %p152 = pneg %p151
      $region14: #{tpu_custom_call.1} parent=5 // pred_check_branch
        %154 = sbr.rel (%p152) target = $region16
      $region15: #{tpu_custom_call.1} parent=5 // pred_region
        // Predicated region
        $region17: #{tpu_custom_call.1} parent=15 // pred_check
          %p155 = pneg %p50
        $region18: #{tpu_custom_call.1} parent=15 // pred_check_branch
          %157 = sbr.rel (%p155) target = $region20
        $region19: #{tpu_custom_call.1} parent=15 // pred_region
          %s158 = sand.u32 %s40, 1
          %s159 = scalar_lea.sflag [#allocation3], %s158
          %s160 = sand.u32 %s40, 1
          %s161 = smul.addr %s160, 64
          %s162 = scalar_lea.vmem [#allocation2], %s161
          %s163 = smul.u32 32, %s26
          %s165 = ssub.s32 1024, 1024
          %166 = vsyncadd %s159, %s165
          %s167 = smul.addr %s163, 32
          %s168 = scalar_lea.hbm %s0, %s167
          %s170 = sshll.u32 %s162, 4
          %s171 = int_to_ptr.vmem [resolvable:$true] %s170
          %173 = dma.hbm_to_vmem [thread:$0]  %s168, 1024, %s171, %s159
        $region20: #{tpu_custom_call.1} parent=15 // pred_fallthru
          _
        // Predicated region
        $region21: #{tpu_custom_call.1} parent=15 // pred_check
          %p174 = pneg %p78
        $region22: #{tpu_custom_call.1} parent=15 // pred_check_branch
          %176 = sbr.rel (%p174) target = $region24
        $region23: #{tpu_custom_call.1} parent=15 // pred_region
          %s177 = sand.u32 %s18, 1
          %s178 = scalar_lea.sflag [#allocation6], %s177
          %s179 = sand.u32 %s68, 1
          %s180 = smul.addr %s179, 4096
          %s181 = scalar_lea.vmem [#allocation5], %s180
          %s182 = smul.u32 512, %s26
          %s183 = smul.u32 2, %s25
          %s185 = ssub.s32 65536, 65536
          %186 = vsyncadd %s178, %s185
          %s187 = smul.addr %s182, 4
          %s188 = sadd.s32 %s183, %s187
          %s189 = smul.addr %s188, 64
          %s190 = scalar_lea.hbm %s1, %s189
          %s191 = sshll.u32 %s181, 4
          %s192 = int_to_ptr.vmem [resolvable:$true] %s191
          %197 = dma.hbm_to_vmem [thread:$0]  %s190, 65536, %s192, %s178, 256, 128, 8
        $region24: #{tpu_custom_call.1} parent=15 // pred_fallthru
          _
        // Predicated region
        $region25: #{tpu_custom_call.1} parent=15 // pred_check
          %p198 = pneg %p104
        $region26: #{tpu_custom_call.1} parent=15 // pred_check_branch
          %200 = sbr.rel (%p198) target = $region28
        $region27: #{tpu_custom_call.1} parent=15 // pred_region
          %s201 = sand.u32 %s18, 1
          %s202 = scalar_lea.sflag [#allocation6], %s201
          %s203 = sand.u32 %s94, 1
          %s204 = smul.addr %s203, 2
          %s205 = scalar_lea.vmem [#allocation7], %s204
          %s206 = smul.u32 2, %s25
          %s208 = ssub.s32 32, 32
          %209 = vsyncadd %s202, %s208
          %s210 = smul.addr %s206, 16
          %s211 = scalar_lea.hbm %s2, %s210
          %s213 = sshll.u32 %s205, 4
          %s214 = int_to_ptr.vmem [resolvable:$true] %s213
          %216 = dma.hbm_to_vmem [thread:$0]  %s211, 32, %s214, %s202
        $region28: #{tpu_custom_call.1} parent=15 // pred_fallthru
          _
      $region16: #{tpu_custom_call.1} parent=5 // pred_fallthru
        _
      %p217 = scmp.le.s32.totalorder 1, %s18
      %p218 = scmp.lt.s32.totalorder %s18, 5
      %p219 = pnand %p217, %p218
      %p220 = pneg %p219
      // Predicated region
      $region29: #{tpu_custom_call.1} parent=5 // pred_check
        _
      $region30: #{tpu_custom_call.1} parent=5 // pred_check_branch
        %222 = sbr.rel (%p219) target = $region32
      $region31: #{tpu_custom_call.1} parent=5 // pred_region
        %s223 = ssub.s32 %s18, 1
        %s224 = sand.u32 %s43, 1
        %s225 = scalar_lea.sflag [#allocation3], %s224
        %s226 = sand.u32 %s43, 1
        %s227 = smul.addr %s226, 64
        %s228 = scalar_lea.vmem [#allocation2], %s227
        // Predicated region
        $region33: #{tpu_custom_call.1} parent=31 // pred_check
          %p229 = pneg %p56
        $region34: #{tpu_custom_call.1} parent=31 // pred_check_branch
          %231 = sbr.rel (%p229) target = $region36
        $region35: #{tpu_custom_call.1} parent=31 // pred_region
          %232 = dma.done %s225, 1024
        $region36: #{tpu_custom_call.1} parent=31 // pred_fallthru
          _
        %s233 = sand.u32 %s23, 1
        %s234 = scalar_lea.sflag [#allocation6], %s233
        %s235 = sand.u32 %s71, 1
        %s236 = smul.addr %s235, 4096
        %s237 = scalar_lea.vmem [#allocation5], %s236
        // Predicated region
        $region37: #{tpu_custom_call.1} parent=31 // pred_check
          %p238 = pneg %p84
        $region38: #{tpu_custom_call.1} parent=31 // pred_check_branch
          %240 = sbr.rel (%p238) target = $region40
        $region39: #{tpu_custom_call.1} parent=31 // pred_region
          %241 = dma.done %s234, 65536
        $region40: #{tpu_custom_call.1} parent=31 // pred_fallthru
          _
        %s242 = sand.u32 %s23, 1
        %s243 = scalar_lea.sflag [#allocation6], %s242
        %s244 = sand.u32 %s97, 1
        %s245 = smul.addr %s244, 2
        %s246 = scalar_lea.vmem [#allocation7], %s245
        // Predicated region
        $region41: #{tpu_custom_call.1} parent=31 // pred_check
          %p247 = pneg %p110
        $region42: #{tpu_custom_call.1} parent=31 // pred_check_branch
          %249 = sbr.rel (%p247) target = $region44
        $region43: #{tpu_custom_call.1} parent=31 // pred_region
          %250 = dma.done %s243, 32
        $region44: #{tpu_custom_call.1} parent=31 // pred_fallthru
          _
        %s251 = sand.u32 %s43, 1
        %s252 = scalar_lea.sflag [#allocation3], %s251
        %s253 = sand.u32 %s43, 1
        %s254 = smul.addr %s253, 64
        %s255 = scalar_lea.vmem [#allocation2], %s254
        %p256 = pneg %p56
        %p257 = pneg %p53
        %s258 = sand.u32 %s23, 1
        %s259 = scalar_lea.sflag [#allocation6], %s258
        %s260 = sand.u32 %s71, 1
        %s261 = smul.addr %s260, 4096
        %s262 = scalar_lea.vmem [#allocation5], %s261
        %p263 = pneg %p84
        %p264 = pneg %p81
        %s265 = sand.u32 %s23, 1
        %s266 = scalar_lea.sflag [#allocation6], %s265
        %s267 = sand.u32 %s97, 1
        %s268 = smul.addr %s267, 2
        %s269 = scalar_lea.vmem [#allocation7], %s268
        %p270 = pneg %p110
        %p271 = pneg %p107
        %p272 = pneg %p136
        %p273 = pneg %p133
        %s274 = sand.u32 %s123, 1
        %s275 = scalar_lea.sflag [#allocation4], %s274
        %s276 = sand.u32 %s123, 1
        %s277 = smul.addr %s276, 4
        %s278 = scalar_lea.vmem [#allocation8], %s277
        %s279 = smul.u32 32, %s28
        %s280 = smul.u32 512, %s28
        %s281 = smul.u32 2, %s27
        %s282 = smul.u32 2, %s27
        %s283 = smul.u32 2, %s27
        %p284 = scmp.eq.s32.totalorder %s28, 0
        // Predicated region
        $region45: #{tpu_custom_call.1} parent=31 // pred_check
          %p285 = pneg %p284
        $region46: #{tpu_custom_call.1} parent=31 // pred_check_branch
          %287 = sbr.rel (%p285) target = $region48
        $region47: #{tpu_custom_call.1} parent=31 // pred_region
          %v288 = vld [vmem:[%s246] sm:$0x3]
          %v290 = vlaneseq
          %v291 = vshrl.u32 %v290, 7
          %v292 = vsub.s32 0, %v291
          %v293 = vrot.slane %v288, %v292
          %v294 = vlaneseq
          %v295 = vshrl.u32 %v294, 7
          %v296 = vsub.s32 1, %v295
          %v297 = vrot.slane %v288, %v296
          %v298 = vcombine.low %v293, %v297
          %v300 = vunpack.c.l.s4 1983009808
          %v301 = vunpack.c.0.s8 %v300
          %v302 = vlaneseq
          %v303 = vshrl.u32 %v302, 7
          %v304 = vsub.s32 %v301, %v303
          %v305 = vrot.slane %v298, %v304
          %307 = vst [vmem:[%s278] sm:$0xf] %v305
        $region48: #{tpu_custom_call.1} parent=31 // pred_fallthru
          _
        %v308 = vld [vmem:[%s278] sm:$0xf]
        %v309 = vld [vmem:[%s228] sm:$0xff]
        %v310 = vld [vmem:[%s228 + $0x8] sm:$0xff]
        %v311 = vld [vmem:[%s228 + $0x10] sm:$0xff]
        %v312 = vld [vmem:[%s228 + $0x18] sm:$0xff]
        %v313 = vld [vmem:[%s228 + $0x20] sm:$0xff]
        %v314 = vld [vmem:[%s228 + $0x28] sm:$0xff]
        %v315 = vld [vmem:[%s228 + $0x30] sm:$0xff]
        %v316 = vld [vmem:[%s228 + $0x38] sm:$0xff]
        %v325 = vcombine.high %v309, %v309
        %v327 = vunpack.c.l.s4 1983009808
        %v328 = vunpack.c.0.s8 %v327
        %v329 = vlaneseq
        %v330 = vshrl.u32 %v329, 7
        %v331 = vsub.s32 %v328, %v330
        %v332 = vrot.slane %v309, %v331
        %v334 = vunpack.c.l.s4 1983009808
        %v335 = vunpack.c.0.s8 %v334
        %v336 = vlaneseq
        %v337 = vshrl.u32 %v336, 7
        %v338 = vsub.s32 %v335, %v337
        %v339 = vrot.slane %v325, %v338
        %v340 = vcombine.high %v332, %v332
        %v341 = vcombine.high %v339, %v339
        %v342 = vcombine.high %v310, %v310
        %v344 = vunpack.c.l.s4 1983009808
        %v345 = vunpack.c.0.s8 %v344
        %v346 = vlaneseq
        %v347 = vshrl.u32 %v346, 7
        %v348 = vsub.s32 %v345, %v347
        %v349 = vrot.slane %v310, %v348
        %v351 = vunpack.c.l.s4 1983009808
        %v352 = vunpack.c.0.s8 %v351
        %v353 = vlaneseq
        %v354 = vshrl.u32 %v353, 7
        %v355 = vsub.s32 %v352, %v354
        %v356 = vrot.slane %v342, %v355
        %v357 = vcombine.high %v349, %v349
        %v358 = vcombine.high %v356, %v356
        %v359 = vcombine.high %v311, %v311
        %v361 = vunpack.c.l.s4 1983009808
        %v362 = vunpack.c.0.s8 %v361
        %v363 = vlaneseq
        %v364 = vshrl.u32 %v363, 7
        %v365 = vsub.s32 %v362, %v364
        %v366 = vrot.slane %v311, %v365
        %v368 = vunpack.c.l.s4 1983009808
        %v369 = vunpack.c.0.s8 %v368
        %v370 = vlaneseq
        %v371 = vshrl.u32 %v370, 7
        %v372 = vsub.s32 %v369, %v371
        %v373 = vrot.slane %v359, %v372
        %v374 = vcombine.high %v366, %v366
        %v375 = vcombine.high %v373, %v373
        %v376 = vcombine.high %v312, %v312
        %v378 = vunpack.c.l.s4 1983009808
        %v379 = vunpack.c.0.s8 %v378
        %v380 = vlaneseq
        %v381 = vshrl.u32 %v380, 7
        %v382 = vsub.s32 %v379, %v381
        %v383 = vrot.slane %v312, %v382
        %v385 = vunpack.c.l.s4 1983009808
        %v386 = vunpack.c.0.s8 %v385
        %v387 = vlaneseq
        %v388 = vshrl.u32 %v387, 7
        %v389 = vsub.s32 %v386, %v388
        %v390 = vrot.slane %v376, %v389
        %v391 = vcombine.high %v383, %v383
        %v392 = vcombine.high %v390, %v390
        %v393 = vcombine.high %v313, %v313
        %v395 = vunpack.c.l.s4 1983009808
        %v396 = vunpack.c.0.s8 %v395
        %v397 = vlaneseq
        %v398 = vshrl.u32 %v397, 7
        %v399 = vsub.s32 %v396, %v398
        %v400 = vrot.slane %v313, %v399
        %v402 = vunpack.c.l.s4 1983009808
        %v403 = vunpack.c.0.s8 %v402
        %v404 = vlaneseq
        %v405 = vshrl.u32 %v404, 7
        %v406 = vsub.s32 %v403, %v405
        %v407 = vrot.slane %v393, %v406
        %v408 = vcombine.high %v400, %v400
        %v409 = vcombine.high %v407, %v407
        %v410 = vcombine.high %v314, %v314
        %v412 = vunpack.c.l.s4 1983009808
        %v413 = vunpack.c.0.s8 %v412
        %v414 = vlaneseq
        %v415 = vshrl.u32 %v414, 7
        %v416 = vsub.s32 %v413, %v415
        %v417 = vrot.slane %v314, %v416
        %v419 = vunpack.c.l.s4 1983009808
        %v420 = vunpack.c.0.s8 %v419
        %v421 = vlaneseq
        %v422 = vshrl.u32 %v421, 7
        %v423 = vsub.s32 %v420, %v422
        %v424 = vrot.slane %v410, %v423
        %v425 = vcombine.high %v417, %v417
        %v426 = vcombine.high %v424, %v424
        %v427 = vcombine.high %v315, %v315
        %v429 = vunpack.c.l.s4 1983009808
        %v430 = vunpack.c.0.s8 %v429
        %v431 = vlaneseq
        %v432 = vshrl.u32 %v431, 7
        %v433 = vsub.s32 %v430, %v432
        %v434 = vrot.slane %v315, %v433
        %v436 = vunpack.c.l.s4 1983009808
        %v437 = vunpack.c.0.s8 %v436
        %v438 = vlaneseq
        %v439 = vshrl.u32 %v438, 7
        %v440 = vsub.s32 %v437, %v439
        %v441 = vrot.slane %v427, %v440
        %v442 = vcombine.high %v434, %v434
        %v443 = vcombine.high %v441, %v441
        %v444 = vcombine.high %v316, %v316
        %v446 = vunpack.c.l.s4 1983009808
        %v447 = vunpack.c.0.s8 %v446
        %v448 = vlaneseq
        %v449 = vshrl.u32 %v448, 7
        %v450 = vsub.s32 %v447, %v449
        %v451 = vrot.slane %v316, %v450
        %v453 = vunpack.c.l.s4 1983009808
        %v454 = vunpack.c.0.s8 %v453
        %v455 = vlaneseq
        %v456 = vshrl.u32 %v455, 7
        %v457 = vsub.s32 %v454, %v456
        %v458 = vrot.slane %v444, %v457
        %v459 = vcombine.high %v451, %v451
        %v460 = vcombine.high %v458, %v458
        %v493 = vpack.c.bf16 %v332, %v332
        %v494 = vpack.c.bf16 %v340, %v340
        %v495 = vpack.c.bf16 %v339, %v339
        %v496 = vpack.c.bf16 %v341, %v341
        %v497 = vpack.c.bf16 %v349, %v349
        %v498 = vpack.c.bf16 %v357, %v357
        %v499 = vpack.c.bf16 %v356, %v356
        %v500 = vpack.c.bf16 %v358, %v358
        %v501 = vpack.c.bf16 %v366, %v366
        %v502 = vpack.c.bf16 %v374, %v374
        %v503 = vpack.c.bf16 %v373, %v373
        %v504 = vpack.c.bf16 %v375, %v375
        %v505 = vpack.c.bf16 %v383, %v383
        %v506 = vpack.c.bf16 %v391, %v391
        %v507 = vpack.c.bf16 %v390, %v390
        %v508 = vpack.c.bf16 %v392, %v392
        %v509 = vpack.c.bf16 %v400, %v400
        %v510 = vpack.c.bf16 %v408, %v408
        %v511 = vpack.c.bf16 %v407, %v407
        %v512 = vpack.c.bf16 %v409, %v409
        %v513 = vpack.c.bf16 %v417, %v417
        %v514 = vpack.c.bf16 %v425, %v425
        %v515 = vpack.c.bf16 %v424, %v424
        %v516 = vpack.c.bf16 %v426, %v426
        %v517 = vpack.c.bf16 %v434, %v434
        %v518 = vpack.c.bf16 %v442, %v442
        %v519 = vpack.c.bf16 %v441, %v441
        %v520 = vpack.c.bf16 %v443, %v443
        %v521 = vpack.c.bf16 %v451, %v451
        %v522 = vpack.c.bf16 %v459, %v459
        %v523 = vpack.c.bf16 %v458, %v458
        %v524 = vpack.c.bf16 %v460, %v460
        %v525 = vld [vmem:[%s237] sm:$0xff]
        %v526 = vld [vmem:[%s237 + $0x8] sm:$0xff]
        %v527 = vld [vmem:[%s237 + $0x10] sm:$0xff]
        %v528 = vld [vmem:[%s237 + $0x18] sm:$0xff]
        %v529 = vld [vmem:[%s237 + $0x20] sm:$0xff]
        %v530 = vld [vmem:[%s237 + $0x28] sm:$0xff]
        %v531 = vld [vmem:[%s237 + $0x30] sm:$0xff]
        %v532 = vld [vmem:[%s237 + $0x38] sm:$0xff]
        %v533 = vld [vmem:[%s237 + $0x40] sm:$0xff]
        %v534 = vld [vmem:[%s237 + $0x48] sm:$0xff]
        %v535 = vld [vmem:[%s237 + $0x50] sm:$0xff]
        %v536 = vld [vmem:[%s237 + $0x58] sm:$0xff]
        %v537 = vld [vmem:[%s237 + $0x60] sm:$0xff]
        %v538 = vld [vmem:[%s237 + $0x68] sm:$0xff]
        %v539 = vld [vmem:[%s237 + $0x70] sm:$0xff]
        %v540 = vld [vmem:[%s237 + $0x78] sm:$0xff]
        %v541 = vld [vmem:[%s237 + $0x80] sm:$0xff]
        %v542 = vld [vmem:[%s237 + $0x88] sm:$0xff]
        %v543 = vld [vmem:[%s237 + $0x90] sm:$0xff]
        %v544 = vld [vmem:[%s237 + $0x98] sm:$0xff]
        %v545 = vld [vmem:[%s237 + $0xa0] sm:$0xff]
        %v546 = vld [vmem:[%s237 + $0xa8] sm:$0xff]
        %v547 = vld [vmem:[%s237 + $0xb0] sm:$0xff]
        %v548 = vld [vmem:[%s237 + $0xb8] sm:$0xff]
        %v549 = vld [vmem:[%s237 + $0xc0] sm:$0xff]
        %v550 = vld [vmem:[%s237 + $0xc8] sm:$0xff]
        %v551 = vld [vmem:[%s237 + $0xd0] sm:$0xff]
        %v552 = vld [vmem:[%s237 + $0xd8] sm:$0xff]
        %v553 = vld [vmem:[%s237 + $0xe0] sm:$0xff]
        %v554 = vld [vmem:[%s237 + $0xe8] sm:$0xff]
        %v555 = vld [vmem:[%s237 + $0xf0] sm:$0xff]
        %v556 = vld [vmem:[%s237 + $0xf8] sm:$0xff]
        %v557 = vld [vmem:[%s237 + $0x100] sm:$0xff]
        %v558 = vld [vmem:[%s237 + $0x108] sm:$0xff]
        %v559 = vld [vmem:[%s237 + $0x110] sm:$0xff]
        %v560 = vld [vmem:[%s237 + $0x118] sm:$0xff]
        %v561 = vld [vmem:[%s237 + $0x120] sm:$0xff]
        %v562 = vld [vmem:[%s237 + $0x128] sm:$0xff]
        %v563 = vld [vmem:[%s237 + $0x130] sm:$0xff]
        %v564 = vld [vmem:[%s237 + $0x138] sm:$0xff]
        %v565 = vld [vmem:[%s237 + $0x140] sm:$0xff]
        %v566 = vld [vmem:[%s237 + $0x148] sm:$0xff]
        %v567 = vld [vmem:[%s237 + $0x150] sm:$0xff]
        %v568 = vld [vmem:[%s237 + $0x158] sm:$0xff]
        %v569 = vld [vmem:[%s237 + $0x160] sm:$0xff]
        %v570 = vld [vmem:[%s237 + $0x168] sm:$0xff]
        %v571 = vld [vmem:[%s237 + $0x170] sm:$0xff]
        %v572 = vld [vmem:[%s237 + $0x178] sm:$0xff]
        %v573 = vld [vmem:[%s237 + $0x180] sm:$0xff]
        %v574 = vld [vmem:[%s237 + $0x188] sm:$0xff]
        %v575 = vld [vmem:[%s237 + $0x190] sm:$0xff]
        %v576 = vld [vmem:[%s237 + $0x198] sm:$0xff]
        %v577 = vld [vmem:[%s237 + $0x1a0] sm:$0xff]
        %v578 = vld [vmem:[%s237 + $0x1a8] sm:$0xff]
        %v579 = vld [vmem:[%s237 + $0x1b0] sm:$0xff]
        %v580 = vld [vmem:[%s237 + $0x1b8] sm:$0xff]
        %v581 = vld [vmem:[%s237 + $0x1c0] sm:$0xff]
        %v582 = vld [vmem:[%s237 + $0x1c8] sm:$0xff]
        %v583 = vld [vmem:[%s237 + $0x1d0] sm:$0xff]
        %v584 = vld [vmem:[%s237 + $0x1d8] sm:$0xff]
        %v585 = vld [vmem:[%s237 + $0x1e0] sm:$0xff]
        %v586 = vld [vmem:[%s237 + $0x1e8] sm:$0xff]
        %v587 = vld [vmem:[%s237 + $0x1f0] sm:$0xff]
        %v588 = vld [vmem:[%s237 + $0x1f8] sm:$0xff]
        %v589 = vld [vmem:[%s237 + $0x200] sm:$0xff]
        %v590 = vld [vmem:[%s237 + $0x208] sm:$0xff]
        %v591 = vld [vmem:[%s237 + $0x210] sm:$0xff]
        %v592 = vld [vmem:[%s237 + $0x218] sm:$0xff]
        %v593 = vld [vmem:[%s237 + $0x220] sm:$0xff]
        %v594 = vld [vmem:[%s237 + $0x228] sm:$0xff]
        %v595 = vld [vmem:[%s237 + $0x230] sm:$0xff]
        %v596 = vld [vmem:[%s237 + $0x238] sm:$0xff]
        %v597 = vld [vmem:[%s237 + $0x240] sm:$0xff]
        %v598 = vld [vmem:[%s237 + $0x248] sm:$0xff]
        %v599 = vld [vmem:[%s237 + $0x250] sm:$0xff]
        %v600 = vld [vmem:[%s237 + $0x258] sm:$0xff]
        %v601 = vld [vmem:[%s237 + $0x260] sm:$0xff]
        %v602 = vld [vmem:[%s237 + $0x268] sm:$0xff]
        %v603 = vld [vmem:[%s237 + $0x270] sm:$0xff]
        %v604 = vld [vmem:[%s237 + $0x278] sm:$0xff]
        %v605 = vld [vmem:[%s237 + $0x280] sm:$0xff]
        %v606 = vld [vmem:[%s237 + $0x288] sm:$0xff]
        %v607 = vld [vmem:[%s237 + $0x290] sm:$0xff]
        %v608 = vld [vmem:[%s237 + $0x298] sm:$0xff]
        %v609 = vld [vmem:[%s237 + $0x2a0] sm:$0xff]
        %v610 = vld [vmem:[%s237 + $0x2a8] sm:$0xff]
        %v611 = vld [vmem:[%s237 + $0x2b0] sm:$0xff]
        %v612 = vld [vmem:[%s237 + $0x2b8] sm:$0xff]
        %v613 = vld [vmem:[%s237 + $0x2c0] sm:$0xff]
        %v614 = vld [vmem:[%s237 + $0x2c8] sm:$0xff]
        %v615 = vld [vmem:[%s237 + $0x2d0] sm:$0xff]
        %v616 = vld [vmem:[%s237 + $0x2d8] sm:$0xff]
        %v617 = vld [vmem:[%s237 + $0x2e0] sm:$0xff]
        %v618 = vld [vmem:[%s237 + $0x2e8] sm:$0xff]
        %v619 = vld [vmem:[%s237 + $0x2f0] sm:$0xff]
        %v620 = vld [vmem:[%s237 + $0x2f8] sm:$0xff]
        %v621 = vld [vmem:[%s237 + $0x300] sm:$0xff]
        %v622 = vld [vmem:[%s237 + $0x308] sm:$0xff]
        %v623 = vld [vmem:[%s237 + $0x310] sm:$0xff]
        %v624 = vld [vmem:[%s237 + $0x318] sm:$0xff]
        %v625 = vld [vmem:[%s237 + $0x320] sm:$0xff]
        %v626 = vld [vmem:[%s237 + $0x328] sm:$0xff]
        %v627 = vld [vmem:[%s237 + $0x330] sm:$0xff]
        %v628 = vld [vmem:[%s237 + $0x338] sm:$0xff]
        %v629 = vld [vmem:[%s237 + $0x340] sm:$0xff]
        %v630 = vld [vmem:[%s237 + $0x348] sm:$0xff]
        %v631 = vld [vmem:[%s237 + $0x350] sm:$0xff]
        %v632 = vld [vmem:[%s237 + $0x358] sm:$0xff]
        %v633 = vld [vmem:[%s237 + $0x360] sm:$0xff]
        %v634 = vld [vmem:[%s237 + $0x368] sm:$0xff]
        %v635 = vld [vmem:[%s237 + $0x370] sm:$0xff]
        %v636 = vld [vmem:[%s237 + $0x378] sm:$0xff]
        %v637 = vld [vmem:[%s237 + $0x380] sm:$0xff]
        %v638 = vld [vmem:[%s237 + $0x388] sm:$0xff]
        %v639 = vld [vmem:[%s237 + $0x390] sm:$0xff]
        %v640 = vld [vmem:[%s237 + $0x398] sm:$0xff]
        %v641 = vld [vmem:[%s237 + $0x3a0] sm:$0xff]
        %v642 = vld [vmem:[%s237 + $0x3a8] sm:$0xff]
        %v643 = vld [vmem:[%s237 + $0x3b0] sm:$0xff]
        %v644 = vld [vmem:[%s237 + $0x3b8] sm:$0xff]
        %v645 = vld [vmem:[%s237 + $0x3c0] sm:$0xff]
        %v646 = vld [vmem:[%s237 + $0x3c8] sm:$0xff]
        %v647 = vld [vmem:[%s237 + $0x3d0] sm:$0xff]
        %v648 = vld [vmem:[%s237 + $0x3d8] sm:$0xff]
        %v649 = vld [vmem:[%s237 + $0x3e0] sm:$0xff]
        %v650 = vld [vmem:[%s237 + $0x3e8] sm:$0xff]
        %v651 = vld [vmem:[%s237 + $0x3f0] sm:$0xff]
        %v652 = vld [vmem:[%s237 + $0x3f8] sm:$0xff]
        %v653 = vld [vmem:[%s237 + $0x400] sm:$0xff]
        %v654 = vld [vmem:[%s237 + $0x408] sm:$0xff]
        %v655 = vld [vmem:[%s237 + $0x410] sm:$0xff]
        %v656 = vld [vmem:[%s237 + $0x418] sm:$0xff]
        %v657 = vld [vmem:[%s237 + $0x420] sm:$0xff]
        %v658 = vld [vmem:[%s237 + $0x428] sm:$0xff]
        %v659 = vld [vmem:[%s237 + $0x430] sm:$0xff]
        %v660 = vld [vmem:[%s237 + $0x438] sm:$0xff]
        %v661 = vld [vmem:[%s237 + $0x440] sm:$0xff]
        %v662 = vld [vmem:[%s237 + $0x448] sm:$0xff]
        %v663 = vld [vmem:[%s237 + $0x450] sm:$0xff]
        %v664 = vld [vmem:[%s237 + $0x458] sm:$0xff]
        %v665 = vld [vmem:[%s237 + $0x460] sm:$0xff]
        %v666 = vld [vmem:[%s237 + $0x468] sm:$0xff]
        %v667 = vld [vmem:[%s237 + $0x470] sm:$0xff]
        %v668 = vld [vmem:[%s237 + $0x478] sm:$0xff]
        %v669 = vld [vmem:[%s237 + $0x480] sm:$0xff]
        %v670 = vld [vmem:[%s237 + $0x488] sm:$0xff]
        %v671 = vld [vmem:[%s237 + $0x490] sm:$0xff]
        %v672 = vld [vmem:[%s237 + $0x498] sm:$0xff]
        %v673 = vld [vmem:[%s237 + $0x4a0] sm:$0xff]
        %v674 = vld [vmem:[%s237 + $0x4a8] sm:$0xff]
        %v675 = vld [vmem:[%s237 + $0x4b0] sm:$0xff]
        %v676 = vld [vmem:[%s237 + $0x4b8] sm:$0xff]
        %v677 = vld [vmem:[%s237 + $0x4c0] sm:$0xff]
        %v678 = vld [vmem:[%s237 + $0x4c8] sm:$0xff]
        %v679 = vld [vmem:[%s237 + $0x4d0] sm:$0xff]
        %v680 = vld [vmem:[%s237 + $0x4d8] sm:$0xff]
        %v681 = vld [vmem:[%s237 + $0x4e0] sm:$0xff]
        %v682 = vld [vmem:[%s237 + $0x4e8] sm:$0xff]
        %v683 = vld [vmem:[%s237 + $0x4f0] sm:$0xff]
        %v684 = vld [vmem:[%s237 + $0x4f8] sm:$0xff]
        %v685 = vld [vmem:[%s237 + $0x500] sm:$0xff]
        %v686 = vld [vmem:[%s237 + $0x508] sm:$0xff]
        %v687 = vld [vmem:[%s237 + $0x510] sm:$0xff]
        %v688 = vld [vmem:[%s237 + $0x518] sm:$0xff]
        %v689 = vld [vmem:[%s237 + $0x520] sm:$0xff]
        %v690 = vld [vmem:[%s237 + $0x528] sm:$0xff]
        %v691 = vld [vmem:[%s237 + $0x530] sm:$0xff]
        %v692 = vld [vmem:[%s237 + $0x538] sm:$0xff]
        %v693 = vld [vmem:[%s237 + $0x540] sm:$0xff]
        %v694 = vld [vmem:[%s237 + $0x548] sm:$0xff]
        %v695 = vld [vmem:[%s237 + $0x550] sm:$0xff]
        %v696 = vld [vmem:[%s237 + $0x558] sm:$0xff]
        %v697 = vld [vmem:[%s237 + $0x560] sm:$0xff]
        %v698 = vld [vmem:[%s237 + $0x568] sm:$0xff]
        %v699 = vld [vmem:[%s237 + $0x570] sm:$0xff]
        %v700 = vld [vmem:[%s237 + $0x578] sm:$0xff]
        %v701 = vld [vmem:[%s237 + $0x580] sm:$0xff]
        %v702 = vld [vmem:[%s237 + $0x588] sm:$0xff]
        %v703 = vld [vmem:[%s237 + $0x590] sm:$0xff]
        %v704 = vld [vmem:[%s237 + $0x598] sm:$0xff]
        %v705 = vld [vmem:[%s237 + $0x5a0] sm:$0xff]
        %v706 = vld [vmem:[%s237 + $0x5a8] sm:$0xff]
        %v707 = vld [vmem:[%s237 + $0x5b0] sm:$0xff]
        %v708 = vld [vmem:[%s237 + $0x5b8] sm:$0xff]
        %v709 = vld [vmem:[%s237 + $0x5c0] sm:$0xff]
        %v710 = vld [vmem:[%s237 + $0x5c8] sm:$0xff]
        %v711 = vld [vmem:[%s237 + $0x5d0] sm:$0xff]
        %v712 = vld [vmem:[%s237 + $0x5d8] sm:$0xff]
        %v713 = vld [vmem:[%s237 + $0x5e0] sm:$0xff]
        %v714 = vld [vmem:[%s237 + $0x5e8] sm:$0xff]
        %v715 = vld [vmem:[%s237 + $0x5f0] sm:$0xff]
        %v716 = vld [vmem:[%s237 + $0x5f8] sm:$0xff]
        %v717 = vld [vmem:[%s237 + $0x600] sm:$0xff]
        %v718 = vld [vmem:[%s237 + $0x608] sm:$0xff]
        %v719 = vld [vmem:[%s237 + $0x610] sm:$0xff]
        %v720 = vld [vmem:[%s237 + $0x618] sm:$0xff]
        %v721 = vld [vmem:[%s237 + $0x620] sm:$0xff]
        %v722 = vld [vmem:[%s237 + $0x628] sm:$0xff]
        %v723 = vld [vmem:[%s237 + $0x630] sm:$0xff]
        %v724 = vld [vmem:[%s237 + $0x638] sm:$0xff]
        %v725 = vld [vmem:[%s237 + $0x640] sm:$0xff]
        %v726 = vld [vmem:[%s237 + $0x648] sm:$0xff]
        %v727 = vld [vmem:[%s237 + $0x650] sm:$0xff]
        %v728 = vld [vmem:[%s237 + $0x658] sm:$0xff]
        %v729 = vld [vmem:[%s237 + $0x660] sm:$0xff]
        %v730 = vld [vmem:[%s237 + $0x668] sm:$0xff]
        %v731 = vld [vmem:[%s237 + $0x670] sm:$0xff]
        %v732 = vld [vmem:[%s237 + $0x678] sm:$0xff]
        %v733 = vld [vmem:[%s237 + $0x680] sm:$0xff]
        %v734 = vld [vmem:[%s237 + $0x688] sm:$0xff]
        %v735 = vld [vmem:[%s237 + $0x690] sm:$0xff]
        %v736 = vld [vmem:[%s237 + $0x698] sm:$0xff]
        %v737 = vld [vmem:[%s237 + $0x6a0] sm:$0xff]
        %v738 = vld [vmem:[%s237 + $0x6a8] sm:$0xff]
        %v739 = vld [vmem:[%s237 + $0x6b0] sm:$0xff]
        %v740 = vld [vmem:[%s237 + $0x6b8] sm:$0xff]
        %v741 = vld [vmem:[%s237 + $0x6c0] sm:$0xff]
        %v742 = vld [vmem:[%s237 + $0x6c8] sm:$0xff]
        %v743 = vld [vmem:[%s237 + $0x6d0] sm:$0xff]
        %v744 = vld [vmem:[%s237 + $0x6d8] sm:$0xff]
        %v745 = vld [vmem:[%s237 + $0x6e0] sm:$0xff]
        %v746 = vld [vmem:[%s237 + $0x6e8] sm:$0xff]
        %v747 = vld [vmem:[%s237 + $0x6f0] sm:$0xff]
        %v748 = vld [vmem:[%s237 + $0x6f8] sm:$0xff]
        %v749 = vld [vmem:[%s237 + $0x700] sm:$0xff]
        %v750 = vld [vmem:[%s237 + $0x708] sm:$0xff]
        %v751 = vld [vmem:[%s237 + $0x710] sm:$0xff]
        %v752 = vld [vmem:[%s237 + $0x718] sm:$0xff]
        %v753 = vld [vmem:[%s237 + $0x720] sm:$0xff]
        %v754 = vld [vmem:[%s237 + $0x728] sm:$0xff]
        %v755 = vld [vmem:[%s237 + $0x730] sm:$0xff]
        %v756 = vld [vmem:[%s237 + $0x738] sm:$0xff]
        %v757 = vld [vmem:[%s237 + $0x740] sm:$0xff]
        %v758 = vld [vmem:[%s237 + $0x748] sm:$0xff]
        %v759 = vld [vmem:[%s237 + $0x750] sm:$0xff]
        %v760 = vld [vmem:[%s237 + $0x758] sm:$0xff]
        %v761 = vld [vmem:[%s237 + $0x760] sm:$0xff]
        %v762 = vld [vmem:[%s237 + $0x768] sm:$0xff]
        %v763 = vld [vmem:[%s237 + $0x770] sm:$0xff]
        %v764 = vld [vmem:[%s237 + $0x778] sm:$0xff]
        %v765 = vld [vmem:[%s237 + $0x780] sm:$0xff]
        %v766 = vld [vmem:[%s237 + $0x788] sm:$0xff]
        %v767 = vld [vmem:[%s237 + $0x790] sm:$0xff]
        %v768 = vld [vmem:[%s237 + $0x798] sm:$0xff]
        %v769 = vld [vmem:[%s237 + $0x7a0] sm:$0xff]
        %v770 = vld [vmem:[%s237 + $0x7a8] sm:$0xff]
        %v771 = vld [vmem:[%s237 + $0x7b0] sm:$0xff]
        %v772 = vld [vmem:[%s237 + $0x7b8] sm:$0xff]
        %v773 = vld [vmem:[%s237 + $0x7c0] sm:$0xff]
        %v774 = vld [vmem:[%s237 + $0x7c8] sm:$0xff]
        %v775 = vld [vmem:[%s237 + $0x7d0] sm:$0xff]
        %v776 = vld [vmem:[%s237 + $0x7d8] sm:$0xff]
        %v777 = vld [vmem:[%s237 + $0x7e0] sm:$0xff]
        %v778 = vld [vmem:[%s237 + $0x7e8] sm:$0xff]
        %v779 = vld [vmem:[%s237 + $0x7f0] sm:$0xff]
        %v780 = vld [vmem:[%s237 + $0x7f8] sm:$0xff]
        %v781 = vld [vmem:[%s237 + $0x800] sm:$0xff]
        %v782 = vld [vmem:[%s237 + $0x808] sm:$0xff]
        %v783 = vld [vmem:[%s237 + $0x810] sm:$0xff]
        %v784 = vld [vmem:[%s237 + $0x818] sm:$0xff]
        %v785 = vld [vmem:[%s237 + $0x820] sm:$0xff]
        %v786 = vld [vmem:[%s237 + $0x828] sm:$0xff]
        %v787 = vld [vmem:[%s237 + $0x830] sm:$0xff]
        %v788 = vld [vmem:[%s237 + $0x838] sm:$0xff]
        %v789 = vld [vmem:[%s237 + $0x840] sm:$0xff]
        %v790 = vld [vmem:[%s237 + $0x848] sm:$0xff]
        %v791 = vld [vmem:[%s237 + $0x850] sm:$0xff]
        %v792 = vld [vmem:[%s237 + $0x858] sm:$0xff]
        %v793 = vld [vmem:[%s237 + $0x860] sm:$0xff]
        %v794 = vld [vmem:[%s237 + $0x868] sm:$0xff]
        %v795 = vld [vmem:[%s237 + $0x870] sm:$0xff]
        %v796 = vld [vmem:[%s237 + $0x878] sm:$0xff]
        %v797 = vld [vmem:[%s237 + $0x880] sm:$0xff]
        %v798 = vld [vmem:[%s237 + $0x888] sm:$0xff]
        %v799 = vld [vmem:[%s237 + $0x890] sm:$0xff]
        %v800 = vld [vmem:[%s237 + $0x898] sm:$0xff]
        %v801 = vld [vmem:[%s237 + $0x8a0] sm:$0xff]
        %v802 = vld [vmem:[%s237 + $0x8a8] sm:$0xff]
        %v803 = vld [vmem:[%s237 + $0x8b0] sm:$0xff]
        %v804 = vld [vmem:[%s237 + $0x8b8] sm:$0xff]
        %v805 = vld [vmem:[%s237 + $0x8c0] sm:$0xff]
        %v806 = vld [vmem:[%s237 + $0x8c8] sm:$0xff]
        %v807 = vld [vmem:[%s237 + $0x8d0] sm:$0xff]
        %v808 = vld [vmem:[%s237 + $0x8d8] sm:$0xff]
        %v809 = vld [vmem:[%s237 + $0x8e0] sm:$0xff]
        %v810 = vld [vmem:[%s237 + $0x8e8] sm:$0xff]
        %v811 = vld [vmem:[%s237 + $0x8f0] sm:$0xff]
        %v812 = vld [vmem:[%s237 + $0x8f8] sm:$0xff]
        %v813 = vld [vmem:[%s237 + $0x900] sm:$0xff]
        %v814 = vld [vmem:[%s237 + $0x908] sm:$0xff]
        %v815 = vld [vmem:[%s237 + $0x910] sm:$0xff]
        %v816 = vld [vmem:[%s237 + $0x918] sm:$0xff]
        %v817 = vld [vmem:[%s237 + $0x920] sm:$0xff]
        %v818 = vld [vmem:[%s237 + $0x928] sm:$0xff]
        %v819 = vld [vmem:[%s237 + $0x930] sm:$0xff]
        %v820 = vld [vmem:[%s237 + $0x938] sm:$0xff]
        %v821 = vld [vmem:[%s237 + $0x940] sm:$0xff]
        %v822 = vld [vmem:[%s237 + $0x948] sm:$0xff]
        %v823 = vld [vmem:[%s237 + $0x950] sm:$0xff]
        %v824 = vld [vmem:[%s237 + $0x958] sm:$0xff]
        %v825 = vld [vmem:[%s237 + $0x960] sm:$0xff]
        %v826 = vld [vmem:[%s237 + $0x968] sm:$0xff]
        %v827 = vld [vmem:[%s237 + $0x970] sm:$0xff]
        %v828 = vld [vmem:[%s237 + $0x978] sm:$0xff]
        %v829 = vld [vmem:[%s237 + $0x980] sm:$0xff]
        %v830 = vld [vmem:[%s237 + $0x988] sm:$0xff]
        %v831 = vld [vmem:[%s237 + $0x990] sm:$0xff]
        %v832 = vld [vmem:[%s237 + $0x998] sm:$0xff]
        %v833 = vld [vmem:[%s237 + $0x9a0] sm:$0xff]
        %v834 = vld [vmem:[%s237 + $0x9a8] sm:$0xff]
        %v835 = vld [vmem:[%s237 + $0x9b0] sm:$0xff]
        %v836 = vld [vmem:[%s237 + $0x9b8] sm:$0xff]
        %v837 = vld [vmem:[%s237 + $0x9c0] sm:$0xff]
        %v838 = vld [vmem:[%s237 + $0x9c8] sm:$0xff]
        %v839 = vld [vmem:[%s237 + $0x9d0] sm:$0xff]
        %v840 = vld [vmem:[%s237 + $0x9d8] sm:$0xff]
        %v841 = vld [vmem:[%s237 + $0x9e0] sm:$0xff]
        %v842 = vld [vmem:[%s237 + $0x9e8] sm:$0xff]
        %v843 = vld [vmem:[%s237 + $0x9f0] sm:$0xff]
        %v844 = vld [vmem:[%s237 + $0x9f8] sm:$0xff]
        %v845 = vld [vmem:[%s237 + $0xa00] sm:$0xff]
        %v846 = vld [vmem:[%s237 + $0xa08] sm:$0xff]
        %v847 = vld [vmem:[%s237 + $0xa10] sm:$0xff]
        %v848 = vld [vmem:[%s237 + $0xa18] sm:$0xff]
        %v849 = vld [vmem:[%s237 + $0xa20] sm:$0xff]
        %v850 = vld [vmem:[%s237 + $0xa28] sm:$0xff]
        %v851 = vld [vmem:[%s237 + $0xa30] sm:$0xff]
        %v852 = vld [vmem:[%s237 + $0xa38] sm:$0xff]
        %v853 = vld [vmem:[%s237 + $0xa40] sm:$0xff]
        %v854 = vld [vmem:[%s237 + $0xa48] sm:$0xff]
        %v855 = vld [vmem:[%s237 + $0xa50] sm:$0xff]
        %v856 = vld [vmem:[%s237 + $0xa58] sm:$0xff]
        %v857 = vld [vmem:[%s237 + $0xa60] sm:$0xff]
        %v858 = vld [vmem:[%s237 + $0xa68] sm:$0xff]
        %v859 = vld [vmem:[%s237 + $0xa70] sm:$0xff]
        %v860 = vld [vmem:[%s237 + $0xa78] sm:$0xff]
        %v861 = vld [vmem:[%s237 + $0xa80] sm:$0xff]
        %v862 = vld [vmem:[%s237 + $0xa88] sm:$0xff]
        %v863 = vld [vmem:[%s237 + $0xa90] sm:$0xff]
        %v864 = vld [vmem:[%s237 + $0xa98] sm:$0xff]
        %v865 = vld [vmem:[%s237 + $0xaa0] sm:$0xff]
        %v866 = vld [vmem:[%s237 + $0xaa8] sm:$0xff]
        %v867 = vld [vmem:[%s237 + $0xab0] sm:$0xff]
        %v868 = vld [vmem:[%s237 + $0xab8] sm:$0xff]
        %v869 = vld [vmem:[%s237 + $0xac0] sm:$0xff]
        %v870 = vld [vmem:[%s237 + $0xac8] sm:$0xff]
        %v871 = vld [vmem:[%s237 + $0xad0] sm:$0xff]
        %v872 = vld [vmem:[%s237 + $0xad8] sm:$0xff]
        %v873 = vld [vmem:[%s237 + $0xae0] sm:$0xff]
        %v874 = vld [vmem:[%s237 + $0xae8] sm:$0xff]
        %v875 = vld [vmem:[%s237 + $0xaf0] sm:$0xff]
        %v876 = vld [vmem:[%s237 + $0xaf8] sm:$0xff]
        %v877 = vld [vmem:[%s237 + $0xb00] sm:$0xff]
        %v878 = vld [vmem:[%s237 + $0xb08] sm:$0xff]
        %v879 = vld [vmem:[%s237 + $0xb10] sm:$0xff]
        %v880 = vld [vmem:[%s237 + $0xb18] sm:$0xff]
        %v881 = vld [vmem:[%s237 + $0xb20] sm:$0xff]
        %v882 = vld [vmem:[%s237 + $0xb28] sm:$0xff]
        %v883 = vld [vmem:[%s237 + $0xb30] sm:$0xff]
        %v884 = vld [vmem:[%s237 + $0xb38] sm:$0xff]
        %v885 = vld [vmem:[%s237 + $0xb40] sm:$0xff]
        %v886 = vld [vmem:[%s237 + $0xb48] sm:$0xff]
        %v887 = vld [vmem:[%s237 + $0xb50] sm:$0xff]
        %v888 = vld [vmem:[%s237 + $0xb58] sm:$0xff]
        %v889 = vld [vmem:[%s237 + $0xb60] sm:$0xff]
        %v890 = vld [vmem:[%s237 + $0xb68] sm:$0xff]
        %v891 = vld [vmem:[%s237 + $0xb70] sm:$0xff]
        %v892 = vld [vmem:[%s237 + $0xb78] sm:$0xff]
        %v893 = vld [vmem:[%s237 + $0xb80] sm:$0xff]
        %v894 = vld [vmem:[%s237 + $0xb88] sm:$0xff]
        %v895 = vld [vmem:[%s237 + $0xb90] sm:$0xff]
        %v896 = vld [vmem:[%s237 + $0xb98] sm:$0xff]
        %v897 = vld [vmem:[%s237 + $0xba0] sm:$0xff]
        %v898 = vld [vmem:[%s237 + $0xba8] sm:$0xff]
        %v899 = vld [vmem:[%s237 + $0xbb0] sm:$0xff]
        %v900 = vld [vmem:[%s237 + $0xbb8] sm:$0xff]
        %v901 = vld [vmem:[%s237 + $0xbc0] sm:$0xff]
        %v902 = vld [vmem:[%s237 + $0xbc8] sm:$0xff]
        %v903 = vld [vmem:[%s237 + $0xbd0] sm:$0xff]
        %v904 = vld [vmem:[%s237 + $0xbd8] sm:$0xff]
        %v905 = vld [vmem:[%s237 + $0xbe0] sm:$0xff]
        %v906 = vld [vmem:[%s237 + $0xbe8] sm:$0xff]
        %v907 = vld [vmem:[%s237 + $0xbf0] sm:$0xff]
        %v908 = vld [vmem:[%s237 + $0xbf8] sm:$0xff]
        %v909 = vld [vmem:[%s237 + $0xc00] sm:$0xff]
        %v910 = vld [vmem:[%s237 + $0xc08] sm:$0xff]
        %v911 = vld [vmem:[%s237 + $0xc10] sm:$0xff]
        %v912 = vld [vmem:[%s237 + $0xc18] sm:$0xff]
        %v913 = vld [vmem:[%s237 + $0xc20] sm:$0xff]
        %v914 = vld [vmem:[%s237 + $0xc28] sm:$0xff]
        %v915 = vld [vmem:[%s237 + $0xc30] sm:$0xff]
        %v916 = vld [vmem:[%s237 + $0xc38] sm:$0xff]
        %v917 = vld [vmem:[%s237 + $0xc40] sm:$0xff]
        %v918 = vld [vmem:[%s237 + $0xc48] sm:$0xff]
        %v919 = vld [vmem:[%s237 + $0xc50] sm:$0xff]
        %v920 = vld [vmem:[%s237 + $0xc58] sm:$0xff]
        %v921 = vld [vmem:[%s237 + $0xc60] sm:$0xff]
        %v922 = vld [vmem:[%s237 + $0xc68] sm:$0xff]
        %v923 = vld [vmem:[%s237 + $0xc70] sm:$0xff]
        %v924 = vld [vmem:[%s237 + $0xc78] sm:$0xff]
        %v925 = vld [vmem:[%s237 + $0xc80] sm:$0xff]
        %v926 = vld [vmem:[%s237 + $0xc88] sm:$0xff]
        %v927 = vld [vmem:[%s237 + $0xc90] sm:$0xff]
        %v928 = vld [vmem:[%s237 + $0xc98] sm:$0xff]
        %v929 = vld [vmem:[%s237 + $0xca0] sm:$0xff]
        %v930 = vld [vmem:[%s237 + $0xca8] sm:$0xff]
        %v931 = vld [vmem:[%s237 + $0xcb0] sm:$0xff]
        %v932 = vld [vmem:[%s237 + $0xcb8] sm:$0xff]
        %v933 = vld [vmem:[%s237 + $0xcc0] sm:$0xff]
        %v934 = vld [vmem:[%s237 + $0xcc8] sm:$0xff]
        %v935 = vld [vmem:[%s237 + $0xcd0] sm:$0xff]
        %v936 = vld [vmem:[%s237 + $0xcd8] sm:$0xff]
        %v937 = vld [vmem:[%s237 + $0xce0] sm:$0xff]
        %v938 = vld [vmem:[%s237 + $0xce8] sm:$0xff]
        %v939 = vld [vmem:[%s237 + $0xcf0] sm:$0xff]
        %v940 = vld [vmem:[%s237 + $0xcf8] sm:$0xff]
        %v941 = vld [vmem:[%s237 + $0xd00] sm:$0xff]
        %v942 = vld [vmem:[%s237 + $0xd08] sm:$0xff]
        %v943 = vld [vmem:[%s237 + $0xd10] sm:$0xff]
        %v944 = vld [vmem:[%s237 + $0xd18] sm:$0xff]
        %v945 = vld [vmem:[%s237 + $0xd20] sm:$0xff]
        %v946 = vld [vmem:[%s237 + $0xd28] sm:$0xff]
        %v947 = vld [vmem:[%s237 + $0xd30] sm:$0xff]
        %v948 = vld [vmem:[%s237 + $0xd38] sm:$0xff]
        %v949 = vld [vmem:[%s237 + $0xd40] sm:$0xff]
        %v950 = vld [vmem:[%s237 + $0xd48] sm:$0xff]
        %v951 = vld [vmem:[%s237 + $0xd50] sm:$0xff]
        %v952 = vld [vmem:[%s237 + $0xd58] sm:$0xff]
        %v953 = vld [vmem:[%s237 + $0xd60] sm:$0xff]
        %v954 = vld [vmem:[%s237 + $0xd68] sm:$0xff]
        %v955 = vld [vmem:[%s237 + $0xd70] sm:$0xff]
        %v956 = vld [vmem:[%s237 + $0xd78] sm:$0xff]
        %v957 = vld [vmem:[%s237 + $0xd80] sm:$0xff]
        %v958 = vld [vmem:[%s237 + $0xd88] sm:$0xff]
        %v959 = vld [vmem:[%s237 + $0xd90] sm:$0xff]
        %v960 = vld [vmem:[%s237 + $0xd98] sm:$0xff]
        %v961 = vld [vmem:[%s237 + $0xda0] sm:$0xff]
        %v962 = vld [vmem:[%s237 + $0xda8] sm:$0xff]
        %v963 = vld [vmem:[%s237 + $0xdb0] sm:$0xff]
        %v964 = vld [vmem:[%s237 + $0xdb8] sm:$0xff]
        %v965 = vld [vmem:[%s237 + $0xdc0] sm:$0xff]
        %v966 = vld [vmem:[%s237 + $0xdc8] sm:$0xff]
        %v967 = vld [vmem:[%s237 + $0xdd0] sm:$0xff]
        %v968 = vld [vmem:[%s237 + $0xdd8] sm:$0xff]
        %v969 = vld [vmem:[%s237 + $0xde0] sm:$0xff]
        %v970 = vld [vmem:[%s237 + $0xde8] sm:$0xff]
        %v971 = vld [vmem:[%s237 + $0xdf0] sm:$0xff]
        %v972 = vld [vmem:[%s237 + $0xdf8] sm:$0xff]
        %v973 = vld [vmem:[%s237 + $0xe00] sm:$0xff]
        %v974 = vld [vmem:[%s237 + $0xe08] sm:$0xff]
        %v975 = vld [vmem:[%s237 + $0xe10] sm:$0xff]
        %v976 = vld [vmem:[%s237 + $0xe18] sm:$0xff]
        %v977 = vld [vmem:[%s237 + $0xe20] sm:$0xff]
        %v978 = vld [vmem:[%s237 + $0xe28] sm:$0xff]
        %v979 = vld [vmem:[%s237 + $0xe30] sm:$0xff]
        %v980 = vld [vmem:[%s237 + $0xe38] sm:$0xff]
        %v981 = vld [vmem:[%s237 + $0xe40] sm:$0xff]
        %v982 = vld [vmem:[%s237 + $0xe48] sm:$0xff]
        %v983 = vld [vmem:[%s237 + $0xe50] sm:$0xff]
        %v984 = vld [vmem:[%s237 + $0xe58] sm:$0xff]
        %v985 = vld [vmem:[%s237 + $0xe60] sm:$0xff]
        %v986 = vld [vmem:[%s237 + $0xe68] sm:$0xff]
        %v987 = vld [vmem:[%s237 + $0xe70] sm:$0xff]
        %v988 = vld [vmem:[%s237 + $0xe78] sm:$0xff]
        %v989 = vld [vmem:[%s237 + $0xe80] sm:$0xff]
        %v990 = vld [vmem:[%s237 + $0xe88] sm:$0xff]
        %v991 = vld [vmem:[%s237 + $0xe90] sm:$0xff]
        %v992 = vld [vmem:[%s237 + $0xe98] sm:$0xff]
        %v993 = vld [vmem:[%s237 + $0xea0] sm:$0xff]
        %v994 = vld [vmem:[%s237 + $0xea8] sm:$0xff]
        %v995 = vld [vmem:[%s237 + $0xeb0] sm:$0xff]
        %v996 = vld [vmem:[%s237 + $0xeb8] sm:$0xff]
        %v997 = vld [vmem:[%s237 + $0xec0] sm:$0xff]
        %v998 = vld [vmem:[%s237 + $0xec8] sm:$0xff]
        %v999 = vld [vmem:[%s237 + $0xed0] sm:$0xff]
        %v1000 = vld [vmem:[%s237 + $0xed8] sm:$0xff]
        %v1001 = vld [vmem:[%s237 + $0xee0] sm:$0xff]
        %v1002 = vld [vmem:[%s237 + $0xee8] sm:$0xff]
        %v1003 = vld [vmem:[%s237 + $0xef0] sm:$0xff]
        %v1004 = vld [vmem:[%s237 + $0xef8] sm:$0xff]
        %v1005 = vld [vmem:[%s237 + $0xf00] sm:$0xff]
        %v1006 = vld [vmem:[%s237 + $0xf08] sm:$0xff]
        %v1007 = vld [vmem:[%s237 + $0xf10] sm:$0xff]
        %v1008 = vld [vmem:[%s237 + $0xf18] sm:$0xff]
        %v1009 = vld [vmem:[%s237 + $0xf20] sm:$0xff]
        %v1010 = vld [vmem:[%s237 + $0xf28] sm:$0xff]
        %v1011 = vld [vmem:[%s237 + $0xf30] sm:$0xff]
        %v1012 = vld [vmem:[%s237 + $0xf38] sm:$0xff]
        %v1013 = vld [vmem:[%s237 + $0xf40] sm:$0xff]
        %v1014 = vld [vmem:[%s237 + $0xf48] sm:$0xff]
        %v1015 = vld [vmem:[%s237 + $0xf50] sm:$0xff]
        %v1016 = vld [vmem:[%s237 + $0xf58] sm:$0xff]
        %v1017 = vld [vmem:[%s237 + $0xf60] sm:$0xff]
        %v1018 = vld [vmem:[%s237 + $0xf68] sm:$0xff]
        %v1019 = vld [vmem:[%s237 + $0xf70] sm:$0xff]
        %v1020 = vld [vmem:[%s237 + $0xf78] sm:$0xff]
        %v1021 = vld [vmem:[%s237 + $0xf80] sm:$0xff]
        %v1022 = vld [vmem:[%s237 + $0xf88] sm:$0xff]
        %v1023 = vld [vmem:[%s237 + $0xf90] sm:$0xff]
        %v1024 = vld [vmem:[%s237 + $0xf98] sm:$0xff]
        %v1025 = vld [vmem:[%s237 + $0xfa0] sm:$0xff]
        %v1026 = vld [vmem:[%s237 + $0xfa8] sm:$0xff]
        %v1027 = vld [vmem:[%s237 + $0xfb0] sm:$0xff]
        %v1028 = vld [vmem:[%s237 + $0xfb8] sm:$0xff]
        %v1029 = vld [vmem:[%s237 + $0xfc0] sm:$0xff]
        %v1030 = vld [vmem:[%s237 + $0xfc8] sm:$0xff]
        %v1031 = vld [vmem:[%s237 + $0xfd0] sm:$0xff]
        %v1032 = vld [vmem:[%s237 + $0xfd8] sm:$0xff]
        %v1033 = vld [vmem:[%s237 + $0xfe0] sm:$0xff]
        %v1034 = vld [vmem:[%s237 + $0xfe8] sm:$0xff]
        %v1035 = vld [vmem:[%s237 + $0xff0] sm:$0xff]
        %v1036 = vld [vmem:[%s237 + $0xff8] sm:$0xff]
        %v1549 = vunpack.c.l.b16 %v525
        %v1550 = vunpack.c.h.b16 %v525
        %v1551 = vunpack.c.l.b16 %v526
        %v1552 = vunpack.c.h.b16 %v526
        %v1553 = vunpack.c.l.b16 %v527
        %v1554 = vunpack.c.h.b16 %v527
        %v1555 = vunpack.c.l.b16 %v528
        %v1556 = vunpack.c.h.b16 %v528
        %v1557 = vunpack.c.l.b16 %v529
        %v1558 = vunpack.c.h.b16 %v529
        %v1559 = vunpack.c.l.b16 %v530
        %v1560 = vunpack.c.h.b16 %v530
        %v1561 = vunpack.c.l.b16 %v531
        %v1562 = vunpack.c.h.b16 %v531
        %v1563 = vunpack.c.l.b16 %v532
        %v1564 = vunpack.c.h.b16 %v532
        %v1565 = vunpack.c.l.b16 %v533
        %v1566 = vunpack.c.h.b16 %v533
        %v1567 = vunpack.c.l.b16 %v534
        %v1568 = vunpack.c.h.b16 %v534
        %v1569 = vunpack.c.l.b16 %v535
        %v1570 = vunpack.c.h.b16 %v535
        %v1571 = vunpack.c.l.b16 %v536
        %v1572 = vunpack.c.h.b16 %v536
        %v1573 = vunpack.c.l.b16 %v537
        %v1574 = vunpack.c.h.b16 %v537
        %v1575 = vunpack.c.l.b16 %v538
        %v1576 = vunpack.c.h.b16 %v538
        %v1577 = vunpack.c.l.b16 %v539
        %v1578 = vunpack.c.h.b16 %v539
        %v1579 = vunpack.c.l.b16 %v540
        %v1580 = vunpack.c.h.b16 %v540
        %v1581 = vunpack.c.l.b16 %v541
        %v1582 = vunpack.c.h.b16 %v541
        %v1583 = vunpack.c.l.b16 %v542
        %v1584 = vunpack.c.h.b16 %v542
        %v1585 = vunpack.c.l.b16 %v543
        %v1586 = vunpack.c.h.b16 %v543
        %v1587 = vunpack.c.l.b16 %v544
        %v1588 = vunpack.c.h.b16 %v544
        %v1589 = vunpack.c.l.b16 %v545
        %v1590 = vunpack.c.h.b16 %v545
        %v1591 = vunpack.c.l.b16 %v546
        %v1592 = vunpack.c.h.b16 %v546
        %v1593 = vunpack.c.l.b16 %v547
        %v1594 = vunpack.c.h.b16 %v547
        %v1595 = vunpack.c.l.b16 %v548
        %v1596 = vunpack.c.h.b16 %v548
        %v1597 = vunpack.c.l.b16 %v549
        %v1598 = vunpack.c.h.b16 %v549
        %v1599 = vunpack.c.l.b16 %v550
        %v1600 = vunpack.c.h.b16 %v550
        %v1601 = vunpack.c.l.b16 %v551
        %v1602 = vunpack.c.h.b16 %v551
        %v1603 = vunpack.c.l.b16 %v552
        %v1604 = vunpack.c.h.b16 %v552
        %v1605 = vunpack.c.l.b16 %v553
        %v1606 = vunpack.c.h.b16 %v553
        %v1607 = vunpack.c.l.b16 %v554
        %v1608 = vunpack.c.h.b16 %v554
        %v1609 = vunpack.c.l.b16 %v555
        %v1610 = vunpack.c.h.b16 %v555
        %v1611 = vunpack.c.l.b16 %v556
        %v1612 = vunpack.c.h.b16 %v556
        %v1613 = vunpack.c.l.b16 %v557
        %v1614 = vunpack.c.h.b16 %v557
        %v1615 = vunpack.c.l.b16 %v558
        %v1616 = vunpack.c.h.b16 %v558
        %v1617 = vunpack.c.l.b16 %v559
        %v1618 = vunpack.c.h.b16 %v559
        %v1619 = vunpack.c.l.b16 %v560
        %v1620 = vunpack.c.h.b16 %v560
        %v1621 = vunpack.c.l.b16 %v561
        %v1622 = vunpack.c.h.b16 %v561
        %v1623 = vunpack.c.l.b16 %v562
        %v1624 = vunpack.c.h.b16 %v562
        %v1625 = vunpack.c.l.b16 %v563
        %v1626 = vunpack.c.h.b16 %v563
        %v1627 = vunpack.c.l.b16 %v564
        %v1628 = vunpack.c.h.b16 %v564
        %v1629 = vunpack.c.l.b16 %v565
        %v1630 = vunpack.c.h.b16 %v565
        %v1631 = vunpack.c.l.b16 %v566
        %v1632 = vunpack.c.h.b16 %v566
        %v1633 = vunpack.c.l.b16 %v567
        %v1634 = vunpack.c.h.b16 %v567
        %v1635 = vunpack.c.l.b16 %v568
        %v1636 = vunpack.c.h.b16 %v568
        %v1637 = vunpack.c.l.b16 %v569
        %v1638 = vunpack.c.h.b16 %v569
        %v1639 = vunpack.c.l.b16 %v570
        %v1640 = vunpack.c.h.b16 %v570
        %v1641 = vunpack.c.l.b16 %v571
        %v1642 = vunpack.c.h.b16 %v571
        %v1643 = vunpack.c.l.b16 %v572
        %v1644 = vunpack.c.h.b16 %v572
        %v1645 = vunpack.c.l.b16 %v573
        %v1646 = vunpack.c.h.b16 %v573
        %v1647 = vunpack.c.l.b16 %v574
        %v1648 = vunpack.c.h.b16 %v574
        %v1649 = vunpack.c.l.b16 %v575
        %v1650 = vunpack.c.h.b16 %v575
        %v1651 = vunpack.c.l.b16 %v576
        %v1652 = vunpack.c.h.b16 %v576
        %v1653 = vunpack.c.l.b16 %v577
        %v1654 = vunpack.c.h.b16 %v577
        %v1655 = vunpack.c.l.b16 %v578
        %v1656 = vunpack.c.h.b16 %v578
        %v1657 = vunpack.c.l.b16 %v579
        %v1658 = vunpack.c.h.b16 %v579
        %v1659 = vunpack.c.l.b16 %v580
        %v1660 = vunpack.c.h.b16 %v580
        %v1661 = vunpack.c.l.b16 %v581
        %v1662 = vunpack.c.h.b16 %v581
        %v1663 = vunpack.c.l.b16 %v582
        %v1664 = vunpack.c.h.b16 %v582
        %v1665 = vunpack.c.l.b16 %v583
        %v1666 = vunpack.c.h.b16 %v583
        %v1667 = vunpack.c.l.b16 %v584
        %v1668 = vunpack.c.h.b16 %v584
        %v1669 = vunpack.c.l.b16 %v585
        %v1670 = vunpack.c.h.b16 %v585
        %v1671 = vunpack.c.l.b16 %v586
        %v1672 = vunpack.c.h.b16 %v586
        %v1673 = vunpack.c.l.b16 %v587
        %v1674 = vunpack.c.h.b16 %v587
        %v1675 = vunpack.c.l.b16 %v588
        %v1676 = vunpack.c.h.b16 %v588
        %v1677 = vunpack.c.l.b16 %v589
        %v1678 = vunpack.c.h.b16 %v589
        %v1679 = vunpack.c.l.b16 %v590
        %v1680 = vunpack.c.h.b16 %v590
        %v1681 = vunpack.c.l.b16 %v591
        %v1682 = vunpack.c.h.b16 %v591
        %v1683 = vunpack.c.l.b16 %v592
        %v1684 = vunpack.c.h.b16 %v592
        %v1685 = vunpack.c.l.b16 %v593
        %v1686 = vunpack.c.h.b16 %v593
        %v1687 = vunpack.c.l.b16 %v594
        %v1688 = vunpack.c.h.b16 %v594
        %v1689 = vunpack.c.l.b16 %v595
        %v1690 = vunpack.c.h.b16 %v595
        %v1691 = vunpack.c.l.b16 %v596
        %v1692 = vunpack.c.h.b16 %v596
        %v1693 = vunpack.c.l.b16 %v597
        %v1694 = vunpack.c.h.b16 %v597
        %v1695 = vunpack.c.l.b16 %v598
        %v1696 = vunpack.c.h.b16 %v598
        %v1697 = vunpack.c.l.b16 %v599
        %v1698 = vunpack.c.h.b16 %v599
        %v1699 = vunpack.c.l.b16 %v600
        %v1700 = vunpack.c.h.b16 %v600
        %v1701 = vunpack.c.l.b16 %v601
        %v1702 = vunpack.c.h.b16 %v601
        %v1703 = vunpack.c.l.b16 %v602
        %v1704 = vunpack.c.h.b16 %v602
        %v1705 = vunpack.c.l.b16 %v603
        %v1706 = vunpack.c.h.b16 %v603
        %v1707 = vunpack.c.l.b16 %v604
        %v1708 = vunpack.c.h.b16 %v604
        %v1709 = vunpack.c.l.b16 %v605
        %v1710 = vunpack.c.h.b16 %v605
        %v1711 = vunpack.c.l.b16 %v606
        %v1712 = vunpack.c.h.b16 %v606
        %v1713 = vunpack.c.l.b16 %v607
        %v1714 = vunpack.c.h.b16 %v607
        %v1715 = vunpack.c.l.b16 %v608
        %v1716 = vunpack.c.h.b16 %v608
        %v1717 = vunpack.c.l.b16 %v609
        %v1718 = vunpack.c.h.b16 %v609
        %v1719 = vunpack.c.l.b16 %v610
        %v1720 = vunpack.c.h.b16 %v610
        %v1721 = vunpack.c.l.b16 %v611
        %v1722 = vunpack.c.h.b16 %v611
        %v1723 = vunpack.c.l.b16 %v612
        %v1724 = vunpack.c.h.b16 %v612
        %v1725 = vunpack.c.l.b16 %v613
        %v1726 = vunpack.c.h.b16 %v613
        %v1727 = vunpack.c.l.b16 %v614
        %v1728 = vunpack.c.h.b16 %v614
        %v1729 = vunpack.c.l.b16 %v615
        %v1730 = vunpack.c.h.b16 %v615
        %v1731 = vunpack.c.l.b16 %v616
        %v1732 = vunpack.c.h.b16 %v616
        %v1733 = vunpack.c.l.b16 %v617
        %v1734 = vunpack.c.h.b16 %v617
        %v1735 = vunpack.c.l.b16 %v618
        %v1736 = vunpack.c.h.b16 %v618
        %v1737 = vunpack.c.l.b16 %v619
        %v1738 = vunpack.c.h.b16 %v619
        %v1739 = vunpack.c.l.b16 %v620
        %v1740 = vunpack.c.h.b16 %v620
        %v1741 = vunpack.c.l.b16 %v621
        %v1742 = vunpack.c.h.b16 %v621
        %v1743 = vunpack.c.l.b16 %v622
        %v1744 = vunpack.c.h.b16 %v622
        %v1745 = vunpack.c.l.b16 %v623
        %v1746 = vunpack.c.h.b16 %v623
        %v1747 = vunpack.c.l.b16 %v624
        %v1748 = vunpack.c.h.b16 %v624
        %v1749 = vunpack.c.l.b16 %v625
        %v1750 = vunpack.c.h.b16 %v625
        %v1751 = vunpack.c.l.b16 %v626
        %v1752 = vunpack.c.h.b16 %v626
        %v1753 = vunpack.c.l.b16 %v627
        %v1754 = vunpack.c.h.b16 %v627
        %v1755 = vunpack.c.l.b16 %v628
        %v1756 = vunpack.c.h.b16 %v628
        %v1757 = vunpack.c.l.b16 %v629
        %v1758 = vunpack.c.h.b16 %v629
        %v1759 = vunpack.c.l.b16 %v630
        %v1760 = vunpack.c.h.b16 %v630
        %v1761 = vunpack.c.l.b16 %v631
        %v1762 = vunpack.c.h.b16 %v631
        %v1763 = vunpack.c.l.b16 %v632
        %v1764 = vunpack.c.h.b16 %v632
        %v1765 = vunpack.c.l.b16 %v633
        %v1766 = vunpack.c.h.b16 %v633
        %v1767 = vunpack.c.l.b16 %v634
        %v1768 = vunpack.c.h.b16 %v634
        %v1769 = vunpack.c.l.b16 %v635
        %v1770 = vunpack.c.h.b16 %v635
        %v1771 = vunpack.c.l.b16 %v636
        %v1772 = vunpack.c.h.b16 %v636
        %v1773 = vunpack.c.l.b16 %v637
        %v1774 = vunpack.c.h.b16 %v637
        %v1775 = vunpack.c.l.b16 %v638
        %v1776 = vunpack.c.h.b16 %v638
        %v1777 = vunpack.c.l.b16 %v639
        %v1778 = vunpack.c.h.b16 %v639
        %v1779 = vunpack.c.l.b16 %v640
        %v1780 = vunpack.c.h.b16 %v640
        %v1781 = vunpack.c.l.b16 %v641
        %v1782 = vunpack.c.h.b16 %v641
        %v1783 = vunpack.c.l.b16 %v642
        %v1784 = vunpack.c.h.b16 %v642
        %v1785 = vunpack.c.l.b16 %v643
        %v1786 = vunpack.c.h.b16 %v643
        %v1787 = vunpack.c.l.b16 %v644
        %v1788 = vunpack.c.h.b16 %v644
        %v1789 = vunpack.c.l.b16 %v645
        %v1790 = vunpack.c.h.b16 %v645
        %v1791 = vunpack.c.l.b16 %v646
        %v1792 = vunpack.c.h.b16 %v646
        %v1793 = vunpack.c.l.b16 %v647
        %v1794 = vunpack.c.h.b16 %v647
        %v1795 = vunpack.c.l.b16 %v648
        %v1796 = vunpack.c.h.b16 %v648
        %v1797 = vunpack.c.l.b16 %v649
        %v1798 = vunpack.c.h.b16 %v649
        %v1799 = vunpack.c.l.b16 %v650
        %v1800 = vunpack.c.h.b16 %v650
        %v1801 = vunpack.c.l.b16 %v651
        %v1802 = vunpack.c.h.b16 %v651
        %v1803 = vunpack.c.l.b16 %v652
        %v1804 = vunpack.c.h.b16 %v652
        %v1805 = vunpack.c.l.b16 %v653
        %v1806 = vunpack.c.h.b16 %v653
        %v1807 = vunpack.c.l.b16 %v654
        %v1808 = vunpack.c.h.b16 %v654
        %v1809 = vunpack.c.l.b16 %v655
        %v1810 = vunpack.c.h.b16 %v655
        %v1811 = vunpack.c.l.b16 %v656
        %v1812 = vunpack.c.h.b16 %v656
        %v1813 = vunpack.c.l.b16 %v657
        %v1814 = vunpack.c.h.b16 %v657
        %v1815 = vunpack.c.l.b16 %v658
        %v1816 = vunpack.c.h.b16 %v658
        %v1817 = vunpack.c.l.b16 %v659
        %v1818 = vunpack.c.h.b16 %v659
        %v1819 = vunpack.c.l.b16 %v660
        %v1820 = vunpack.c.h.b16 %v660
        %v1821 = vunpack.c.l.b16 %v661
        %v1822 = vunpack.c.h.b16 %v661
        %v1823 = vunpack.c.l.b16 %v662
        %v1824 = vunpack.c.h.b16 %v662
        %v1825 = vunpack.c.l.b16 %v663
        %v1826 = vunpack.c.h.b16 %v663
        %v1827 = vunpack.c.l.b16 %v664
        %v1828 = vunpack.c.h.b16 %v664
        %v1829 = vunpack.c.l.b16 %v665
        %v1830 = vunpack.c.h.b16 %v665
        %v1831 = vunpack.c.l.b16 %v666
        %v1832 = vunpack.c.h.b16 %v666
        %v1833 = vunpack.c.l.b16 %v667
        %v1834 = vunpack.c.h.b16 %v667
        %v1835 = vunpack.c.l.b16 %v668
        %v1836 = vunpack.c.h.b16 %v668
        %v1837 = vunpack.c.l.b16 %v669
        %v1838 = vunpack.c.h.b16 %v669
        %v1839 = vunpack.c.l.b16 %v670
        %v1840 = vunpack.c.h.b16 %v670
        %v1841 = vunpack.c.l.b16 %v671
        %v1842 = vunpack.c.h.b16 %v671
        %v1843 = vunpack.c.l.b16 %v672
        %v1844 = vunpack.c.h.b16 %v672
        %v1845 = vunpack.c.l.b16 %v673
        %v1846 = vunpack.c.h.b16 %v673
        %v1847 = vunpack.c.l.b16 %v674
        %v1848 = vunpack.c.h.b16 %v674
        %v1849 = vunpack.c.l.b16 %v675
        %v1850 = vunpack.c.h.b16 %v675
        %v1851 = vunpack.c.l.b16 %v676
        %v1852 = vunpack.c.h.b16 %v676
        %v1853 = vunpack.c.l.b16 %v677
        %v1854 = vunpack.c.h.b16 %v677
        %v1855 = vunpack.c.l.b16 %v678
        %v1856 = vunpack.c.h.b16 %v678
        %v1857 = vunpack.c.l.b16 %v679
        %v1858 = vunpack.c.h.b16 %v679
        %v1859 = vunpack.c.l.b16 %v680
        %v1860 = vunpack.c.h.b16 %v680
        %v1861 = vunpack.c.l.b16 %v681
        %v1862 = vunpack.c.h.b16 %v681
        %v1863 = vunpack.c.l.b16 %v682
        %v1864 = vunpack.c.h.b16 %v682
        %v1865 = vunpack.c.l.b16 %v683
        %v1866 = vunpack.c.h.b16 %v683
        %v1867 = vunpack.c.l.b16 %v684
        %v1868 = vunpack.c.h.b16 %v684
        %v1869 = vunpack.c.l.b16 %v685
        %v1870 = vunpack.c.h.b16 %v685
        %v1871 = vunpack.c.l.b16 %v686
        %v1872 = vunpack.c.h.b16 %v686
        %v1873 = vunpack.c.l.b16 %v687
        %v1874 = vunpack.c.h.b16 %v687
        %v1875 = vunpack.c.l.b16 %v688
        %v1876 = vunpack.c.h.b16 %v688
        %v1877 = vunpack.c.l.b16 %v689
        %v1878 = vunpack.c.h.b16 %v689
        %v1879 = vunpack.c.l.b16 %v690
        %v1880 = vunpack.c.h.b16 %v690
        %v1881 = vunpack.c.l.b16 %v691
        %v1882 = vunpack.c.h.b16 %v691
        %v1883 = vunpack.c.l.b16 %v692
        %v1884 = vunpack.c.h.b16 %v692
        %v1885 = vunpack.c.l.b16 %v693
        %v1886 = vunpack.c.h.b16 %v693
        %v1887 = vunpack.c.l.b16 %v694
        %v1888 = vunpack.c.h.b16 %v694
        %v1889 = vunpack.c.l.b16 %v695
        %v1890 = vunpack.c.h.b16 %v695
        %v1891 = vunpack.c.l.b16 %v696
        %v1892 = vunpack.c.h.b16 %v696
        %v1893 = vunpack.c.l.b16 %v697
        %v1894 = vunpack.c.h.b16 %v697
        %v1895 = vunpack.c.l.b16 %v698
        %v1896 = vunpack.c.h.b16 %v698
        %v1897 = vunpack.c.l.b16 %v699
        %v1898 = vunpack.c.h.b16 %v699
        %v1899 = vunpack.c.l.b16 %v700
        %v1900 = vunpack.c.h.b16 %v700
        %v1901 = vunpack.c.l.b16 %v701
        %v1902 = vunpack.c.h.b16 %v701
        %v1903 = vunpack.c.l.b16 %v702
        %v1904 = vunpack.c.h.b16 %v702
        %v1905 = vunpack.c.l.b16 %v703
        %v1906 = vunpack.c.h.b16 %v703
        %v1907 = vunpack.c.l.b16 %v704
        %v1908 = vunpack.c.h.b16 %v704
        %v1909 = vunpack.c.l.b16 %v705
        %v1910 = vunpack.c.h.b16 %v705
        %v1911 = vunpack.c.l.b16 %v706
        %v1912 = vunpack.c.h.b16 %v706
        %v1913 = vunpack.c.l.b16 %v707
        %v1914 = vunpack.c.h.b16 %v707
        %v1915 = vunpack.c.l.b16 %v708
        %v1916 = vunpack.c.h.b16 %v708
        %v1917 = vunpack.c.l.b16 %v709
        %v1918 = vunpack.c.h.b16 %v709
        %v1919 = vunpack.c.l.b16 %v710
        %v1920 = vunpack.c.h.b16 %v710
        %v1921 = vunpack.c.l.b16 %v711
        %v1922 = vunpack.c.h.b16 %v711
        %v1923 = vunpack.c.l.b16 %v712
        %v1924 = vunpack.c.h.b16 %v712
        %v1925 = vunpack.c.l.b16 %v713
        %v1926 = vunpack.c.h.b16 %v713
        %v1927 = vunpack.c.l.b16 %v714
        %v1928 = vunpack.c.h.b16 %v714
        %v1929 = vunpack.c.l.b16 %v715
        %v1930 = vunpack.c.h.b16 %v715
        %v1931 = vunpack.c.l.b16 %v716
        %v1932 = vunpack.c.h.b16 %v716
        %v1933 = vunpack.c.l.b16 %v717
        %v1934 = vunpack.c.h.b16 %v717
        %v1935 = vunpack.c.l.b16 %v718
        %v1936 = vunpack.c.h.b16 %v718
        %v1937 = vunpack.c.l.b16 %v719
        %v1938 = vunpack.c.h.b16 %v719
        %v1939 = vunpack.c.l.b16 %v720
        %v1940 = vunpack.c.h.b16 %v720
        %v1941 = vunpack.c.l.b16 %v721
        %v1942 = vunpack.c.h.b16 %v721
        %v1943 = vunpack.c.l.b16 %v722
        %v1944 = vunpack.c.h.b16 %v722
        %v1945 = vunpack.c.l.b16 %v723
        %v1946 = vunpack.c.h.b16 %v723
        %v1947 = vunpack.c.l.b16 %v724
        %v1948 = vunpack.c.h.b16 %v724
        %v1949 = vunpack.c.l.b16 %v725
        %v1950 = vunpack.c.h.b16 %v725
        %v1951 = vunpack.c.l.b16 %v726
        %v1952 = vunpack.c.h.b16 %v726
        %v1953 = vunpack.c.l.b16 %v727
        %v1954 = vunpack.c.h.b16 %v727
        %v1955 = vunpack.c.l.b16 %v728
        %v1956 = vunpack.c.h.b16 %v728
        %v1957 = vunpack.c.l.b16 %v729
        %v1958 = vunpack.c.h.b16 %v729
        %v1959 = vunpack.c.l.b16 %v730
        %v1960 = vunpack.c.h.b16 %v730
        %v1961 = vunpack.c.l.b16 %v731
        %v1962 = vunpack.c.h.b16 %v731
        %v1963 = vunpack.c.l.b16 %v732
        %v1964 = vunpack.c.h.b16 %v732
        %v1965 = vunpack.c.l.b16 %v733
        %v1966 = vunpack.c.h.b16 %v733
        %v1967 = vunpack.c.l.b16 %v734
        %v1968 = vunpack.c.h.b16 %v734
        %v1969 = vunpack.c.l.b16 %v735
        %v1970 = vunpack.c.h.b16 %v735
        %v1971 = vunpack.c.l.b16 %v736
        %v1972 = vunpack.c.h.b16 %v736
        %v1973 = vunpack.c.l.b16 %v737
        %v1974 = vunpack.c.h.b16 %v737
        %v1975 = vunpack.c.l.b16 %v738
        %v1976 = vunpack.c.h.b16 %v738
        %v1977 = vunpack.c.l.b16 %v739
        %v1978 = vunpack.c.h.b16 %v739
        %v1979 = vunpack.c.l.b16 %v740
        %v1980 = vunpack.c.h.b16 %v740
        %v1981 = vunpack.c.l.b16 %v741
        %v1982 = vunpack.c.h.b16 %v741
        %v1983 = vunpack.c.l.b16 %v742
        %v1984 = vunpack.c.h.b16 %v742
        %v1985 = vunpack.c.l.b16 %v743
        %v1986 = vunpack.c.h.b16 %v743
        %v1987 = vunpack.c.l.b16 %v744
        %v1988 = vunpack.c.h.b16 %v744
        %v1989 = vunpack.c.l.b16 %v745
        %v1990 = vunpack.c.h.b16 %v745
        %v1991 = vunpack.c.l.b16 %v746
        %v1992 = vunpack.c.h.b16 %v746
        %v1993 = vunpack.c.l.b16 %v747
        %v1994 = vunpack.c.h.b16 %v747
        %v1995 = vunpack.c.l.b16 %v748
        %v1996 = vunpack.c.h.b16 %v748
        %v1997 = vunpack.c.l.b16 %v749
        %v1998 = vunpack.c.h.b16 %v749
        %v1999 = vunpack.c.l.b16 %v750
        %v2000 = vunpack.c.h.b16 %v750
        %v2001 = vunpack.c.l.b16 %v751
        %v2002 = vunpack.c.h.b16 %v751
        %v2003 = vunpack.c.l.b16 %v752
        %v2004 = vunpack.c.h.b16 %v752
        %v2005 = vunpack.c.l.b16 %v753
        %v2006 = vunpack.c.h.b16 %v753
        %v2007 = vunpack.c.l.b16 %v754
        %v2008 = vunpack.c.h.b16 %v754
        %v2009 = vunpack.c.l.b16 %v755
        %v2010 = vunpack.c.h.b16 %v755
        %v2011 = vunpack.c.l.b16 %v756
        %v2012 = vunpack.c.h.b16 %v756
        %v2013 = vunpack.c.l.b16 %v757
        %v2014 = vunpack.c.h.b16 %v757
        %v2015 = vunpack.c.l.b16 %v758
        %v2016 = vunpack.c.h.b16 %v758
        %v2017 = vunpack.c.l.b16 %v759
        %v2018 = vunpack.c.h.b16 %v759
        %v2019 = vunpack.c.l.b16 %v760
        %v2020 = vunpack.c.h.b16 %v760
        %v2021 = vunpack.c.l.b16 %v761
        %v2022 = vunpack.c.h.b16 %v761
        %v2023 = vunpack.c.l.b16 %v762
        %v2024 = vunpack.c.h.b16 %v762
        %v2025 = vunpack.c.l.b16 %v763
        %v2026 = vunpack.c.h.b16 %v763
        %v2027 = vunpack.c.l.b16 %v764
        %v2028 = vunpack.c.h.b16 %v764
        %v2029 = vunpack.c.l.b16 %v765
        %v2030 = vunpack.c.h.b16 %v765
        %v2031 = vunpack.c.l.b16 %v766
        %v2032 = vunpack.c.h.b16 %v766
        %v2033 = vunpack.c.l.b16 %v767
        %v2034 = vunpack.c.h.b16 %v767
        %v2035 = vunpack.c.l.b16 %v768
        %v2036 = vunpack.c.h.b16 %v768
        %v2037 = vunpack.c.l.b16 %v769
        %v2038 = vunpack.c.h.b16 %v769
        %v2039 = vunpack.c.l.b16 %v770
        %v2040 = vunpack.c.h.b16 %v770
        %v2041 = vunpack.c.l.b16 %v771
        %v2042 = vunpack.c.h.b16 %v771
        %v2043 = vunpack.c.l.b16 %v772
        %v2044 = vunpack.c.h.b16 %v772
        %v2045 = vunpack.c.l.b16 %v773
        %v2046 = vunpack.c.h.b16 %v773
        %v2047 = vunpack.c.l.b16 %v774
        %v2048 = vunpack.c.h.b16 %v774
        %v2049 = vunpack.c.l.b16 %v775
        %v2050 = vunpack.c.h.b16 %v775
        %v2051 = vunpack.c.l.b16 %v776
        %v2052 = vunpack.c.h.b16 %v776
        %v2053 = vunpack.c.l.b16 %v777
        %v2054 = vunpack.c.h.b16 %v777
        %v2055 = vunpack.c.l.b16 %v778
        %v2056 = vunpack.c.h.b16 %v778
        %v2057 = vunpack.c.l.b16 %v779
        %v2058 = vunpack.c.h.b16 %v779
        %v2059 = vunpack.c.l.b16 %v780
        %v2060 = vunpack.c.h.b16 %v780
        %v2061 = vunpack.c.l.b16 %v781
        %v2062 = vunpack.c.h.b16 %v781
        %v2063 = vunpack.c.l.b16 %v782
        %v2064 = vunpack.c.h.b16 %v782
        %v2065 = vunpack.c.l.b16 %v783
        %v2066 = vunpack.c.h.b16 %v783
        %v2067 = vunpack.c.l.b16 %v784
        %v2068 = vunpack.c.h.b16 %v784
        %v2069 = vunpack.c.l.b16 %v785
        %v2070 = vunpack.c.h.b16 %v785
        %v2071 = vunpack.c.l.b16 %v786
        %v2072 = vunpack.c.h.b16 %v786
        %v2073 = vunpack.c.l.b16 %v787
        %v2074 = vunpack.c.h.b16 %v787
        %v2075 = vunpack.c.l.b16 %v788
        %v2076 = vunpack.c.h.b16 %v788
        %v2077 = vunpack.c.l.b16 %v789
        %v2078 = vunpack.c.h.b16 %v789
        %v2079 = vunpack.c.l.b16 %v790
        %v2080 = vunpack.c.h.b16 %v790
        %v2081 = vunpack.c.l.b16 %v791
        %v2082 = vunpack.c.h.b16 %v791
        %v2083 = vunpack.c.l.b16 %v792
        %v2084 = vunpack.c.h.b16 %v792
        %v2085 = vunpack.c.l.b16 %v793
        %v2086 = vunpack.c.h.b16 %v793
        %v2087 = vunpack.c.l.b16 %v794
        %v2088 = vunpack.c.h.b16 %v794
        %v2089 = vunpack.c.l.b16 %v795
        %v2090 = vunpack.c.h.b16 %v795
        %v2091 = vunpack.c.l.b16 %v796
        %v2092 = vunpack.c.h.b16 %v796
        %v2093 = vunpack.c.l.b16 %v797
        %v2094 = vunpack.c.h.b16 %v797
        %v2095 = vunpack.c.l.b16 %v798
        %v2096 = vunpack.c.h.b16 %v798
        %v2097 = vunpack.c.l.b16 %v799
        %v2098 = vunpack.c.h.b16 %v799
        %v2099 = vunpack.c.l.b16 %v800
        %v2100 = vunpack.c.h.b16 %v800
        %v2101 = vunpack.c.l.b16 %v801
        %v2102 = vunpack.c.h.b16 %v801
        %v2103 = vunpack.c.l.b16 %v802
        %v2104 = vunpack.c.h.b16 %v802
        %v2105 = vunpack.c.l.b16 %v803
        %v2106 = vunpack.c.h.b16 %v803
        %v2107 = vunpack.c.l.b16 %v804
        %v2108 = vunpack.c.h.b16 %v804
        %v2109 = vunpack.c.l.b16 %v805
        %v2110 = vunpack.c.h.b16 %v805
        %v2111 = vunpack.c.l.b16 %v806
        %v2112 = vunpack.c.h.b16 %v806
        %v2113 = vunpack.c.l.b16 %v807
        %v2114 = vunpack.c.h.b16 %v807
        %v2115 = vunpack.c.l.b16 %v808
        %v2116 = vunpack.c.h.b16 %v808
        %v2117 = vunpack.c.l.b16 %v809
        %v2118 = vunpack.c.h.b16 %v809
        %v2119 = vunpack.c.l.b16 %v810
        %v2120 = vunpack.c.h.b16 %v810
        %v2121 = vunpack.c.l.b16 %v811
        %v2122 = vunpack.c.h.b16 %v811
        %v2123 = vunpack.c.l.b16 %v812
        %v2124 = vunpack.c.h.b16 %v812
        %v2125 = vunpack.c.l.b16 %v813
        %v2126 = vunpack.c.h.b16 %v813
        %v2127 = vunpack.c.l.b16 %v814
        %v2128 = vunpack.c.h.b16 %v814
        %v2129 = vunpack.c.l.b16 %v815
        %v2130 = vunpack.c.h.b16 %v815
        %v2131 = vunpack.c.l.b16 %v816
        %v2132 = vunpack.c.h.b16 %v816
        %v2133 = vunpack.c.l.b16 %v817
        %v2134 = vunpack.c.h.b16 %v817
        %v2135 = vunpack.c.l.b16 %v818
        %v2136 = vunpack.c.h.b16 %v818
        %v2137 = vunpack.c.l.b16 %v819
        %v2138 = vunpack.c.h.b16 %v819
        %v2139 = vunpack.c.l.b16 %v820
        %v2140 = vunpack.c.h.b16 %v820
        %v2141 = vunpack.c.l.b16 %v821
        %v2142 = vunpack.c.h.b16 %v821
        %v2143 = vunpack.c.l.b16 %v822
        %v2144 = vunpack.c.h.b16 %v822
        %v2145 = vunpack.c.l.b16 %v823
        %v2146 = vunpack.c.h.b16 %v823
        %v2147 = vunpack.c.l.b16 %v824
        %v2148 = vunpack.c.h.b16 %v824
        %v2149 = vunpack.c.l.b16 %v825
        %v2150 = vunpack.c.h.b16 %v825
        %v2151 = vunpack.c.l.b16 %v826
        %v2152 = vunpack.c.h.b16 %v826
        %v2153 = vunpack.c.l.b16 %v827
        %v2154 = vunpack.c.h.b16 %v827
        %v2155 = vunpack.c.l.b16 %v828
        %v2156 = vunpack.c.h.b16 %v828
        %v2157 = vunpack.c.l.b16 %v829
        %v2158 = vunpack.c.h.b16 %v829
        %v2159 = vunpack.c.l.b16 %v830
        %v2160 = vunpack.c.h.b16 %v830
        %v2161 = vunpack.c.l.b16 %v831
        %v2162 = vunpack.c.h.b16 %v831
        %v2163 = vunpack.c.l.b16 %v832
        %v2164 = vunpack.c.h.b16 %v832
        %v2165 = vunpack.c.l.b16 %v833
        %v2166 = vunpack.c.h.b16 %v833
        %v2167 = vunpack.c.l.b16 %v834
        %v2168 = vunpack.c.h.b16 %v834
        %v2169 = vunpack.c.l.b16 %v835
        %v2170 = vunpack.c.h.b16 %v835
        %v2171 = vunpack.c.l.b16 %v836
        %v2172 = vunpack.c.h.b16 %v836
        %v2173 = vunpack.c.l.b16 %v837
        %v2174 = vunpack.c.h.b16 %v837
        %v2175 = vunpack.c.l.b16 %v838
        %v2176 = vunpack.c.h.b16 %v838
        %v2177 = vunpack.c.l.b16 %v839
        %v2178 = vunpack.c.h.b16 %v839
        %v2179 = vunpack.c.l.b16 %v840
        %v2180 = vunpack.c.h.b16 %v840
        %v2181 = vunpack.c.l.b16 %v841
        %v2182 = vunpack.c.h.b16 %v841
        %v2183 = vunpack.c.l.b16 %v842
        %v2184 = vunpack.c.h.b16 %v842
        %v2185 = vunpack.c.l.b16 %v843
        %v2186 = vunpack.c.h.b16 %v843
        %v2187 = vunpack.c.l.b16 %v844
        %v2188 = vunpack.c.h.b16 %v844
        %v2189 = vunpack.c.l.b16 %v845
        %v2190 = vunpack.c.h.b16 %v845
        %v2191 = vunpack.c.l.b16 %v846
        %v2192 = vunpack.c.h.b16 %v846
        %v2193 = vunpack.c.l.b16 %v847
        %v2194 = vunpack.c.h.b16 %v847
        %v2195 = vunpack.c.l.b16 %v848
        %v2196 = vunpack.c.h.b16 %v848
        %v2197 = vunpack.c.l.b16 %v849
        %v2198 = vunpack.c.h.b16 %v849
        %v2199 = vunpack.c.l.b16 %v850
        %v2200 = vunpack.c.h.b16 %v850
        %v2201 = vunpack.c.l.b16 %v851
        %v2202 = vunpack.c.h.b16 %v851
        %v2203 = vunpack.c.l.b16 %v852
        %v2204 = vunpack.c.h.b16 %v852
        %v2205 = vunpack.c.l.b16 %v853
        %v2206 = vunpack.c.h.b16 %v853
        %v2207 = vunpack.c.l.b16 %v854
        %v2208 = vunpack.c.h.b16 %v854
        %v2209 = vunpack.c.l.b16 %v855
        %v2210 = vunpack.c.h.b16 %v855
        %v2211 = vunpack.c.l.b16 %v856
        %v2212 = vunpack.c.h.b16 %v856
        %v2213 = vunpack.c.l.b16 %v857
        %v2214 = vunpack.c.h.b16 %v857
        %v2215 = vunpack.c.l.b16 %v858
        %v2216 = vunpack.c.h.b16 %v858
        %v2217 = vunpack.c.l.b16 %v859
        %v2218 = vunpack.c.h.b16 %v859
        %v2219 = vunpack.c.l.b16 %v860
        %v2220 = vunpack.c.h.b16 %v860
        %v2221 = vunpack.c.l.b16 %v861
        %v2222 = vunpack.c.h.b16 %v861
        %v2223 = vunpack.c.l.b16 %v862
        %v2224 = vunpack.c.h.b16 %v862
        %v2225 = vunpack.c.l.b16 %v863
        %v2226 = vunpack.c.h.b16 %v863
        %v2227 = vunpack.c.l.b16 %v864
        %v2228 = vunpack.c.h.b16 %v864
        %v2229 = vunpack.c.l.b16 %v865
        %v2230 = vunpack.c.h.b16 %v865
        %v2231 = vunpack.c.l.b16 %v866
        %v2232 = vunpack.c.h.b16 %v866
        %v2233 = vunpack.c.l.b16 %v867
        %v2234 = vunpack.c.h.b16 %v867
        %v2235 = vunpack.c.l.b16 %v868
        %v2236 = vunpack.c.h.b16 %v868
        %v2237 = vunpack.c.l.b16 %v869
        %v2238 = vunpack.c.h.b16 %v869
        %v2239 = vunpack.c.l.b16 %v870
        %v2240 = vunpack.c.h.b16 %v870
        %v2241 = vunpack.c.l.b16 %v871
        %v2242 = vunpack.c.h.b16 %v871
        %v2243 = vunpack.c.l.b16 %v872
        %v2244 = vunpack.c.h.b16 %v872
        %v2245 = vunpack.c.l.b16 %v873
        %v2246 = vunpack.c.h.b16 %v873
        %v2247 = vunpack.c.l.b16 %v874
        %v2248 = vunpack.c.h.b16 %v874
        %v2249 = vunpack.c.l.b16 %v875
        %v2250 = vunpack.c.h.b16 %v875
        %v2251 = vunpack.c.l.b16 %v876
        %v2252 = vunpack.c.h.b16 %v876
        %v2253 = vunpack.c.l.b16 %v877
        %v2254 = vunpack.c.h.b16 %v877
        %v2255 = vunpack.c.l.b16 %v878
        %v2256 = vunpack.c.h.b16 %v878
        %v2257 = vunpack.c.l.b16 %v879
        %v2258 = vunpack.c.h.b16 %v879
        %v2259 = vunpack.c.l.b16 %v880
        %v2260 = vunpack.c.h.b16 %v880
        %v2261 = vunpack.c.l.b16 %v881
        %v2262 = vunpack.c.h.b16 %v881
        %v2263 = vunpack.c.l.b16 %v882
        %v2264 = vunpack.c.h.b16 %v882
        %v2265 = vunpack.c.l.b16 %v883
        %v2266 = vunpack.c.h.b16 %v883
        %v2267 = vunpack.c.l.b16 %v884
        %v2268 = vunpack.c.h.b16 %v884
        %v2269 = vunpack.c.l.b16 %v885
        %v2270 = vunpack.c.h.b16 %v885
        %v2271 = vunpack.c.l.b16 %v886
        %v2272 = vunpack.c.h.b16 %v886
        %v2273 = vunpack.c.l.b16 %v887
        %v2274 = vunpack.c.h.b16 %v887
        %v2275 = vunpack.c.l.b16 %v888
        %v2276 = vunpack.c.h.b16 %v888
        %v2277 = vunpack.c.l.b16 %v889
        %v2278 = vunpack.c.h.b16 %v889
        %v2279 = vunpack.c.l.b16 %v890
        %v2280 = vunpack.c.h.b16 %v890
        %v2281 = vunpack.c.l.b16 %v891
        %v2282 = vunpack.c.h.b16 %v891
        %v2283 = vunpack.c.l.b16 %v892
        %v2284 = vunpack.c.h.b16 %v892
        %v2285 = vunpack.c.l.b16 %v893
        %v2286 = vunpack.c.h.b16 %v893
        %v2287 = vunpack.c.l.b16 %v894
        %v2288 = vunpack.c.h.b16 %v894
        %v2289 = vunpack.c.l.b16 %v895
        %v2290 = vunpack.c.h.b16 %v895
        %v2291 = vunpack.c.l.b16 %v896
        %v2292 = vunpack.c.h.b16 %v896
        %v2293 = vunpack.c.l.b16 %v897
        %v2294 = vunpack.c.h.b16 %v897
        %v2295 = vunpack.c.l.b16 %v898
        %v2296 = vunpack.c.h.b16 %v898
        %v2297 = vunpack.c.l.b16 %v899
        %v2298 = vunpack.c.h.b16 %v899
        %v2299 = vunpack.c.l.b16 %v900
        %v2300 = vunpack.c.h.b16 %v900
        %v2301 = vunpack.c.l.b16 %v901
        %v2302 = vunpack.c.h.b16 %v901
        %v2303 = vunpack.c.l.b16 %v902
        %v2304 = vunpack.c.h.b16 %v902
        %v2305 = vunpack.c.l.b16 %v903
        %v2306 = vunpack.c.h.b16 %v903
        %v2307 = vunpack.c.l.b16 %v904
        %v2308 = vunpack.c.h.b16 %v904
        %v2309 = vunpack.c.l.b16 %v905
        %v2310 = vunpack.c.h.b16 %v905
        %v2311 = vunpack.c.l.b16 %v906
        %v2312 = vunpack.c.h.b16 %v906
        %v2313 = vunpack.c.l.b16 %v907
        %v2314 = vunpack.c.h.b16 %v907
        %v2315 = vunpack.c.l.b16 %v908
        %v2316 = vunpack.c.h.b16 %v908
        %v2317 = vunpack.c.l.b16 %v909
        %v2318 = vunpack.c.h.b16 %v909
        %v2319 = vunpack.c.l.b16 %v910
        %v2320 = vunpack.c.h.b16 %v910
        %v2321 = vunpack.c.l.b16 %v911
        %v2322 = vunpack.c.h.b16 %v911
        %v2323 = vunpack.c.l.b16 %v912
        %v2324 = vunpack.c.h.b16 %v912
        %v2325 = vunpack.c.l.b16 %v913
        %v2326 = vunpack.c.h.b16 %v913
        %v2327 = vunpack.c.l.b16 %v914
        %v2328 = vunpack.c.h.b16 %v914
        %v2329 = vunpack.c.l.b16 %v915
        %v2330 = vunpack.c.h.b16 %v915
        %v2331 = vunpack.c.l.b16 %v916
        %v2332 = vunpack.c.h.b16 %v916
        %v2333 = vunpack.c.l.b16 %v917
        %v2334 = vunpack.c.h.b16 %v917
        %v2335 = vunpack.c.l.b16 %v918
        %v2336 = vunpack.c.h.b16 %v918
        %v2337 = vunpack.c.l.b16 %v919
        %v2338 = vunpack.c.h.b16 %v919
        %v2339 = vunpack.c.l.b16 %v920
        %v2340 = vunpack.c.h.b16 %v920
        %v2341 = vunpack.c.l.b16 %v921
        %v2342 = vunpack.c.h.b16 %v921
        %v2343 = vunpack.c.l.b16 %v922
        %v2344 = vunpack.c.h.b16 %v922
        %v2345 = vunpack.c.l.b16 %v923
        %v2346 = vunpack.c.h.b16 %v923
        %v2347 = vunpack.c.l.b16 %v924
        %v2348 = vunpack.c.h.b16 %v924
        %v2349 = vunpack.c.l.b16 %v925
        %v2350 = vunpack.c.h.b16 %v925
        %v2351 = vunpack.c.l.b16 %v926
        %v2352 = vunpack.c.h.b16 %v926
        %v2353 = vunpack.c.l.b16 %v927
        %v2354 = vunpack.c.h.b16 %v927
        %v2355 = vunpack.c.l.b16 %v928
        %v2356 = vunpack.c.h.b16 %v928
        %v2357 = vunpack.c.l.b16 %v929
        %v2358 = vunpack.c.h.b16 %v929
        %v2359 = vunpack.c.l.b16 %v930
        %v2360 = vunpack.c.h.b16 %v930
        %v2361 = vunpack.c.l.b16 %v931
        %v2362 = vunpack.c.h.b16 %v931
        %v2363 = vunpack.c.l.b16 %v932
        %v2364 = vunpack.c.h.b16 %v932
        %v2365 = vunpack.c.l.b16 %v933
        %v2366 = vunpack.c.h.b16 %v933
        %v2367 = vunpack.c.l.b16 %v934
        %v2368 = vunpack.c.h.b16 %v934
        %v2369 = vunpack.c.l.b16 %v935
        %v2370 = vunpack.c.h.b16 %v935
        %v2371 = vunpack.c.l.b16 %v936
        %v2372 = vunpack.c.h.b16 %v936
        %v2373 = vunpack.c.l.b16 %v937
        %v2374 = vunpack.c.h.b16 %v937
        %v2375 = vunpack.c.l.b16 %v938
        %v2376 = vunpack.c.h.b16 %v938
        %v2377 = vunpack.c.l.b16 %v939
        %v2378 = vunpack.c.h.b16 %v939
        %v2379 = vunpack.c.l.b16 %v940
        %v2380 = vunpack.c.h.b16 %v940
        %v2381 = vunpack.c.l.b16 %v941
        %v2382 = vunpack.c.h.b16 %v941
        %v2383 = vunpack.c.l.b16 %v942
        %v2384 = vunpack.c.h.b16 %v942
        %v2385 = vunpack.c.l.b16 %v943
        %v2386 = vunpack.c.h.b16 %v943
        %v2387 = vunpack.c.l.b16 %v944
        %v2388 = vunpack.c.h.b16 %v944
        %v2389 = vunpack.c.l.b16 %v945
        %v2390 = vunpack.c.h.b16 %v945
        %v2391 = vunpack.c.l.b16 %v946
        %v2392 = vunpack.c.h.b16 %v946
        %v2393 = vunpack.c.l.b16 %v947
        %v2394 = vunpack.c.h.b16 %v947
        %v2395 = vunpack.c.l.b16 %v948
        %v2396 = vunpack.c.h.b16 %v948
        %v2397 = vunpack.c.l.b16 %v949
        %v2398 = vunpack.c.h.b16 %v949
        %v2399 = vunpack.c.l.b16 %v950
        %v2400 = vunpack.c.h.b16 %v950
        %v2401 = vunpack.c.l.b16 %v951
        %v2402 = vunpack.c.h.b16 %v951
        %v2403 = vunpack.c.l.b16 %v952
        %v2404 = vunpack.c.h.b16 %v952
        %v2405 = vunpack.c.l.b16 %v953
        %v2406 = vunpack.c.h.b16 %v953
        %v2407 = vunpack.c.l.b16 %v954
        %v2408 = vunpack.c.h.b16 %v954
        %v2409 = vunpack.c.l.b16 %v955
        %v2410 = vunpack.c.h.b16 %v955
        %v2411 = vunpack.c.l.b16 %v956
        %v2412 = vunpack.c.h.b16 %v956
        %v2413 = vunpack.c.l.b16 %v957
        %v2414 = vunpack.c.h.b16 %v957
        %v2415 = vunpack.c.l.b16 %v958
        %v2416 = vunpack.c.h.b16 %v958
        %v2417 = vunpack.c.l.b16 %v959
        %v2418 = vunpack.c.h.b16 %v959
        %v2419 = vunpack.c.l.b16 %v960
        %v2420 = vunpack.c.h.b16 %v960
        %v2421 = vunpack.c.l.b16 %v961
        %v2422 = vunpack.c.h.b16 %v961
        %v2423 = vunpack.c.l.b16 %v962
        %v2424 = vunpack.c.h.b16 %v962
        %v2425 = vunpack.c.l.b16 %v963
        %v2426 = vunpack.c.h.b16 %v963
        %v2427 = vunpack.c.l.b16 %v964
        %v2428 = vunpack.c.h.b16 %v964
        %v2429 = vunpack.c.l.b16 %v965
        %v2430 = vunpack.c.h.b16 %v965
        %v2431 = vunpack.c.l.b16 %v966
        %v2432 = vunpack.c.h.b16 %v966
        %v2433 = vunpack.c.l.b16 %v967
        %v2434 = vunpack.c.h.b16 %v967
        %v2435 = vunpack.c.l.b16 %v968
        %v2436 = vunpack.c.h.b16 %v968
        %v2437 = vunpack.c.l.b16 %v969
        %v2438 = vunpack.c.h.b16 %v969
        %v2439 = vunpack.c.l.b16 %v970
        %v2440 = vunpack.c.h.b16 %v970
        %v2441 = vunpack.c.l.b16 %v971
        %v2442 = vunpack.c.h.b16 %v971
        %v2443 = vunpack.c.l.b16 %v972
        %v2444 = vunpack.c.h.b16 %v972
        %v2445 = vunpack.c.l.b16 %v973
        %v2446 = vunpack.c.h.b16 %v973
        %v2447 = vunpack.c.l.b16 %v974
        %v2448 = vunpack.c.h.b16 %v974
        %v2449 = vunpack.c.l.b16 %v975
        %v2450 = vunpack.c.h.b16 %v975
        %v2451 = vunpack.c.l.b16 %v976
        %v2452 = vunpack.c.h.b16 %v976
        %v2453 = vunpack.c.l.b16 %v977
        %v2454 = vunpack.c.h.b16 %v977
        %v2455 = vunpack.c.l.b16 %v978
        %v2456 = vunpack.c.h.b16 %v978
        %v2457 = vunpack.c.l.b16 %v979
        %v2458 = vunpack.c.h.b16 %v979
        %v2459 = vunpack.c.l.b16 %v980
        %v2460 = vunpack.c.h.b16 %v980
        %v2461 = vunpack.c.l.b16 %v981
        %v2462 = vunpack.c.h.b16 %v981
        %v2463 = vunpack.c.l.b16 %v982
        %v2464 = vunpack.c.h.b16 %v982
        %v2465 = vunpack.c.l.b16 %v983
        %v2466 = vunpack.c.h.b16 %v983
        %v2467 = vunpack.c.l.b16 %v984
        %v2468 = vunpack.c.h.b16 %v984
        %v2469 = vunpack.c.l.b16 %v985
        %v2470 = vunpack.c.h.b16 %v985
        %v2471 = vunpack.c.l.b16 %v986
        %v2472 = vunpack.c.h.b16 %v986
        %v2473 = vunpack.c.l.b16 %v987
        %v2474 = vunpack.c.h.b16 %v987
        %v2475 = vunpack.c.l.b16 %v988
        %v2476 = vunpack.c.h.b16 %v988
        %v2477 = vunpack.c.l.b16 %v989
        %v2478 = vunpack.c.h.b16 %v989
        %v2479 = vunpack.c.l.b16 %v990
        %v2480 = vunpack.c.h.b16 %v990
        %v2481 = vunpack.c.l.b16 %v991
        %v2482 = vunpack.c.h.b16 %v991
        %v2483 = vunpack.c.l.b16 %v992
        %v2484 = vunpack.c.h.b16 %v992
        %v2485 = vunpack.c.l.b16 %v993
        %v2486 = vunpack.c.h.b16 %v993
        %v2487 = vunpack.c.l.b16 %v994
        %v2488 = vunpack.c.h.b16 %v994
        %v2489 = vunpack.c.l.b16 %v995
        %v2490 = vunpack.c.h.b16 %v995
        %v2491 = vunpack.c.l.b16 %v996
        %v2492 = vunpack.c.h.b16 %v996
        %v2493 = vunpack.c.l.b16 %v997
        %v2494 = vunpack.c.h.b16 %v997
        %v2495 = vunpack.c.l.b16 %v998
        %v2496 = vunpack.c.h.b16 %v998
        %v2497 = vunpack.c.l.b16 %v999
        %v2498 = vunpack.c.h.b16 %v999
        %v2499 = vunpack.c.l.b16 %v1000
        %v2500 = vunpack.c.h.b16 %v1000
        %v2501 = vunpack.c.l.b16 %v1001
        %v2502 = vunpack.c.h.b16 %v1001
        %v2503 = vunpack.c.l.b16 %v1002
        %v2504 = vunpack.c.h.b16 %v1002
        %v2505 = vunpack.c.l.b16 %v1003
        %v2506 = vunpack.c.h.b16 %v1003
        %v2507 = vunpack.c.l.b16 %v1004
        %v2508 = vunpack.c.h.b16 %v1004
        %v2509 = vunpack.c.l.b16 %v1005
        %v2510 = vunpack.c.h.b16 %v1005
        %v2511 = vunpack.c.l.b16 %v1006
        %v2512 = vunpack.c.h.b16 %v1006
        %v2513 = vunpack.c.l.b16 %v1007
        %v2514 = vunpack.c.h.b16 %v1007
        %v2515 = vunpack.c.l.b16 %v1008
        %v2516 = vunpack.c.h.b16 %v1008
        %v2517 = vunpack.c.l.b16 %v1009
        %v2518 = vunpack.c.h.b16 %v1009
        %v2519 = vunpack.c.l.b16 %v1010
        %v2520 = vunpack.c.h.b16 %v1010
        %v2521 = vunpack.c.l.b16 %v1011
        %v2522 = vunpack.c.h.b16 %v1011
        %v2523 = vunpack.c.l.b16 %v1012
        %v2524 = vunpack.c.h.b16 %v1012
        %v2525 = vunpack.c.l.b16 %v1013
        %v2526 = vunpack.c.h.b16 %v1013
        %v2527 = vunpack.c.l.b16 %v1014
        %v2528 = vunpack.c.h.b16 %v1014
        %v2529 = vunpack.c.l.b16 %v1015
        %v2530 = vunpack.c.h.b16 %v1015
        %v2531 = vunpack.c.l.b16 %v1016
        %v2532 = vunpack.c.h.b16 %v1016
        %v2533 = vunpack.c.l.b16 %v1017
        %v2534 = vunpack.c.h.b16 %v1017
        %v2535 = vunpack.c.l.b16 %v1018
        %v2536 = vunpack.c.h.b16 %v1018
        %v2537 = vunpack.c.l.b16 %v1019
        %v2538 = vunpack.c.h.b16 %v1019
        %v2539 = vunpack.c.l.b16 %v1020
        %v2540 = vunpack.c.h.b16 %v1020
        %v2541 = vunpack.c.l.b16 %v1021
        %v2542 = vunpack.c.h.b16 %v1021
        %v2543 = vunpack.c.l.b16 %v1022
        %v2544 = vunpack.c.h.b16 %v1022
        %v2545 = vunpack.c.l.b16 %v1023
        %v2546 = vunpack.c.h.b16 %v1023
        %v2547 = vunpack.c.l.b16 %v1024
        %v2548 = vunpack.c.h.b16 %v1024
        %v2549 = vunpack.c.l.b16 %v1025
        %v2550 = vunpack.c.h.b16 %v1025
        %v2551 = vunpack.c.l.b16 %v1026
        %v2552 = vunpack.c.h.b16 %v1026
        %v2553 = vunpack.c.l.b16 %v1027
        %v2554 = vunpack.c.h.b16 %v1027
        %v2555 = vunpack.c.l.b16 %v1028
        %v2556 = vunpack.c.h.b16 %v1028
        %v2557 = vunpack.c.l.b16 %v1029
        %v2558 = vunpack.c.h.b16 %v1029
        %v2559 = vunpack.c.l.b16 %v1030
        %v2560 = vunpack.c.h.b16 %v1030
        %v2561 = vunpack.c.l.b16 %v1031
        %v2562 = vunpack.c.h.b16 %v1031
        %v2563 = vunpack.c.l.b16 %v1032
        %v2564 = vunpack.c.h.b16 %v1032
        %v2565 = vunpack.c.l.b16 %v1033
        %v2566 = vunpack.c.h.b16 %v1033
        %v2567 = vunpack.c.l.b16 %v1034
        %v2568 = vunpack.c.h.b16 %v1034
        %v2569 = vunpack.c.l.b16 %v1035
        %v2570 = vunpack.c.h.b16 %v1035
        %v2571 = vunpack.c.l.b16 %v1036
        %v2572 = vunpack.c.h.b16 %v1036
        %v2573 = vpack.c.b16 %v1551, %v1549
        %v2574 = vpack.c.b16 %v1552, %v1550
        %v2575 = vpack.c.b16 %v1555, %v1553
        %v2576 = vpack.c.b16 %v1556, %v1554
        %v2577 = vpack.c.b16 %v1559, %v1557
        %v2578 = vpack.c.b16 %v1560, %v1558
        %v2579 = vpack.c.b16 %v1563, %v1561
        %v2580 = vpack.c.b16 %v1564, %v1562
        %v2581 = vpack.c.b16 %v1567, %v1565
        %v2582 = vpack.c.b16 %v1568, %v1566
        %v2583 = vpack.c.b16 %v1571, %v1569
        %v2584 = vpack.c.b16 %v1572, %v1570
        %v2585 = vpack.c.b16 %v1575, %v1573
        %v2586 = vpack.c.b16 %v1576, %v1574
        %v2587 = vpack.c.b16 %v1579, %v1577
        %v2588 = vpack.c.b16 %v1580, %v1578
        %v2589 = vpack.c.b16 %v1583, %v1581
        %v2590 = vpack.c.b16 %v1584, %v1582
        %v2591 = vpack.c.b16 %v1587, %v1585
        %v2592 = vpack.c.b16 %v1588, %v1586
        %v2593 = vpack.c.b16 %v1591, %v1589
        %v2594 = vpack.c.b16 %v1592, %v1590
        %v2595 = vpack.c.b16 %v1595, %v1593
        %v2596 = vpack.c.b16 %v1596, %v1594
        %v2597 = vpack.c.b16 %v1599, %v1597
        %v2598 = vpack.c.b16 %v1600, %v1598
        %v2599 = vpack.c.b16 %v1603, %v1601
        %v2600 = vpack.c.b16 %v1604, %v1602
        %v2601 = vpack.c.b16 %v1607, %v1605
        %v2602 = vpack.c.b16 %v1608, %v1606
        %v2603 = vpack.c.b16 %v1611, %v1609
        %v2604 = vpack.c.b16 %v1612, %v1610
        %v2605 = vpack.c.b16 %v1615, %v1613
        %v2606 = vpack.c.b16 %v1616, %v1614
        %v2607 = vpack.c.b16 %v1619, %v1617
        %v2608 = vpack.c.b16 %v1620, %v1618
        %v2609 = vpack.c.b16 %v1623, %v1621
        %v2610 = vpack.c.b16 %v1624, %v1622
        %v2611 = vpack.c.b16 %v1627, %v1625
        %v2612 = vpack.c.b16 %v1628, %v1626
        %v2613 = vpack.c.b16 %v1631, %v1629
        %v2614 = vpack.c.b16 %v1632, %v1630
        %v2615 = vpack.c.b16 %v1635, %v1633
        %v2616 = vpack.c.b16 %v1636, %v1634
        %v2617 = vpack.c.b16 %v1639, %v1637
        %v2618 = vpack.c.b16 %v1640, %v1638
        %v2619 = vpack.c.b16 %v1643, %v1641
        %v2620 = vpack.c.b16 %v1644, %v1642
        %v2621 = vpack.c.b16 %v1647, %v1645
        %v2622 = vpack.c.b16 %v1648, %v1646
        %v2623 = vpack.c.b16 %v1651, %v1649
        %v2624 = vpack.c.b16 %v1652, %v1650
        %v2625 = vpack.c.b16 %v1655, %v1653
        %v2626 = vpack.c.b16 %v1656, %v1654
        %v2627 = vpack.c.b16 %v1659, %v1657
        %v2628 = vpack.c.b16 %v1660, %v1658
        %v2629 = vpack.c.b16 %v1663, %v1661
        %v2630 = vpack.c.b16 %v1664, %v1662
        %v2631 = vpack.c.b16 %v1667, %v1665
        %v2632 = vpack.c.b16 %v1668, %v1666
        %v2633 = vpack.c.b16 %v1671, %v1669
        %v2634 = vpack.c.b16 %v1672, %v1670
        %v2635 = vpack.c.b16 %v1675, %v1673
        %v2636 = vpack.c.b16 %v1676, %v1674
        %v2637 = vpack.c.b16 %v1679, %v1677
        %v2638 = vpack.c.b16 %v1680, %v1678
        %v2639 = vpack.c.b16 %v1683, %v1681
        %v2640 = vpack.c.b16 %v1684, %v1682
        %v2641 = vpack.c.b16 %v1687, %v1685
        %v2642 = vpack.c.b16 %v1688, %v1686
        %v2643 = vpack.c.b16 %v1691, %v1689
        %v2644 = vpack.c.b16 %v1692, %v1690
        %v2645 = vpack.c.b16 %v1695, %v1693
        %v2646 = vpack.c.b16 %v1696, %v1694
        %v2647 = vpack.c.b16 %v1699, %v1697
        %v2648 = vpack.c.b16 %v1700, %v1698
        %v2649 = vpack.c.b16 %v1703, %v1701
        %v2650 = vpack.c.b16 %v1704, %v1702
        %v2651 = vpack.c.b16 %v1707, %v1705
        %v2652 = vpack.c.b16 %v1708, %v1706
        %v2653 = vpack.c.b16 %v1711, %v1709
        %v2654 = vpack.c.b16 %v1712, %v1710
        %v2655 = vpack.c.b16 %v1715, %v1713
        %v2656 = vpack.c.b16 %v1716, %v1714
        %v2657 = vpack.c.b16 %v1719, %v1717
        %v2658 = vpack.c.b16 %v1720, %v1718
        %v2659 = vpack.c.b16 %v1723, %v1721
        %v2660 = vpack.c.b16 %v1724, %v1722
        %v2661 = vpack.c.b16 %v1727, %v1725
        %v2662 = vpack.c.b16 %v1728, %v1726
        %v2663 = vpack.c.b16 %v1731, %v1729
        %v2664 = vpack.c.b16 %v1732, %v1730
        %v2665 = vpack.c.b16 %v1735, %v1733
        %v2666 = vpack.c.b16 %v1736, %v1734
        %v2667 = vpack.c.b16 %v1739, %v1737
        %v2668 = vpack.c.b16 %v1740, %v1738
        %v2669 = vpack.c.b16 %v1743, %v1741
        %v2670 = vpack.c.b16 %v1744, %v1742
        %v2671 = vpack.c.b16 %v1747, %v1745
        %v2672 = vpack.c.b16 %v1748, %v1746
        %v2673 = vpack.c.b16 %v1751, %v1749
        %v2674 = vpack.c.b16 %v1752, %v1750
        %v2675 = vpack.c.b16 %v1755, %v1753
        %v2676 = vpack.c.b16 %v1756, %v1754
        %v2677 = vpack.c.b16 %v1759, %v1757
        %v2678 = vpack.c.b16 %v1760, %v1758
        %v2679 = vpack.c.b16 %v1763, %v1761
        %v2680 = vpack.c.b16 %v1764, %v1762
        %v2681 = vpack.c.b16 %v1767, %v1765
        %v2682 = vpack.c.b16 %v1768, %v1766
        %v2683 = vpack.c.b16 %v1771, %v1769
        %v2684 = vpack.c.b16 %v1772, %v1770
        %v2685 = vpack.c.b16 %v1775, %v1773
        %v2686 = vpack.c.b16 %v1776, %v1774
        %v2687 = vpack.c.b16 %v1779, %v1777
        %v2688 = vpack.c.b16 %v1780, %v1778
        %v2689 = vpack.c.b16 %v1783, %v1781
        %v2690 = vpack.c.b16 %v1784, %v1782
        %v2691 = vpack.c.b16 %v1787, %v1785
        %v2692 = vpack.c.b16 %v1788, %v1786
        %v2693 = vpack.c.b16 %v1791, %v1789
        %v2694 = vpack.c.b16 %v1792, %v1790
        %v2695 = vpack.c.b16 %v1795, %v1793
        %v2696 = vpack.c.b16 %v1796, %v1794
        %v2697 = vpack.c.b16 %v1799, %v1797
        %v2698 = vpack.c.b16 %v1800, %v1798
        %v2699 = vpack.c.b16 %v1803, %v1801
        %v2700 = vpack.c.b16 %v1804, %v1802
        %v2701 = vpack.c.b16 %v1807, %v1805
        %v2702 = vpack.c.b16 %v1808, %v1806
        %v2703 = vpack.c.b16 %v1811, %v1809
        %v2704 = vpack.c.b16 %v1812, %v1810
        %v2705 = vpack.c.b16 %v1815, %v1813
        %v2706 = vpack.c.b16 %v1816, %v1814
        %v2707 = vpack.c.b16 %v1819, %v1817
        %v2708 = vpack.c.b16 %v1820, %v1818
        %v2709 = vpack.c.b16 %v1823, %v1821
        %v2710 = vpack.c.b16 %v1824, %v1822
        %v2711 = vpack.c.b16 %v1827, %v1825
        %v2712 = vpack.c.b16 %v1828, %v1826
        %v2713 = vpack.c.b16 %v1831, %v1829
        %v2714 = vpack.c.b16 %v1832, %v1830
        %v2715 = vpack.c.b16 %v1835, %v1833
        %v2716 = vpack.c.b16 %v1836, %v1834
        %v2717 = vpack.c.b16 %v1839, %v1837
        %v2718 = vpack.c.b16 %v1840, %v1838
        %v2719 = vpack.c.b16 %v1843, %v1841
        %v2720 = vpack.c.b16 %v1844, %v1842
        %v2721 = vpack.c.b16 %v1847, %v1845
        %v2722 = vpack.c.b16 %v1848, %v1846
        %v2723 = vpack.c.b16 %v1851, %v1849
        %v2724 = vpack.c.b16 %v1852, %v1850
        %v2725 = vpack.c.b16 %v1855, %v1853
        %v2726 = vpack.c.b16 %v1856, %v1854
        %v2727 = vpack.c.b16 %v1859, %v1857
        %v2728 = vpack.c.b16 %v1860, %v1858
        %v2729 = vpack.c.b16 %v1863, %v1861
        %v2730 = vpack.c.b16 %v1864, %v1862
        %v2731 = vpack.c.b16 %v1867, %v1865
        %v2732 = vpack.c.b16 %v1868, %v1866
        %v2733 = vpack.c.b16 %v1871, %v1869
        %v2734 = vpack.c.b16 %v1872, %v1870
        %v2735 = vpack.c.b16 %v1875, %v1873
        %v2736 = vpack.c.b16 %v1876, %v1874
        %v2737 = vpack.c.b16 %v1879, %v1877
        %v2738 = vpack.c.b16 %v1880, %v1878
        %v2739 = vpack.c.b16 %v1883, %v1881
        %v2740 = vpack.c.b16 %v1884, %v1882
        %v2741 = vpack.c.b16 %v1887, %v1885
        %v2742 = vpack.c.b16 %v1888, %v1886
        %v2743 = vpack.c.b16 %v1891, %v1889
        %v2744 = vpack.c.b16 %v1892, %v1890
        %v2745 = vpack.c.b16 %v1895, %v1893
        %v2746 = vpack.c.b16 %v1896, %v1894
        %v2747 = vpack.c.b16 %v1899, %v1897
        %v2748 = vpack.c.b16 %v1900, %v1898
        %v2749 = vpack.c.b16 %v1903, %v1901
        %v2750 = vpack.c.b16 %v1904, %v1902
        %v2751 = vpack.c.b16 %v1907, %v1905
        %v2752 = vpack.c.b16 %v1908, %v1906
        %v2753 = vpack.c.b16 %v1911, %v1909
        %v2754 = vpack.c.b16 %v1912, %v1910
        %v2755 = vpack.c.b16 %v1915, %v1913
        %v2756 = vpack.c.b16 %v1916, %v1914
        %v2757 = vpack.c.b16 %v1919, %v1917
        %v2758 = vpack.c.b16 %v1920, %v1918
        %v2759 = vpack.c.b16 %v1923, %v1921
        %v2760 = vpack.c.b16 %v1924, %v1922
        %v2761 = vpack.c.b16 %v1927, %v1925
        %v2762 = vpack.c.b16 %v1928, %v1926
        %v2763 = vpack.c.b16 %v1931, %v1929
        %v2764 = vpack.c.b16 %v1932, %v1930
        %v2765 = vpack.c.b16 %v1935, %v1933
        %v2766 = vpack.c.b16 %v1936, %v1934
        %v2767 = vpack.c.b16 %v1939, %v1937
        %v2768 = vpack.c.b16 %v1940, %v1938
        %v2769 = vpack.c.b16 %v1943, %v1941
        %v2770 = vpack.c.b16 %v1944, %v1942
        %v2771 = vpack.c.b16 %v1947, %v1945
        %v2772 = vpack.c.b16 %v1948, %v1946
        %v2773 = vpack.c.b16 %v1951, %v1949
        %v2774 = vpack.c.b16 %v1952, %v1950
        %v2775 = vpack.c.b16 %v1955, %v1953
        %v2776 = vpack.c.b16 %v1956, %v1954
        %v2777 = vpack.c.b16 %v1959, %v1957
        %v2778 = vpack.c.b16 %v1960, %v1958
        %v2779 = vpack.c.b16 %v1963, %v1961
        %v2780 = vpack.c.b16 %v1964, %v1962
        %v2781 = vpack.c.b16 %v1967, %v1965
        %v2782 = vpack.c.b16 %v1968, %v1966
        %v2783 = vpack.c.b16 %v1971, %v1969
        %v2784 = vpack.c.b16 %v1972, %v1970
        %v2785 = vpack.c.b16 %v1975, %v1973
        %v2786 = vpack.c.b16 %v1976, %v1974
        %v2787 = vpack.c.b16 %v1979, %v1977
        %v2788 = vpack.c.b16 %v1980, %v1978
        %v2789 = vpack.c.b16 %v1983, %v1981
        %v2790 = vpack.c.b16 %v1984, %v1982
        %v2791 = vpack.c.b16 %v1987, %v1985
        %v2792 = vpack.c.b16 %v1988, %v1986
        %v2793 = vpack.c.b16 %v1991, %v1989
        %v2794 = vpack.c.b16 %v1992, %v1990
        %v2795 = vpack.c.b16 %v1995, %v1993
        %v2796 = vpack.c.b16 %v1996, %v1994
        %v2797 = vpack.c.b16 %v1999, %v1997
        %v2798 = vpack.c.b16 %v2000, %v1998
        %v2799 = vpack.c.b16 %v2003, %v2001
        %v2800 = vpack.c.b16 %v2004, %v2002
        %v2801 = vpack.c.b16 %v2007, %v2005
        %v2802 = vpack.c.b16 %v2008, %v2006
        %v2803 = vpack.c.b16 %v2011, %v2009
        %v2804 = vpack.c.b16 %v2012, %v2010
        %v2805 = vpack.c.b16 %v2015, %v2013
        %v2806 = vpack.c.b16 %v2016, %v2014
        %v2807 = vpack.c.b16 %v2019, %v2017
        %v2808 = vpack.c.b16 %v2020, %v2018
        %v2809 = vpack.c.b16 %v2023, %v2021
        %v2810 = vpack.c.b16 %v2024, %v2022
        %v2811 = vpack.c.b16 %v2027, %v2025
        %v2812 = vpack.c.b16 %v2028, %v2026
        %v2813 = vpack.c.b16 %v2031, %v2029
        %v2814 = vpack.c.b16 %v2032, %v2030
        %v2815 = vpack.c.b16 %v2035, %v2033
        %v2816 = vpack.c.b16 %v2036, %v2034
        %v2817 = vpack.c.b16 %v2039, %v2037
        %v2818 = vpack.c.b16 %v2040, %v2038
        %v2819 = vpack.c.b16 %v2043, %v2041
        %v2820 = vpack.c.b16 %v2044, %v2042
        %v2821 = vpack.c.b16 %v2047, %v2045
        %v2822 = vpack.c.b16 %v2048, %v2046
        %v2823 = vpack.c.b16 %v2051, %v2049
        %v2824 = vpack.c.b16 %v2052, %v2050
        %v2825 = vpack.c.b16 %v2055, %v2053
        %v2826 = vpack.c.b16 %v2056, %v2054
        %v2827 = vpack.c.b16 %v2059, %v2057
        %v2828 = vpack.c.b16 %v2060, %v2058
        %v2829 = vpack.c.b16 %v2063, %v2061
        %v2830 = vpack.c.b16 %v2064, %v2062
        %v2831 = vpack.c.b16 %v2067, %v2065
        %v2832 = vpack.c.b16 %v2068, %v2066
        %v2833 = vpack.c.b16 %v2071, %v2069
        %v2834 = vpack.c.b16 %v2072, %v2070
        %v2835 = vpack.c.b16 %v2075, %v2073
        %v2836 = vpack.c.b16 %v2076, %v2074
        %v2837 = vpack.c.b16 %v2079, %v2077
        %v2838 = vpack.c.b16 %v2080, %v2078
        %v2839 = vpack.c.b16 %v2083, %v2081
        %v2840 = vpack.c.b16 %v2084, %v2082
        %v2841 = vpack.c.b16 %v2087, %v2085
        %v2842 = vpack.c.b16 %v2088, %v2086
        %v2843 = vpack.c.b16 %v2091, %v2089
        %v2844 = vpack.c.b16 %v2092, %v2090
        %v2845 = vpack.c.b16 %v2095, %v2093
        %v2846 = vpack.c.b16 %v2096, %v2094
        %v2847 = vpack.c.b16 %v2099, %v2097
        %v2848 = vpack.c.b16 %v2100, %v2098
        %v2849 = vpack.c.b16 %v2103, %v2101
        %v2850 = vpack.c.b16 %v2104, %v2102
        %v2851 = vpack.c.b16 %v2107, %v2105
        %v2852 = vpack.c.b16 %v2108, %v2106
        %v2853 = vpack.c.b16 %v2111, %v2109
        %v2854 = vpack.c.b16 %v2112, %v2110
        %v2855 = vpack.c.b16 %v2115, %v2113
        %v2856 = vpack.c.b16 %v2116, %v2114
        %v2857 = vpack.c.b16 %v2119, %v2117
        %v2858 = vpack.c.b16 %v2120, %v2118
        %v2859 = vpack.c.b16 %v2123, %v2121
        %v2860 = vpack.c.b16 %v2124, %v2122
        %v2861 = vpack.c.b16 %v2127, %v2125
        %v2862 = vpack.c.b16 %v2128, %v2126
        %v2863 = vpack.c.b16 %v2131, %v2129
        %v2864 = vpack.c.b16 %v2132, %v2130
        %v2865 = vpack.c.b16 %v2135, %v2133
        %v2866 = vpack.c.b16 %v2136, %v2134
        %v2867 = vpack.c.b16 %v2139, %v2137
        %v2868 = vpack.c.b16 %v2140, %v2138
        %v2869 = vpack.c.b16 %v2143, %v2141
        %v2870 = vpack.c.b16 %v2144, %v2142
        %v2871 = vpack.c.b16 %v2147, %v2145
        %v2872 = vpack.c.b16 %v2148, %v2146
        %v2873 = vpack.c.b16 %v2151, %v2149
        %v2874 = vpack.c.b16 %v2152, %v2150
        %v2875 = vpack.c.b16 %v2155, %v2153
        %v2876 = vpack.c.b16 %v2156, %v2154
        %v2877 = vpack.c.b16 %v2159, %v2157
        %v2878 = vpack.c.b16 %v2160, %v2158
        %v2879 = vpack.c.b16 %v2163, %v2161
        %v2880 = vpack.c.b16 %v2164, %v2162
        %v2881 = vpack.c.b16 %v2167, %v2165
        %v2882 = vpack.c.b16 %v2168, %v2166
        %v2883 = vpack.c.b16 %v2171, %v2169
        %v2884 = vpack.c.b16 %v2172, %v2170
        %v2885 = vpack.c.b16 %v2175, %v2173
        %v2886 = vpack.c.b16 %v2176, %v2174
        %v2887 = vpack.c.b16 %v2179, %v2177
        %v2888 = vpack.c.b16 %v2180, %v2178
        %v2889 = vpack.c.b16 %v2183, %v2181
        %v2890 = vpack.c.b16 %v2184, %v2182
        %v2891 = vpack.c.b16 %v2187, %v2185
        %v2892 = vpack.c.b16 %v2188, %v2186
        %v2893 = vpack.c.b16 %v2191, %v2189
        %v2894 = vpack.c.b16 %v2192, %v2190
        %v2895 = vpack.c.b16 %v2195, %v2193
        %v2896 = vpack.c.b16 %v2196, %v2194
        %v2897 = vpack.c.b16 %v2199, %v2197
        %v2898 = vpack.c.b16 %v2200, %v2198
        %v2899 = vpack.c.b16 %v2203, %v2201
        %v2900 = vpack.c.b16 %v2204, %v2202
        %v2901 = vpack.c.b16 %v2207, %v2205
        %v2902 = vpack.c.b16 %v2208, %v2206
        %v2903 = vpack.c.b16 %v2211, %v2209
        %v2904 = vpack.c.b16 %v2212, %v2210
        %v2905 = vpack.c.b16 %v2215, %v2213
        %v2906 = vpack.c.b16 %v2216, %v2214
        %v2907 = vpack.c.b16 %v2219, %v2217
        %v2908 = vpack.c.b16 %v2220, %v2218
        %v2909 = vpack.c.b16 %v2223, %v2221
        %v2910 = vpack.c.b16 %v2224, %v2222
        %v2911 = vpack.c.b16 %v2227, %v2225
        %v2912 = vpack.c.b16 %v2228, %v2226
        %v2913 = vpack.c.b16 %v2231, %v2229
        %v2914 = vpack.c.b16 %v2232, %v2230
        %v2915 = vpack.c.b16 %v2235, %v2233
        %v2916 = vpack.c.b16 %v2236, %v2234
        %v2917 = vpack.c.b16 %v2239, %v2237
        %v2918 = vpack.c.b16 %v2240, %v2238
        %v2919 = vpack.c.b16 %v2243, %v2241
        %v2920 = vpack.c.b16 %v2244, %v2242
        %v2921 = vpack.c.b16 %v2247, %v2245
        %v2922 = vpack.c.b16 %v2248, %v2246
        %v2923 = vpack.c.b16 %v2251, %v2249
        %v2924 = vpack.c.b16 %v2252, %v2250
        %v2925 = vpack.c.b16 %v2255, %v2253
        %v2926 = vpack.c.b16 %v2256, %v2254
        %v2927 = vpack.c.b16 %v2259, %v2257
        %v2928 = vpack.c.b16 %v2260, %v2258
        %v2929 = vpack.c.b16 %v2263, %v2261
        %v2930 = vpack.c.b16 %v2264, %v2262
        %v2931 = vpack.c.b16 %v2267, %v2265
        %v2932 = vpack.c.b16 %v2268, %v2266
        %v2933 = vpack.c.b16 %v2271, %v2269
        %v2934 = vpack.c.b16 %v2272, %v2270
        %v2935 = vpack.c.b16 %v2275, %v2273
        %v2936 = vpack.c.b16 %v2276, %v2274
        %v2937 = vpack.c.b16 %v2279, %v2277
        %v2938 = vpack.c.b16 %v2280, %v2278
        %v2939 = vpack.c.b16 %v2283, %v2281
        %v2940 = vpack.c.b16 %v2284, %v2282
        %v2941 = vpack.c.b16 %v2287, %v2285
        %v2942 = vpack.c.b16 %v2288, %v2286
        %v2943 = vpack.c.b16 %v2291, %v2289
        %v2944 = vpack.c.b16 %v2292, %v2290
        %v2945 = vpack.c.b16 %v2295, %v2293
        %v2946 = vpack.c.b16 %v2296, %v2294
        %v2947 = vpack.c.b16 %v2299, %v2297
        %v2948 = vpack.c.b16 %v2300, %v2298
        %v2949 = vpack.c.b16 %v2303, %v2301
        %v2950 = vpack.c.b16 %v2304, %v2302
        %v2951 = vpack.c.b16 %v2307, %v2305
        %v2952 = vpack.c.b16 %v2308, %v2306
        %v2953 = vpack.c.b16 %v2311, %v2309
        %v2954 = vpack.c.b16 %v2312, %v2310
        %v2955 = vpack.c.b16 %v2315, %v2313
        %v2956 = vpack.c.b16 %v2316, %v2314
        %v2957 = vpack.c.b16 %v2319, %v2317
        %v2958 = vpack.c.b16 %v2320, %v2318
        %v2959 = vpack.c.b16 %v2323, %v2321
        %v2960 = vpack.c.b16 %v2324, %v2322
        %v2961 = vpack.c.b16 %v2327, %v2325
        %v2962 = vpack.c.b16 %v2328, %v2326
        %v2963 = vpack.c.b16 %v2331, %v2329
        %v2964 = vpack.c.b16 %v2332, %v2330
        %v2965 = vpack.c.b16 %v2335, %v2333
        %v2966 = vpack.c.b16 %v2336, %v2334
        %v2967 = vpack.c.b16 %v2339, %v2337
        %v2968 = vpack.c.b16 %v2340, %v2338
        %v2969 = vpack.c.b16 %v2343, %v2341
        %v2970 = vpack.c.b16 %v2344, %v2342
        %v2971 = vpack.c.b16 %v2347, %v2345
        %v2972 = vpack.c.b16 %v2348, %v2346
        %v2973 = vpack.c.b16 %v2351, %v2349
        %v2974 = vpack.c.b16 %v2352, %v2350
        %v2975 = vpack.c.b16 %v2355, %v2353
        %v2976 = vpack.c.b16 %v2356, %v2354
        %v2977 = vpack.c.b16 %v2359, %v2357
        %v2978 = vpack.c.b16 %v2360, %v2358
        %v2979 = vpack.c.b16 %v2363, %v2361
        %v2980 = vpack.c.b16 %v2364, %v2362
        %v2981 = vpack.c.b16 %v2367, %v2365
        %v2982 = vpack.c.b16 %v2368, %v2366
        %v2983 = vpack.c.b16 %v2371, %v2369
        %v2984 = vpack.c.b16 %v2372, %v2370
        %v2985 = vpack.c.b16 %v2375, %v2373
        %v2986 = vpack.c.b16 %v2376, %v2374
        %v2987 = vpack.c.b16 %v2379, %v2377
        %v2988 = vpack.c.b16 %v2380, %v2378
        %v2989 = vpack.c.b16 %v2383, %v2381
        %v2990 = vpack.c.b16 %v2384, %v2382
        %v2991 = vpack.c.b16 %v2387, %v2385
        %v2992 = vpack.c.b16 %v2388, %v2386
        %v2993 = vpack.c.b16 %v2391, %v2389
        %v2994 = vpack.c.b16 %v2392, %v2390
        %v2995 = vpack.c.b16 %v2395, %v2393
        %v2996 = vpack.c.b16 %v2396, %v2394
        %v2997 = vpack.c.b16 %v2399, %v2397
        %v2998 = vpack.c.b16 %v2400, %v2398
        %v2999 = vpack.c.b16 %v2403, %v2401
        %v3000 = vpack.c.b16 %v2404, %v2402
        %v3001 = vpack.c.b16 %v2407, %v2405
        %v3002 = vpack.c.b16 %v2408, %v2406
        %v3003 = vpack.c.b16 %v2411, %v2409
        %v3004 = vpack.c.b16 %v2412, %v2410
        %v3005 = vpack.c.b16 %v2415, %v2413
        %v3006 = vpack.c.b16 %v2416, %v2414
        %v3007 = vpack.c.b16 %v2419, %v2417
        %v3008 = vpack.c.b16 %v2420, %v2418
        %v3009 = vpack.c.b16 %v2423, %v2421
        %v3010 = vpack.c.b16 %v2424, %v2422
        %v3011 = vpack.c.b16 %v2427, %v2425
        %v3012 = vpack.c.b16 %v2428, %v2426
        %v3013 = vpack.c.b16 %v2431, %v2429
        %v3014 = vpack.c.b16 %v2432, %v2430
        %v3015 = vpack.c.b16 %v2435, %v2433
        %v3016 = vpack.c.b16 %v2436, %v2434
        %v3017 = vpack.c.b16 %v2439, %v2437
        %v3018 = vpack.c.b16 %v2440, %v2438
        %v3019 = vpack.c.b16 %v2443, %v2441
        %v3020 = vpack.c.b16 %v2444, %v2442
        %v3021 = vpack.c.b16 %v2447, %v2445
        %v3022 = vpack.c.b16 %v2448, %v2446
        %v3023 = vpack.c.b16 %v2451, %v2449
        %v3024 = vpack.c.b16 %v2452, %v2450
        %v3025 = vpack.c.b16 %v2455, %v2453
        %v3026 = vpack.c.b16 %v2456, %v2454
        %v3027 = vpack.c.b16 %v2459, %v2457
        %v3028 = vpack.c.b16 %v2460, %v2458
        %v3029 = vpack.c.b16 %v2463, %v2461
        %v3030 = vpack.c.b16 %v2464, %v2462
        %v3031 = vpack.c.b16 %v2467, %v2465
        %v3032 = vpack.c.b16 %v2468, %v2466
        %v3033 = vpack.c.b16 %v2471, %v2469
        %v3034 = vpack.c.b16 %v2472, %v2470
        %v3035 = vpack.c.b16 %v2475, %v2473
        %v3036 = vpack.c.b16 %v2476, %v2474
        %v3037 = vpack.c.b16 %v2479, %v2477
        %v3038 = vpack.c.b16 %v2480, %v2478
        %v3039 = vpack.c.b16 %v2483, %v2481
        %v3040 = vpack.c.b16 %v2484, %v2482
        %v3041 = vpack.c.b16 %v2487, %v2485
        %v3042 = vpack.c.b16 %v2488, %v2486
        %v3043 = vpack.c.b16 %v2491, %v2489
        %v3044 = vpack.c.b16 %v2492, %v2490
        %v3045 = vpack.c.b16 %v2495, %v2493
        %v3046 = vpack.c.b16 %v2496, %v2494
        %v3047 = vpack.c.b16 %v2499, %v2497
        %v3048 = vpack.c.b16 %v2500, %v2498
        %v3049 = vpack.c.b16 %v2503, %v2501
        %v3050 = vpack.c.b16 %v2504, %v2502
        %v3051 = vpack.c.b16 %v2507, %v2505
        %v3052 = vpack.c.b16 %v2508, %v2506
        %v3053 = vpack.c.b16 %v2511, %v2509
        %v3054 = vpack.c.b16 %v2512, %v2510
        %v3055 = vpack.c.b16 %v2515, %v2513
        %v3056 = vpack.c.b16 %v2516, %v2514
        %v3057 = vpack.c.b16 %v2519, %v2517
        %v3058 = vpack.c.b16 %v2520, %v2518
        %v3059 = vpack.c.b16 %v2523, %v2521
        %v3060 = vpack.c.b16 %v2524, %v2522
        %v3061 = vpack.c.b16 %v2527, %v2525
        %v3062 = vpack.c.b16 %v2528, %v2526
        %v3063 = vpack.c.b16 %v2531, %v2529
        %v3064 = vpack.c.b16 %v2532, %v2530
        %v3065 = vpack.c.b16 %v2535, %v2533
        %v3066 = vpack.c.b16 %v2536, %v2534
        %v3067 = vpack.c.b16 %v2539, %v2537
        %v3068 = vpack.c.b16 %v2540, %v2538
        %v3069 = vpack.c.b16 %v2543, %v2541
        %v3070 = vpack.c.b16 %v2544, %v2542
        %v3071 = vpack.c.b16 %v2547, %v2545
        %v3072 = vpack.c.b16 %v2548, %v2546
        %v3073 = vpack.c.b16 %v2551, %v2549
        %v3074 = vpack.c.b16 %v2552, %v2550
        %v3075 = vpack.c.b16 %v2555, %v2553
        %v3076 = vpack.c.b16 %v2556, %v2554
        %v3077 = vpack.c.b16 %v2559, %v2557
        %v3078 = vpack.c.b16 %v2560, %v2558
        %v3079 = vpack.c.b16 %v2563, %v2561
        %v3080 = vpack.c.b16 %v2564, %v2562
        %v3081 = vpack.c.b16 %v2567, %v2565
        %v3082 = vpack.c.b16 %v2568, %v2566
        %v3083 = vpack.c.b16 %v2571, %v2569
        %v3084 = vpack.c.b16 %v2572, %v2570
        %3597 = vmatprep.subr.bf16.mxu0 %v2574
        %3598 = vmatpush1.bf16.msra.mxu0 %v2573
        %3599 = vmatprep.subr.bf16.mxu0 %v2576
        %3600 = vmatpush1.bf16.msra.mxu0 %v2575
        %3601 = vmatprep.subr.bf16.mxu0 %v2578
        %3602 = vmatpush1.bf16.msra.mxu0 %v2577
        %3603 = vmatprep.subr.bf16.mxu0 %v2580
        %3604 = vmatpush1.bf16.msra.mxu0 %v2579
        %3605 = vmatprep.subr.bf16.mxu0 %v2582
        %3606 = vmatpush1.bf16.msra.mxu0 %v2581
        %3607 = vmatprep.subr.bf16.mxu0 %v2584
        %3608 = vmatpush1.bf16.msra.mxu0 %v2583
        %3609 = vmatprep.subr.bf16.mxu0 %v2586
        %3610 = vmatpush1.bf16.msra.mxu0 %v2585
        %3611 = vmatprep.subr.bf16.mxu0 %v2588
        %3612 = vmatpush1.bf16.msra.mxu0 %v2587
        %3613 = vmatprep.subr.bf16.mxu0 %v2590
        %3614 = vmatpush1.bf16.msra.mxu0 %v2589
        %3615 = vmatprep.subr.bf16.mxu0 %v2592
        %3616 = vmatpush1.bf16.msra.mxu0 %v2591
        %3617 = vmatprep.subr.bf16.mxu0 %v2594
        %3618 = vmatpush1.bf16.msra.mxu0 %v2593
        %3619 = vmatprep.subr.bf16.mxu0 %v2596
        %3620 = vmatpush1.bf16.msra.mxu0 %v2595
        %3621 = vmatprep.subr.bf16.mxu0 %v2598
        %3622 = vmatpush1.bf16.msra.mxu0 %v2597
        %3623 = vmatprep.subr.bf16.mxu0 %v2600
        %3624 = vmatpush1.bf16.msra.mxu0 %v2599
        %3625 = vmatprep.subr.bf16.mxu0 %v2602
        %3626 = vmatpush1.bf16.msra.mxu0 %v2601
        %3627 = vmatprep.subr.bf16.mxu0 %v2604
        %3628 = vmatpush1.bf16.msra.mxu0 %v2603
        %3629 = vmatprep.mubr.bf16.mxu0 %v494
        %3630 = vmatmul.mubr.bf16.gmra.mrb[0].mxu0 %v493
        %v3631 = vpop.f32.mrb[0].mxu0
        %v3632 = vadd.f32 0.0, %v3631
        %v3633 = vpop.f32.mrb[0].mxu0
        %v3634 = vadd.f32 0.0, %v3633
        %v3635 = vpop.f32.mrb[0].mxu0
        %v3636 = vpop.f32.mrb[0].mxu0
        %3637 = vdwg.mxu0
        %3638 = vmatprep.subr.bf16.mxu0 %v2606
        %3639 = vmatpush1.bf16.msra.mxu0 %v2605
        %3640 = vmatprep.subr.bf16.mxu0 %v2608
        %3641 = vmatpush1.bf16.msra.mxu0 %v2607
        %3642 = vmatprep.subr.bf16.mxu0 %v2610
        %3643 = vmatpush1.bf16.msra.mxu0 %v2609
        %3644 = vmatprep.subr.bf16.mxu0 %v2612
        %3645 = vmatpush1.bf16.msra.mxu0 %v2611
        %3646 = vmatprep.subr.bf16.mxu0 %v2614
        %3647 = vmatpush1.bf16.msra.mxu0 %v2613
        %3648 = vmatprep.subr.bf16.mxu0 %v2616
        %3649 = vmatpush1.bf16.msra.mxu0 %v2615
        %3650 = vmatprep.subr.bf16.mxu0 %v2618
        %3651 = vmatpush1.bf16.msra.mxu0 %v2617
        %3652 = vmatprep.subr.bf16.mxu0 %v2620
        %3653 = vmatpush1.bf16.msra.mxu0 %v2619
        %3654 = vmatprep.subr.bf16.mxu0 %v2622
        %3655 = vmatpush1.bf16.msra.mxu0 %v2621
        %3656 = vmatprep.subr.bf16.mxu0 %v2624
        %3657 = vmatpush1.bf16.msra.mxu0 %v2623
        %3658 = vmatprep.subr.bf16.mxu0 %v2626
        %3659 = vmatpush1.bf16.msra.mxu0 %v2625
        %3660 = vmatprep.subr.bf16.mxu0 %v2628
        %3661 = vmatpush1.bf16.msra.mxu0 %v2627
        %3662 = vmatprep.subr.bf16.mxu0 %v2630
        %3663 = vmatpush1.bf16.msra.mxu0 %v2629
        %3664 = vmatprep.subr.bf16.mxu0 %v2632
        %3665 = vmatpush1.bf16.msra.mxu0 %v2631
        %3666 = vmatprep.subr.bf16.mxu0 %v2634
        %3667 = vmatpush1.bf16.msra.mxu0 %v2633
        %3668 = vmatprep.subr.bf16.mxu0 %v2636
        %3669 = vmatpush1.bf16.msra.mxu0 %v2635
        %3670 = vmatprep.mubr.bf16.mxu0 %v496
        %3671 = vmatmul.mubr.bf16.gmra.mrb[0].mxu0 %v495
        %v3672 = vpop.f32.mrb[0].mxu0
        %v3673 = vadd.f32 %v3632, %v3672
        %v3674 = vpop.f32.mrb[0].mxu0
        %v3675 = vadd.f32 %v3634, %v3674
        %v3676 = vpop.f32.mrb[0].mxu0
        %v3677 = vpop.f32.mrb[0].mxu0
        %3678 = vdwg.mxu0
        %3679 = vmatprep.subr.bf16.mxu0 %v2638
        %3680 = vmatpush1.bf16.msra.mxu0 %v2637
        %3681 = vmatprep.subr.bf16.mxu0 %v2640
        %3682 = vmatpush1.bf16.msra.mxu0 %v2639
        %3683 = vmatprep.subr.bf16.mxu0 %v2642
        %3684 = vmatpush1.bf16.msra.mxu0 %v2641
        %3685 = vmatprep.subr.bf16.mxu0 %v2644
        %3686 = vmatpush1.bf16.msra.mxu0 %v2643
        %3687 = vmatprep.subr.bf16.mxu0 %v2646
        %3688 = vmatpush1.bf16.msra.mxu0 %v2645
        %3689 = vmatprep.subr.bf16.mxu0 %v2648
        %3690 = vmatpush1.bf16.msra.mxu0 %v2647
        %3691 = vmatprep.subr.bf16.mxu0 %v2650
        %3692 = vmatpush1.bf16.msra.mxu0 %v2649
        %3693 = vmatprep.subr.bf16.mxu0 %v2652
        %3694 = vmatpush1.bf16.msra.mxu0 %v2651
        %3695 = vmatprep.subr.bf16.mxu0 %v2654
        %3696 = vmatpush1.bf16.msra.mxu0 %v2653
        %3697 = vmatprep.subr.bf16.mxu0 %v2656
        %3698 = vmatpush1.bf16.msra.mxu0 %v2655
        %3699 = vmatprep.subr.bf16.mxu0 %v2658
        %3700 = vmatpush1.bf16.msra.mxu0 %v2657
        %3701 = vmatprep.subr.bf16.mxu0 %v2660
        %3702 = vmatpush1.bf16.msra.mxu0 %v2659
        %3703 = vmatprep.subr.bf16.mxu0 %v2662
        %3704 = vmatpush1.bf16.msra.mxu0 %v2661
        %3705 = vmatprep.subr.bf16.mxu0 %v2664
        %3706 = vmatpush1.bf16.msra.mxu0 %v2663
        %3707 = vmatprep.subr.bf16.mxu0 %v2666
        %3708 = vmatpush1.bf16.msra.mxu0 %v2665
        %3709 = vmatprep.subr.bf16.mxu0 %v2668
        %3710 = vmatpush1.bf16.msra.mxu0 %v2667
        %3711 = vmatprep.mubr.bf16.mxu0 %v498
        %3712 = vmatmul.mubr.bf16.gmra.mrb[0].mxu0 %v497
        %v3713 = vpop.f32.mrb[0].mxu0
        %v3714 = vadd.f32 %v3673, %v3713
        %v3715 = vpop.f32.mrb[0].mxu0
        %v3716 = vadd.f32 %v3675, %v3715
        %v3717 = vpop.f32.mrb[0].mxu0
        %v3718 = vpop.f32.mrb[0].mxu0
        %3719 = vdwg.mxu0
        %3720 = vmatprep.subr.bf16.mxu0 %v2670
        %3721 = vmatpush1.bf16.msra.mxu0 %v2669
        %3722 = vmatprep.subr.bf16.mxu0 %v2672
        %3723 = vmatpush1.bf16.msra.mxu0 %v2671
        %3724 = vmatprep.subr.bf16.mxu0 %v2674
        %3725 = vmatpush1.bf16.msra.mxu0 %v2673
        %3726 = vmatprep.subr.bf16.mxu0 %v2676
        %3727 = vmatpush1.bf16.msra.mxu0 %v2675
        %3728 = vmatprep.subr.bf16.mxu0 %v2678
        %3729 = vmatpush1.bf16.msra.mxu0 %v2677
        %3730 = vmatprep.subr.bf16.mxu0 %v2680
        %3731 = vmatpush1.bf16.msra.mxu0 %v2679
        %3732 = vmatprep.subr.bf16.mxu0 %v2682
        %3733 = vmatpush1.bf16.msra.mxu0 %v2681
        %3734 = vmatprep.subr.bf16.mxu0 %v2684
        %3735 = vmatpush1.bf16.msra.mxu0 %v2683
        %3736 = vmatprep.subr.bf16.mxu0 %v2686
        %3737 = vmatpush1.bf16.msra.mxu0 %v2685
        %3738 = vmatprep.subr.bf16.mxu0 %v2688
        %3739 = vmatpush1.bf16.msra.mxu0 %v2687
        %3740 = vmatprep.subr.bf16.mxu0 %v2690
        %3741 = vmatpush1.bf16.msra.mxu0 %v2689
        %3742 = vmatprep.subr.bf16.mxu0 %v2692
        %3743 = vmatpush1.bf16.msra.mxu0 %v2691
        %3744 = vmatprep.subr.bf16.mxu0 %v2694
        %3745 = vmatpush1.bf16.msra.mxu0 %v2693
        %3746 = vmatprep.subr.bf16.mxu0 %v2696
        %3747 = vmatpush1.bf16.msra.mxu0 %v2695
        %3748 = vmatprep.subr.bf16.mxu0 %v2698
        %3749 = vmatpush1.bf16.msra.mxu0 %v2697
        %3750 = vmatprep.subr.bf16.mxu0 %v2700
        %3751 = vmatpush1.bf16.msra.mxu0 %v2699
        %3752 = vmatprep.mubr.bf16.mxu0 %v500
        %3753 = vmatmul.mubr.bf16.gmra.mrb[0].mxu0 %v499
        %v3754 = vpop.f32.mrb[0].mxu0
        %v3755 = vadd.f32 %v3714, %v3754
        %v3756 = vpop.f32.mrb[0].mxu0
        %v3757 = vadd.f32 %v3716, %v3756
        %v3758 = vpop.f32.mrb[0].mxu0
        %v3759 = vpop.f32.mrb[0].mxu0
        %3760 = vdwg.mxu0
        %3761 = vmatprep.subr.bf16.mxu0 %v2702
        %3762 = vmatpush1.bf16.msra.mxu0 %v2701
        %3763 = vmatprep.subr.bf16.mxu0 %v2704
        %3764 = vmatpush1.bf16.msra.mxu0 %v2703
        %3765 = vmatprep.subr.bf16.mxu0 %v2706
        %3766 = vmatpush1.bf16.msra.mxu0 %v2705
        %3767 = vmatprep.subr.bf16.mxu0 %v2708
        %3768 = vmatpush1.bf16.msra.mxu0 %v2707
        %3769 = vmatprep.subr.bf16.mxu0 %v2710
        %3770 = vmatpush1.bf16.msra.mxu0 %v2709
        %3771 = vmatprep.subr.bf16.mxu0 %v2712
        %3772 = vmatpush1.bf16.msra.mxu0 %v2711
        %3773 = vmatprep.subr.bf16.mxu0 %v2714
        %3774 = vmatpush1.bf16.msra.mxu0 %v2713
        %3775 = vmatprep.subr.bf16.mxu0 %v2716
        %3776 = vmatpush1.bf16.msra.mxu0 %v2715
        %3777 = vmatprep.subr.bf16.mxu0 %v2718
        %3778 = vmatpush1.bf16.msra.mxu0 %v2717
        %3779 = vmatprep.subr.bf16.mxu0 %v2720
        %3780 = vmatpush1.bf16.msra.mxu0 %v2719
        %3781 = vmatprep.subr.bf16.mxu0 %v2722
        %3782 = vmatpush1.bf16.msra.mxu0 %v2721
        %3783 = vmatprep.subr.bf16.mxu0 %v2724
        %3784 = vmatpush1.bf16.msra.mxu0 %v2723
        %3785 = vmatprep.subr.bf16.mxu0 %v2726
        %3786 = vmatpush1.bf16.msra.mxu0 %v2725
        %3787 = vmatprep.subr.bf16.mxu0 %v2728
        %3788 = vmatpush1.bf16.msra.mxu0 %v2727
        %3789 = vmatprep.subr.bf16.mxu0 %v2730
        %3790 = vmatpush1.bf16.msra.mxu0 %v2729
        %3791 = vmatprep.subr.bf16.mxu0 %v2732
        %3792 = vmatpush1.bf16.msra.mxu0 %v2731
        %3793 = vmatprep.mubr.bf16.mxu0 %v502
        %3794 = vmatmul.mubr.bf16.gmra.mrb[0].mxu0 %v501
        %v3795 = vpop.f32.mrb[0].mxu0
        %v3796 = vadd.f32 %v3755, %v3795
        %v3797 = vpop.f32.mrb[0].mxu0
        %v3798 = vadd.f32 %v3757, %v3797
        %v3799 = vpop.f32.mrb[0].mxu0
        %v3800 = vpop.f32.mrb[0].mxu0
        %3801 = vdwg.mxu0
        %3802 = vmatprep.subr.bf16.mxu0 %v2734
        %3803 = vmatpush1.bf16.msra.mxu0 %v2733
        %3804 = vmatprep.subr.bf16.mxu0 %v2736
        %3805 = vmatpush1.bf16.msra.mxu0 %v2735
        %3806 = vmatprep.subr.bf16.mxu0 %v2738
        %3807 = vmatpush1.bf16.msra.mxu0 %v2737
        %3808 = vmatprep.subr.bf16.mxu0 %v2740
        %3809 = vmatpush1.bf16.msra.mxu0 %v2739
        %3810 = vmatprep.subr.bf16.mxu0 %v2742
        %3811 = vmatpush1.bf16.msra.mxu0 %v2741
        %3812 = vmatprep.subr.bf16.mxu0 %v2744
        %3813 = vmatpush1.bf16.msra.mxu0 %v2743
        %3814 = vmatprep.subr.bf16.mxu0 %v2746
        %3815 = vmatpush1.bf16.msra.mxu0 %v2745
        %3816 = vmatprep.subr.bf16.mxu0 %v2748
        %3817 = vmatpush1.bf16.msra.mxu0 %v2747
        %3818 = vmatprep.subr.bf16.mxu0 %v2750
        %3819 = vmatpush1.bf16.msra.mxu0 %v2749
        %3820 = vmatprep.subr.bf16.mxu0 %v2752
        %3821 = vmatpush1.bf16.msra.mxu0 %v2751
        %3822 = vmatprep.subr.bf16.mxu0 %v2754
        %3823 = vmatpush1.bf16.msra.mxu0 %v2753
        %3824 = vmatprep.subr.bf16.mxu0 %v2756
        %3825 = vmatpush1.bf16.msra.mxu0 %v2755
        %3826 = vmatprep.subr.bf16.mxu0 %v2758
        %3827 = vmatpush1.bf16.msra.mxu0 %v2757
        %3828 = vmatprep.subr.bf16.mxu0 %v2760
        %3829 = vmatpush1.bf16.msra.mxu0 %v2759
        %3830 = vmatprep.subr.bf16.mxu0 %v2762
        %3831 = vmatpush1.bf16.msra.mxu0 %v2761
        %3832 = vmatprep.subr.bf16.mxu0 %v2764
        %3833 = vmatpush1.bf16.msra.mxu0 %v2763
        %3834 = vmatprep.mubr.bf16.mxu0 %v504
        %3835 = vmatmul.mubr.bf16.gmra.mrb[0].mxu0 %v503
        %v3836 = vpop.f32.mrb[0].mxu0
        %v3837 = vadd.f32 %v3796, %v3836
        %v3838 = vpop.f32.mrb[0].mxu0
        %v3839 = vadd.f32 %v3798, %v3838
        %v3840 = vpop.f32.mrb[0].mxu0
        %v3841 = vpop.f32.mrb[0].mxu0
        %3842 = vdwg.mxu0
        %3843 = vmatprep.subr.bf16.mxu0 %v2766
        %3844 = vmatpush1.bf16.msra.mxu0 %v2765
        %3845 = vmatprep.subr.bf16.mxu0 %v2768
        %3846 = vmatpush1.bf16.msra.mxu0 %v2767
        %3847 = vmatprep.subr.bf16.mxu0 %v2770
        %3848 = vmatpush1.bf16.msra.mxu0 %v2769
        %3849 = vmatprep.subr.bf16.mxu0 %v2772
        %3850 = vmatpush1.bf16.msra.mxu0 %v2771
        %3851 = vmatprep.subr.bf16.mxu0 %v2774
        %3852 = vmatpush1.bf16.msra.mxu0 %v2773
        %3853 = vmatprep.subr.bf16.mxu0 %v2776
        %3854 = vmatpush1.bf16.msra.mxu0 %v2775
        %3855 = vmatprep.subr.bf16.mxu0 %v2778
        %3856 = vmatpush1.bf16.msra.mxu0 %v2777
        %3857 = vmatprep.subr.bf16.mxu0 %v2780
        %3858 = vmatpush1.bf16.msra.mxu0 %v2779
        %3859 = vmatprep.subr.bf16.mxu0 %v2782
        %3860 = vmatpush1.bf16.msra.mxu0 %v2781
        %3861 = vmatprep.subr.bf16.mxu0 %v2784
        %3862 = vmatpush1.bf16.msra.mxu0 %v2783
        %3863 = vmatprep.subr.bf16.mxu0 %v2786
        %3864 = vmatpush1.bf16.msra.mxu0 %v2785
        %3865 = vmatprep.subr.bf16.mxu0 %v2788
        %3866 = vmatpush1.bf16.msra.mxu0 %v2787
        %3867 = vmatprep.subr.bf16.mxu0 %v2790
        %3868 = vmatpush1.bf16.msra.mxu0 %v2789
        %3869 = vmatprep.subr.bf16.mxu0 %v2792
        %3870 = vmatpush1.bf16.msra.mxu0 %v2791
        %3871 = vmatprep.subr.bf16.mxu0 %v2794
        %3872 = vmatpush1.bf16.msra.mxu0 %v2793
        %3873 = vmatprep.subr.bf16.mxu0 %v2796
        %3874 = vmatpush1.bf16.msra.mxu0 %v2795
        %3875 = vmatprep.mubr.bf16.mxu0 %v506
        %3876 = vmatmul.mubr.bf16.gmra.mrb[0].mxu0 %v505
        %v3877 = vpop.f32.mrb[0].mxu0
        %v3878 = vadd.f32 %v3837, %v3877
        %v3879 = vpop.f32.mrb[0].mxu0
        %v3880 = vadd.f32 %v3839, %v3879
        %v3881 = vpop.f32.mrb[0].mxu0
        %v3882 = vpop.f32.mrb[0].mxu0
        %3883 = vdwg.mxu0
        %3884 = vmatprep.subr.bf16.mxu0 %v2798
        %3885 = vmatpush1.bf16.msra.mxu0 %v2797
        %3886 = vmatprep.subr.bf16.mxu0 %v2800
        %3887 = vmatpush1.bf16.msra.mxu0 %v2799
        %3888 = vmatprep.subr.bf16.mxu0 %v2802
        %3889 = vmatpush1.bf16.msra.mxu0 %v2801
        %3890 = vmatprep.subr.bf16.mxu0 %v2804
        %3891 = vmatpush1.bf16.msra.mxu0 %v2803
        %3892 = vmatprep.subr.bf16.mxu0 %v2806
        %3893 = vmatpush1.bf16.msra.mxu0 %v2805
        %3894 = vmatprep.subr.bf16.mxu0 %v2808
        %3895 = vmatpush1.bf16.msra.mxu0 %v2807
        %3896 = vmatprep.subr.bf16.mxu0 %v2810
        %3897 = vmatpush1.bf16.msra.mxu0 %v2809
        %3898 = vmatprep.subr.bf16.mxu0 %v2812
        %3899 = vmatpush1.bf16.msra.mxu0 %v2811
        %3900 = vmatprep.subr.bf16.mxu0 %v2814
        %3901 = vmatpush1.bf16.msra.mxu0 %v2813
        %3902 = vmatprep.subr.bf16.mxu0 %v2816
        %3903 = vmatpush1.bf16.msra.mxu0 %v2815
        %3904 = vmatprep.subr.bf16.mxu0 %v2818
        %3905 = vmatpush1.bf16.msra.mxu0 %v2817
        %3906 = vmatprep.subr.bf16.mxu0 %v2820
        %3907 = vmatpush1.bf16.msra.mxu0 %v2819
        %3908 = vmatprep.subr.bf16.mxu0 %v2822
        %3909 = vmatpush1.bf16.msra.mxu0 %v2821
        %3910 = vmatprep.subr.bf16.mxu0 %v2824
        %3911 = vmatpush1.bf16.msra.mxu0 %v2823
        %3912 = vmatprep.subr.bf16.mxu0 %v2826
        %3913 = vmatpush1.bf16.msra.mxu0 %v2825
        %3914 = vmatprep.subr.bf16.mxu0 %v2828
        %3915 = vmatpush1.bf16.msra.mxu0 %v2827
        %3916 = vmatprep.mubr.bf16.mxu0 %v508
        %3917 = vmatmul.mubr.bf16.gmra.mrb[0].mxu0 %v507
        %v3918 = vpop.f32.mrb[0].mxu0
        %v3919 = vadd.f32 %v3878, %v3918
        %v3920 = vpop.f32.mrb[0].mxu0
        %v3921 = vadd.f32 %v3880, %v3920
        %v3922 = vpop.f32.mrb[0].mxu0
        %v3923 = vpop.f32.mrb[0].mxu0
        %3924 = vdwg.mxu0
        %3925 = vmatprep.subr.bf16.mxu0 %v2830
        %3926 = vmatpush1.bf16.msra.mxu0 %v2829
        %3927 = vmatprep.subr.bf16.mxu0 %v2832
        %3928 = vmatpush1.bf16.msra.mxu0 %v2831
        %3929 = vmatprep.subr.bf16.mxu0 %v2834
        %3930 = vmatpush1.bf16.msra.mxu0 %v2833
        %3931 = vmatprep.subr.bf16.mxu0 %v2836
        %3932 = vmatpush1.bf16.msra.mxu0 %v2835
        %3933 = vmatprep.subr.bf16.mxu0 %v2838
        %3934 = vmatpush1.bf16.msra.mxu0 %v2837
        %3935 = vmatprep.subr.bf16.mxu0 %v2840
        %3936 = vmatpush1.bf16.msra.mxu0 %v2839
        %3937 = vmatprep.subr.bf16.mxu0 %v2842
        %3938 = vmatpush1.bf16.msra.mxu0 %v2841
        %3939 = vmatprep.subr.bf16.mxu0 %v2844
        %3940 = vmatpush1.bf16.msra.mxu0 %v2843
        %3941 = vmatprep.subr.bf16.mxu0 %v2846
        %3942 = vmatpush1.bf16.msra.mxu0 %v2845
        %3943 = vmatprep.subr.bf16.mxu0 %v2848
        %3944 = vmatpush1.bf16.msra.mxu0 %v2847
        %3945 = vmatprep.subr.bf16.mxu0 %v2850
        %3946 = vmatpush1.bf16.msra.mxu0 %v2849
        %3947 = vmatprep.subr.bf16.mxu0 %v2852
        %3948 = vmatpush1.bf16.msra.mxu0 %v2851
        %3949 = vmatprep.subr.bf16.mxu0 %v2854
        %3950 = vmatpush1.bf16.msra.mxu0 %v2853
        %3951 = vmatprep.subr.bf16.mxu0 %v2856
        %3952 = vmatpush1.bf16.msra.mxu0 %v2855
        %3953 = vmatprep.subr.bf16.mxu0 %v2858
        %3954 = vmatpush1.bf16.msra.mxu0 %v2857
        %3955 = vmatprep.subr.bf16.mxu0 %v2860
        %3956 = vmatpush1.bf16.msra.mxu0 %v2859
        %3957 = vmatprep.mubr.bf16.mxu0 %v510
        %3958 = vmatmul.mubr.bf16.gmra.mrb[0].mxu0 %v509
        %v3959 = vpop.f32.mrb[0].mxu0
        %v3960 = vadd.f32 %v3919, %v3959
        %v3961 = vpop.f32.mrb[0].mxu0
        %v3962 = vadd.f32 %v3921, %v3961
        %v3963 = vpop.f32.mrb[0].mxu0
        %v3964 = vpop.f32.mrb[0].mxu0
        %3965 = vdwg.mxu0
        %3966 = vmatprep.subr.bf16.mxu0 %v2862
        %3967 = vmatpush1.bf16.msra.mxu0 %v2861
        %3968 = vmatprep.subr.bf16.mxu0 %v2864
        %3969 = vmatpush1.bf16.msra.mxu0 %v2863
        %3970 = vmatprep.subr.bf16.mxu0 %v2866
        %3971 = vmatpush1.bf16.msra.mxu0 %v2865
        %3972 = vmatprep.subr.bf16.mxu0 %v2868
        %3973 = vmatpush1.bf16.msra.mxu0 %v2867
        %3974 = vmatprep.subr.bf16.mxu0 %v2870
        %3975 = vmatpush1.bf16.msra.mxu0 %v2869
        %3976 = vmatprep.subr.bf16.mxu0 %v2872
        %3977 = vmatpush1.bf16.msra.mxu0 %v2871
        %3978 = vmatprep.subr.bf16.mxu0 %v2874
        %3979 = vmatpush1.bf16.msra.mxu0 %v2873
        %3980 = vmatprep.subr.bf16.mxu0 %v2876
        %3981 = vmatpush1.bf16.msra.mxu0 %v2875
        %3982 = vmatprep.subr.bf16.mxu0 %v2878
        %3983 = vmatpush1.bf16.msra.mxu0 %v2877
        %3984 = vmatprep.subr.bf16.mxu0 %v2880
        %3985 = vmatpush1.bf16.msra.mxu0 %v2879
        %3986 = vmatprep.subr.bf16.mxu0 %v2882
        %3987 = vmatpush1.bf16.msra.mxu0 %v2881
        %3988 = vmatprep.subr.bf16.mxu0 %v2884
        %3989 = vmatpush1.bf16.msra.mxu0 %v2883
        %3990 = vmatprep.subr.bf16.mxu0 %v2886
        %3991 = vmatpush1.bf16.msra.mxu0 %v2885
        %3992 = vmatprep.subr.bf16.mxu0 %v2888
        %3993 = vmatpush1.bf16.msra.mxu0 %v2887
        %3994 = vmatprep.subr.bf16.mxu0 %v2890
        %3995 = vmatpush1.bf16.msra.mxu0 %v2889
        %3996 = vmatprep.subr.bf16.mxu0 %v2892
        %3997 = vmatpush1.bf16.msra.mxu0 %v2891
        %3998 = vmatprep.mubr.bf16.mxu0 %v512
        %3999 = vmatmul.mubr.bf16.gmra.mrb[0].mxu0 %v511
        %v4000 = vpop.f32.mrb[0].mxu0
        %v4001 = vadd.f32 %v3960, %v4000
        %v4002 = vpop.f32.mrb[0].mxu0
        %v4003 = vadd.f32 %v3962, %v4002
        %v4004 = vpop.f32.mrb[0].mxu0
        %v4005 = vpop.f32.mrb[0].mxu0
        %4006 = vdwg.mxu0
        %4007 = vmatprep.subr.bf16.mxu0 %v2894
        %4008 = vmatpush1.bf16.msra.mxu0 %v2893
        %4009 = vmatprep.subr.bf16.mxu0 %v2896
        %4010 = vmatpush1.bf16.msra.mxu0 %v2895
        %4011 = vmatprep.subr.bf16.mxu0 %v2898
        %4012 = vmatpush1.bf16.msra.mxu0 %v2897
        %4013 = vmatprep.subr.bf16.mxu0 %v2900
        %4014 = vmatpush1.bf16.msra.mxu0 %v2899
        %4015 = vmatprep.subr.bf16.mxu0 %v2902
        %4016 = vmatpush1.bf16.msra.mxu0 %v2901
        %4017 = vmatprep.subr.bf16.mxu0 %v2904
        %4018 = vmatpush1.bf16.msra.mxu0 %v2903
        %4019 = vmatprep.subr.bf16.mxu0 %v2906
        %4020 = vmatpush1.bf16.msra.mxu0 %v2905
        %4021 = vmatprep.subr.bf16.mxu0 %v2908
        %4022 = vmatpush1.bf16.msra.mxu0 %v2907
        %4023 = vmatprep.subr.bf16.mxu0 %v2910
        %4024 = vmatpush1.bf16.msra.mxu0 %v2909
        %4025 = vmatprep.subr.bf16.mxu0 %v2912
        %4026 = vmatpush1.bf16.msra.mxu0 %v2911
        %4027 = vmatprep.subr.bf16.mxu0 %v2914
        %4028 = vmatpush1.bf16.msra.mxu0 %v2913
        %4029 = vmatprep.subr.bf16.mxu0 %v2916
        %4030 = vmatpush1.bf16.msra.mxu0 %v2915
        %4031 = vmatprep.subr.bf16.mxu0 %v2918
        %4032 = vmatpush1.bf16.msra.mxu0 %v2917
        %4033 = vmatprep.subr.bf16.mxu0 %v2920
        %4034 = vmatpush1.bf16.msra.mxu0 %v2919
        %4035 = vmatprep.subr.bf16.mxu0 %v2922
        %4036 = vmatpush1.bf16.msra.mxu0 %v2921
        %4037 = vmatprep.subr.bf16.mxu0 %v2924
        %4038 = vmatpush1.bf16.msra.mxu0 %v2923
        %4039 = vmatprep.mubr.bf16.mxu0 %v514
        %4040 = vmatmul.mubr.bf16.gmra.mrb[0].mxu0 %v513
        %v4041 = vpop.f32.mrb[0].mxu0
        %v4042 = vadd.f32 %v4001, %v4041
        %v4043 = vpop.f32.mrb[0].mxu0
        %v4044 = vadd.f32 %v4003, %v4043
        %v4045 = vpop.f32.mrb[0].mxu0
        %v4046 = vpop.f32.mrb[0].mxu0
        %4047 = vdwg.mxu0
        %4048 = vmatprep.subr.bf16.mxu0 %v2926
        %4049 = vmatpush1.bf16.msra.mxu0 %v2925
        %4050 = vmatprep.subr.bf16.mxu0 %v2928
        %4051 = vmatpush1.bf16.msra.mxu0 %v2927
        %4052 = vmatprep.subr.bf16.mxu0 %v2930
        %4053 = vmatpush1.bf16.msra.mxu0 %v2929
        %4054 = vmatprep.subr.bf16.mxu0 %v2932
        %4055 = vmatpush1.bf16.msra.mxu0 %v2931
        %4056 = vmatprep.subr.bf16.mxu0 %v2934
        %4057 = vmatpush1.bf16.msra.mxu0 %v2933
        %4058 = vmatprep.subr.bf16.mxu0 %v2936
        %4059 = vmatpush1.bf16.msra.mxu0 %v2935
        %4060 = vmatprep.subr.bf16.mxu0 %v2938
        %4061 = vmatpush1.bf16.msra.mxu0 %v2937
        %4062 = vmatprep.subr.bf16.mxu0 %v2940
        %4063 = vmatpush1.bf16.msra.mxu0 %v2939
        %4064 = vmatprep.subr.bf16.mxu0 %v2942
        %4065 = vmatpush1.bf16.msra.mxu0 %v2941
        %4066 = vmatprep.subr.bf16.mxu0 %v2944
        %4067 = vmatpush1.bf16.msra.mxu0 %v2943
        %4068 = vmatprep.subr.bf16.mxu0 %v2946
        %4069 = vmatpush1.bf16.msra.mxu0 %v2945
        %4070 = vmatprep.subr.bf16.mxu0 %v2948
        %4071 = vmatpush1.bf16.msra.mxu0 %v2947
        %4072 = vmatprep.subr.bf16.mxu0 %v2950
        %4073 = vmatpush1.bf16.msra.mxu0 %v2949
        %4074 = vmatprep.subr.bf16.mxu0 %v2952
        %4075 = vmatpush1.bf16.msra.mxu0 %v2951
        %4076 = vmatprep.subr.bf16.mxu0 %v2954
        %4077 = vmatpush1.bf16.msra.mxu0 %v2953
        %4078 = vmatprep.subr.bf16.mxu0 %v2956
        %4079 = vmatpush1.bf16.msra.mxu0 %v2955
        %4080 = vmatprep.mubr.bf16.mxu0 %v516
        %4081 = vmatmul.mubr.bf16.gmra.mrb[0].mxu0 %v515
        %v4082 = vpop.f32.mrb[0].mxu0
        %v4083 = vadd.f32 %v4042, %v4082
        %v4084 = vpop.f32.mrb[0].mxu0
        %v4085 = vadd.f32 %v4044, %v4084
        %v4086 = vpop.f32.mrb[0].mxu0
        %v4087 = vpop.f32.mrb[0].mxu0
        %4088 = vdwg.mxu0
        %4089 = vmatprep.subr.bf16.mxu0 %v2958
        %4090 = vmatpush1.bf16.msra.mxu0 %v2957
        %4091 = vmatprep.subr.bf16.mxu0 %v2960
        %4092 = vmatpush1.bf16.msra.mxu0 %v2959
        %4093 = vmatprep.subr.bf16.mxu0 %v2962
        %4094 = vmatpush1.bf16.msra.mxu0 %v2961
        %4095 = vmatprep.subr.bf16.mxu0 %v2964
        %4096 = vmatpush1.bf16.msra.mxu0 %v2963
        %4097 = vmatprep.subr.bf16.mxu0 %v2966
        %4098 = vmatpush1.bf16.msra.mxu0 %v2965
        %4099 = vmatprep.subr.bf16.mxu0 %v2968
        %4100 = vmatpush1.bf16.msra.mxu0 %v2967
        %4101 = vmatprep.subr.bf16.mxu0 %v2970
        %4102 = vmatpush1.bf16.msra.mxu0 %v2969
        %4103 = vmatprep.subr.bf16.mxu0 %v2972
        %4104 = vmatpush1.bf16.msra.mxu0 %v2971
        %4105 = vmatprep.subr.bf16.mxu0 %v2974
        %4106 = vmatpush1.bf16.msra.mxu0 %v2973
        %4107 = vmatprep.subr.bf16.mxu0 %v2976
        %4108 = vmatpush1.bf16.msra.mxu0 %v2975
        %4109 = vmatprep.subr.bf16.mxu0 %v2978
        %4110 = vmatpush1.bf16.msra.mxu0 %v2977
        %4111 = vmatprep.subr.bf16.mxu0 %v2980
        %4112 = vmatpush1.bf16.msra.mxu0 %v2979
        %4113 = vmatprep.subr.bf16.mxu0 %v2982
        %4114 = vmatpush1.bf16.msra.mxu0 %v2981
        %4115 = vmatprep.subr.bf16.mxu0 %v2984
        %4116 = vmatpush1.bf16.msra.mxu0 %v2983
        %4117 = vmatprep.subr.bf16.mxu0 %v2986
        %4118 = vmatpush1.bf16.msra.mxu0 %v2985
        %4119 = vmatprep.subr.bf16.mxu0 %v2988
        %4120 = vmatpush1.bf16.msra.mxu0 %v2987
        %4121 = vmatprep.mubr.bf16.mxu0 %v518
        %4122 = vmatmul.mubr.bf16.gmra.mrb[0].mxu0 %v517
        %v4123 = vpop.f32.mrb[0].mxu0
        %v4124 = vadd.f32 %v4083, %v4123
        %v4125 = vpop.f32.mrb[0].mxu0
        %v4126 = vadd.f32 %v4085, %v4125
        %v4127 = vpop.f32.mrb[0].mxu0
        %v4128 = vpop.f32.mrb[0].mxu0
        %4129 = vdwg.mxu0
        %4130 = vmatprep.subr.bf16.mxu0 %v2990
        %4131 = vmatpush1.bf16.msra.mxu0 %v2989
        %4132 = vmatprep.subr.bf16.mxu0 %v2992
        %4133 = vmatpush1.bf16.msra.mxu0 %v2991
        %4134 = vmatprep.subr.bf16.mxu0 %v2994
        %4135 = vmatpush1.bf16.msra.mxu0 %v2993
        %4136 = vmatprep.subr.bf16.mxu0 %v2996
        %4137 = vmatpush1.bf16.msra.mxu0 %v2995
        %4138 = vmatprep.subr.bf16.mxu0 %v2998
        %4139 = vmatpush1.bf16.msra.mxu0 %v2997
        %4140 = vmatprep.subr.bf16.mxu0 %v3000
        %4141 = vmatpush1.bf16.msra.mxu0 %v2999
        %4142 = vmatprep.subr.bf16.mxu0 %v3002
        %4143 = vmatpush1.bf16.msra.mxu0 %v3001
        %4144 = vmatprep.subr.bf16.mxu0 %v3004
        %4145 = vmatpush1.bf16.msra.mxu0 %v3003
        %4146 = vmatprep.subr.bf16.mxu0 %v3006
        %4147 = vmatpush1.bf16.msra.mxu0 %v3005
        %4148 = vmatprep.subr.bf16.mxu0 %v3008
        %4149 = vmatpush1.bf16.msra.mxu0 %v3007
        %4150 = vmatprep.subr.bf16.mxu0 %v3010
        %4151 = vmatpush1.bf16.msra.mxu0 %v3009
        %4152 = vmatprep.subr.bf16.mxu0 %v3012
        %4153 = vmatpush1.bf16.msra.mxu0 %v3011
        %4154 = vmatprep.subr.bf16.mxu0 %v3014
        %4155 = vmatpush1.bf16.msra.mxu0 %v3013
        %4156 = vmatprep.subr.bf16.mxu0 %v3016
        %4157 = vmatpush1.bf16.msra.mxu0 %v3015
        %4158 = vmatprep.subr.bf16.mxu0 %v3018
        %4159 = vmatpush1.bf16.msra.mxu0 %v3017
        %4160 = vmatprep.subr.bf16.mxu0 %v3020
        %4161 = vmatpush1.bf16.msra.mxu0 %v3019
        %4162 = vmatprep.mubr.bf16.mxu0 %v520
        %4163 = vmatmul.mubr.bf16.gmra.mrb[0].mxu0 %v519
        %v4164 = vpop.f32.mrb[0].mxu0
        %v4165 = vadd.f32 %v4124, %v4164
        %v4166 = vpop.f32.mrb[0].mxu0
        %v4167 = vadd.f32 %v4126, %v4166
        %v4168 = vpop.f32.mrb[0].mxu0
        %v4169 = vpop.f32.mrb[0].mxu0
        %4170 = vdwg.mxu0
        %4171 = vmatprep.subr.bf16.mxu0 %v3022
        %4172 = vmatpush1.bf16.msra.mxu0 %v3021
        %4173 = vmatprep.subr.bf16.mxu0 %v3024
        %4174 = vmatpush1.bf16.msra.mxu0 %v3023
        %4175 = vmatprep.subr.bf16.mxu0 %v3026
        %4176 = vmatpush1.bf16.msra.mxu0 %v3025
        %4177 = vmatprep.subr.bf16.mxu0 %v3028
        %4178 = vmatpush1.bf16.msra.mxu0 %v3027
        %4179 = vmatprep.subr.bf16.mxu0 %v3030
        %4180 = vmatpush1.bf16.msra.mxu0 %v3029
        %4181 = vmatprep.subr.bf16.mxu0 %v3032
        %4182 = vmatpush1.bf16.msra.mxu0 %v3031
        %4183 = vmatprep.subr.bf16.mxu0 %v3034
        %4184 = vmatpush1.bf16.msra.mxu0 %v3033
        %4185 = vmatprep.subr.bf16.mxu0 %v3036
        %4186 = vmatpush1.bf16.msra.mxu0 %v3035
        %4187 = vmatprep.subr.bf16.mxu0 %v3038
        %4188 = vmatpush1.bf16.msra.mxu0 %v3037
        %4189 = vmatprep.subr.bf16.mxu0 %v3040
        %4190 = vmatpush1.bf16.msra.mxu0 %v3039
        %4191 = vmatprep.subr.bf16.mxu0 %v3042
        %4192 = vmatpush1.bf16.msra.mxu0 %v3041
        %4193 = vmatprep.subr.bf16.mxu0 %v3044
        %4194 = vmatpush1.bf16.msra.mxu0 %v3043
        %4195 = vmatprep.subr.bf16.mxu0 %v3046
        %4196 = vmatpush1.bf16.msra.mxu0 %v3045
        %4197 = vmatprep.subr.bf16.mxu0 %v3048
        %4198 = vmatpush1.bf16.msra.mxu0 %v3047
        %4199 = vmatprep.subr.bf16.mxu0 %v3050
        %4200 = vmatpush1.bf16.msra.mxu0 %v3049
        %4201 = vmatprep.subr.bf16.mxu0 %v3052
        %4202 = vmatpush1.bf16.msra.mxu0 %v3051
        %4203 = vmatprep.mubr.bf16.mxu0 %v522
        %4204 = vmatmul.mubr.bf16.gmra.mrb[0].mxu0 %v521
        %v4205 = vpop.f32.mrb[0].mxu0
        %v4206 = vadd.f32 %v4165, %v4205
        %v4207 = vpop.f32.mrb[0].mxu0
        %v4208 = vadd.f32 %v4167, %v4207
        %v4209 = vpop.f32.mrb[0].mxu0
        %v4210 = vpop.f32.mrb[0].mxu0
        %4211 = vdwg.mxu0
        %4212 = vmatprep.subr.bf16.mxu0 %v3054
        %4213 = vmatpush1.bf16.msra.mxu0 %v3053
        %4214 = vmatprep.subr.bf16.mxu0 %v3056
        %4215 = vmatpush1.bf16.msra.mxu0 %v3055
        %4216 = vmatprep.subr.bf16.mxu0 %v3058
        %4217 = vmatpush1.bf16.msra.mxu0 %v3057
        %4218 = vmatprep.subr.bf16.mxu0 %v3060
        %4219 = vmatpush1.bf16.msra.mxu0 %v3059
        %4220 = vmatprep.subr.bf16.mxu0 %v3062
        %4221 = vmatpush1.bf16.msra.mxu0 %v3061
        %4222 = vmatprep.subr.bf16.mxu0 %v3064
        %4223 = vmatpush1.bf16.msra.mxu0 %v3063
        %4224 = vmatprep.subr.bf16.mxu0 %v3066
        %4225 = vmatpush1.bf16.msra.mxu0 %v3065
        %4226 = vmatprep.subr.bf16.mxu0 %v3068
        %4227 = vmatpush1.bf16.msra.mxu0 %v3067
        %4228 = vmatprep.subr.bf16.mxu0 %v3070
        %4229 = vmatpush1.bf16.msra.mxu0 %v3069
        %4230 = vmatprep.subr.bf16.mxu0 %v3072
        %4231 = vmatpush1.bf16.msra.mxu0 %v3071
        %4232 = vmatprep.subr.bf16.mxu0 %v3074
        %4233 = vmatpush1.bf16.msra.mxu0 %v3073
        %4234 = vmatprep.subr.bf16.mxu0 %v3076
        %4235 = vmatpush1.bf16.msra.mxu0 %v3075
        %4236 = vmatprep.subr.bf16.mxu0 %v3078
        %4237 = vmatpush1.bf16.msra.mxu0 %v3077
        %4238 = vmatprep.subr.bf16.mxu0 %v3080
        %4239 = vmatpush1.bf16.msra.mxu0 %v3079
        %4240 = vmatprep.subr.bf16.mxu0 %v3082
        %4241 = vmatpush1.bf16.msra.mxu0 %v3081
        %4242 = vmatprep.subr.bf16.mxu0 %v3084
        %4243 = vmatpush1.bf16.msra.mxu0 %v3083
        %4244 = vmatprep.mubr.bf16.mxu0 %v524
        %4245 = vmatmul.mubr.bf16.gmra.mrb[0].mxu0 %v523
        %v4246 = vpop.f32.mrb[0].mxu0
        %v4247 = vadd.f32 %v4206, %v4246
        %v4248 = vpop.f32.mrb[0].mxu0
        %v4249 = vadd.f32 %v4208, %v4248
        %v4250 = vpop.f32.mrb[0].mxu0
        %v4251 = vpop.f32.mrb[0].mxu0
        %4252 = vdwg.mxu0
        %v4255 = vcombine.low %v4247, %v4249
        %v4257 = vunpack.c.l.s4 1983009808
        %v4258 = vunpack.c.0.s8 %v4257
        %v4259 = vlaneseq
        %v4260 = vshrl.u32 %v4259, 7
        %v4261 = vsub.s32 %v4258, %v4260
        %v4262 = vrot.slane %v4255, %v4261
        %v4264 = vadd.f32 %v308, %v4262
        %4265 = vst [vmem:[%s278] sm:$0xf] %v4264
        %s4266 = sand.u32 %s123, 1
        %s4267 = scalar_lea.sflag [#allocation4], %s4266
        %s4268 = sand.u32 %s123, 1
        %s4269 = smul.addr %s4268, 4
        %s4270 = scalar_lea.vmem [#allocation8], %s4269
        // Predicated region
        $region49: #{tpu_custom_call.1} parent=31 // pred_check
          %p4271 = pneg %p133
        $region50: #{tpu_custom_call.1} parent=31 // pred_check_branch
          %4273 = sbr.rel (%p4271) target = $region52
        $region51: #{tpu_custom_call.1} parent=31 // pred_region
          %s4274 = smul.u32 2, %s27
          %s4276 = ssub.s32 64, 64
          %4277 = vsyncadd %s4267, %s4276
          %s4278 = smul.addr %s4274, 32
          %s4279 = scalar_lea.hbm %s3, %s4278
          %s4281 = sshll.u32 %s4270, 4
          %s4282 = int_to_ptr.vmem [resolvable:$true] %s4281
          %4284 = dma.vmem_to_hbm [thread:$0]  %s4282, 64, %s4279, %s4267
        $region52: #{tpu_custom_call.1} parent=31 // pred_fallthru
          _
      $region32: #{tpu_custom_call.1} parent=5 // pred_fallthru
        _
      %p4285 = scmp.le.s32.totalorder 2, %s18
      // Predicated region
      $region53: #{tpu_custom_call.1} parent=5 // pred_check
        %p4286 = pneg %p4285
      $region54: #{tpu_custom_call.1} parent=5 // pred_check_branch
        %4288 = sbr.rel (%p4286) target = $region56
      $region55: #{tpu_custom_call.1} parent=5 // pred_region
        %s4289 = ssub.s32 %s18, 2
        // Predicated region
        $region57: #{tpu_custom_call.1} parent=55 // pred_check
          %p4290 = pneg %p139
        $region58: #{tpu_custom_call.1} parent=55 // pred_check_branch
          %4292 = sbr.rel (%p4290) target = $region60
        $region59: #{tpu_custom_call.1} parent=55 // pred_region
          %s4293 = sand.u32 %s124, 1
          %s4294 = scalar_lea.sflag [#allocation4], %s4293
          %s4295 = sand.u32 %s124, 1
          %s4296 = smul.addr %s4295, 4
          %s4297 = scalar_lea.vmem [#allocation8], %s4296
          %4298 = dma.done %s4294, 64
        $region60: #{tpu_custom_call.1} parent=55 // pred_fallthru
          _
      $region56: #{tpu_custom_call.1} parent=5 // pred_fallthru
        _
    $region6: #{tpu_custom_call.1} parent=1 // loop_footer
      %s22 = sadd.s32 1, %s18
    $region7: #{tpu_custom_call.1} parent=1 // loop_footer_branch
      %17 = sbr.rel target = $region3
    $region8: #{tpu_custom_call.1} parent=1 // loop_exit
      _
    %4299 = vsyncpa [#allocation3], 1
    %s4300 = scalar_lea.sflag [#allocation3], 1
    %4301 = vsyncpa %s4300, 1
    %4302 = vsyncpa [#allocation6], 1
    %s4303 = scalar_lea.sflag [#allocation6], 1
    %4304 = vsyncpa %s4303, 1
    %4305 = vsyncpa [#allocation4], 1
    %s4306 = scalar_lea.sflag [#allocation4], 1
    %4307 = vsyncpa %s4306, 1

</llo_original>
